<compile_context>
chip_gen: v7x
topology: tpu7x:2x2x1
jax: 0.10.0
libtpu: 0.0.40
codegen_flags: <defaults>
</compile_context>

<pallas_src>
import functools
import math

import jax
import jax.numpy as jnp
from jax import lax
from jax.experimental import pallas as pl
from jax.experimental.pallas import tpu as pltpu


# ---------------------------------------------------------------------------
# Fused forward kernel: grid = (batch, layer_step), layer_step in [0, NL]
#   step 0         : ln_embed (tgt + bev memory) + decoder layer 0
#   steps 1..NL-1  : decoder layers
#   step NL        : fused decode heads + output stores
# ---------------------------------------------------------------------------

def _fused_kernel(
    tgt_ref, bev_ref, mask_ref, ln_emb_ref,
    w_attn_ref, ffw1_ref, ffw2_ref, norm_g_ref,
    dec_w1_ref, dec_b1_ref, dec_ln_ref, dec_w2_ref, dec_b2_ref,
    feat_ref, logits_ref,
    x_sc, mem_sc, att_sc,
    *, d, nhead, num_layers):
    f32 = jnp.float32
    bf16 = jnp.bfloat16
    dh = d // nhead
    scale = 1.0 / math.sqrt(dh)
    l = pl.program_id(1)

    def ln(x, g, b=None, eps=1e-5):
        # f32 layernorm (VPU math stays f32: keeps v5e on its fast path)
        mu = jnp.mean(x, axis=-1, keepdims=True)
        var = jnp.mean((x - mu) ** 2, axis=-1, keepdims=True)
        y = (x - mu) * lax.rsqrt(var + eps) * g
        return y if b is None else y + b

    def mm(a, w_bf16):
        # bf16 x bf16 MXU matmul with f32 accumulation
        return jnp.dot(a.astype(bf16), w_bf16, preferred_element_type=f32)

    # ---- step 0: ln_embed on target tokens and BEV memory ------------------
    @pl.when(l == 0)
    def _embed():
        lng = ln_emb_ref[...]                       # [2, d]: gamma; beta
        g = lng[0:1, :]
        b = lng[1:2, :]
        x_sc[...] = ln(tgt_ref[...], g, b)          # [L, d]
        mem_sc[...] = ln(bev_ref[...], g, b)        # [S, d]

    # ---- steps 0..NL-1: one post-norm TransformerDecoder layer -------------
    @pl.when(l < num_layers)
    def _layer():
        x = x_sc[...]                               # [L, d]
        mem = mem_sc[...]                           # [S, d]
        w = w_attn_ref[...]                         # [d, 8d] bf16, packed
        ng = norm_g_ref[...]                        # [3, d]  (norm1/2/3 gammas)

        def attend(q_src, kv_src, q_off, k_off, v_off, mask):
            # q_src: [L, *] f32, kv_src: [Lk, *] f32; head results land in
            # att_sc[:, h*dh:(h+1)*dh] (no concatenates, no transposes).
            for h in range(nhead):
                qh = q_src[:, q_off + h * dh:q_off + (h + 1) * dh].astype(bf16)
                kh = kv_src[:, k_off + h * dh:k_off + (h + 1) * dh].astype(bf16)
                vh = kv_src[:, v_off + h * dh:v_off + (h + 1) * dh].astype(bf16)
                s = lax.dot_general(qh, kh, (((1,), (1,)), ((), ())),
                                    preferred_element_type=f32) * scale
                if mask is not None:
                    s = s + mask
                s = s - jnp.max(s, axis=-1, keepdims=True)
                p = jnp.exp(s)
                p = p * pl.reciprocal(jnp.sum(p, axis=-1, keepdims=True),
                                      approx=True)
                att_sc[:, h * dh:(h + 1) * dh] = jnp.dot(
                    p.astype(bf16), vh, preferred_element_type=f32)
            return att_sc[...]

        # --- self attention (causal + key-padding additive mask) ---
        qkv = mm(x, w[:, 0:3 * d])                  # fused QKV: [L, 3d]
        sa = attend(qkv, qkv, 0, d, 2 * d, mask_ref[...])
        sa = mm(sa, w[:, 3 * d:4 * d])
        x = ln(x + sa, ng[0:1, :])

        # --- cross attention to BEV memory (no mask) ---
        qc = mm(x, w[:, 4 * d:5 * d])               # [L, d]
        kvc = mm(mem, w[:, 5 * d:7 * d])            # fused K/V: [S, 2d]
        ca = attend(qc, kvc, 0, 0, d, None)
        ca = mm(ca, w[:, 7 * d:8 * d])
        x = ln(x + ca, ng[1:2, :])

        # --- feed forward (ReLU, bias=False); ReLU fused with bf16 downcast ---
        hidden = jnp.maximum(mm(x, ffw1_ref[...]), 0.0).astype(bf16)
        ff = jnp.dot(hidden, ffw2_ref[...], preferred_element_type=f32)
        x = ln(x + ff, ng[2:3, :])

        x_sc[...] = x

    # ---- step NL: fused decode heads (Linear -> LN -> ReLU -> Linear) ------
    @pl.when(l == num_layers)
    def _decode():
        x = x_sc[...]
        feat_ref[...] = x
        h = mm(x, dec_w1_ref[...]) + dec_b1_ref[...]        # [L, 2d]
        dln = dec_ln_ref[...]                               # [2, 2, d]
        hx = jnp.maximum(ln(h[:, 0:d], dln[0, 0:1, :], dln[0, 1:2, :]), 0.0)
        hy = jnp.maximum(ln(h[:, d:2 * d], dln[1, 0:1, :], dln[1, 1:2, :]), 0.0)
        # dec_w2[0] holds w2x in lanes [0:tok_x], dec_w2[1] holds w2y in lanes
        # [tok_x:tok_x+tok_y]; one lane-dense store of the fused logits.
        logits_ref[...] = (mm(hx, dec_w2_ref[0]) + mm(hy, dec_w2_ref[1])
                           + dec_b2_ref[...])


# ---------------------------------------------------------------------------
# Model glue (pure JAX: tiny embedding gathers, mask build, reshapes, argmax)
# ---------------------------------------------------------------------------

def path_planning_head_forward(params, bev_feature, tgt, cfg):
    """forward_for_train: attention() + decode() for method='distribution'."""
    B, S, d = bev_feature.shape
    L = tgt.shape[1]
    nhead = cfg['nhead']
    NL = params['w_attn'].shape[0]
    dff = params['ffw1'].shape[-1]
    tok_x = cfg['tok_x']
    tok_y = cfg['tok_y']
    W_out = params['dec_w2'].shape[-1]

    # token embedding + sincos pos (tiny gathers, done outside the kernel)
    emb = jnp.concatenate([params['emb_x'][tgt[..., 0]],
                           params['emb_y'][tgt[..., 1]]], axis=-1)
    tgt_feature = (emb + cfg['pos_embed_pp'][:, :L, :]).astype(jnp.float32)
    bev = (bev_feature + cfg['pos_embed_bev']).astype(jnp.float32)

    # additive self-attn mask: causal + key padding. Large finite negative so
    # a fully-masked row yields a uniform distribution instead of NaN.
    NEG = jnp.float32(-1e9)
    future = jnp.where(jnp.triu(jnp.ones((L, L), jnp.float32), k=1) > 0,
                       NEG, 0.0)
    key_pad = jnp.where(tgt[..., 0] == cfg['pad_value'], NEG, 0.0)   # [B, L]
    self_mask = future[None, :, :] + key_pad[:, None, :]             # [B, L, L]

    kernel = functools.partial(_fused_kernel, d=d, nhead=nhead, num_layers=NL)

    def per_batch(tail):
        return pl.BlockSpec((None,) + tail, lambda b, l: (b,) + (0,) * len(tail))

    def per_layer(tail):
        return pl.BlockSpec((None,) + tail,
                            lambda b, l: (jnp.minimum(l, NL - 1),) + (0,) * len(tail))

    def const(shape):
        return pl.BlockSpec(shape, lambda b, l: (0,) * len(shape))

    grid_spec = pltpu.PrefetchScalarGridSpec(
        num_scalar_prefetch=0,
        grid=(B, NL + 1),
        in_specs=[
            per_batch((L, d)),           # tgt_feature
            per_batch((S, d)),           # bev (+pos)
            per_batch((L, L)),           # self-attn additive mask
            const((2, d)),               # ln_embed gamma/beta
            per_layer((d, 8 * d)),       # packed attn weights (qkv|wo_s|q_c|kv_c|wo_c)
            per_layer((d, dff)),         # ffw1
            per_layer((dff, d)),         # ffw2
            per_layer((3, d)),           # norm1/2/3 gammas
            const((d, 2 * d)),           # fused decode first linear
            const((1, 2 * d)),           # fused decode first-linear bias
            const((2, 2, d)),            # decode layer-norm gamma/beta per head
            const((2, d, W_out)),        # fused + lane-padded decode second linear
            const((1, W_out)),           # fused + lane-padded decode bias
        ],
        out_specs=(per_batch((L, d)), per_batch((L, W_out))),
        scratch_shapes=[pltpu.VMEM((L, d), jnp.float32),   # x (activations)
                        pltpu.VMEM((S, d), jnp.float32),   # ln'd BEV memory
                        pltpu.VMEM((L, d), jnp.float32)],  # per-head attn out
    )

    feat, logits = pl.pallas_call(
        kernel,
        out_shape=(jax.ShapeDtypeStruct((B, L, d), jnp.float32),
                   jax.ShapeDtypeStruct((B, L, W_out), jnp.float32)),
        grid_spec=grid_spec,
        compiler_params=pltpu.CompilerParams(
            dimension_semantics=("parallel", "arbitrary")),
    )(tgt_feature, bev, self_mask,
      params['ln_emb'],
      params['w_attn'], params['ffw1'], params['ffw2'], params['norm_g'],
      params['dec_w1'], params['dec_b1'], params['dec_ln'],
      params['dec_w2'], params['dec_b2'])

    logits_x = logits[:, :, :tok_x]
    logits_y = logits[:, :, tok_x:tok_x + tok_y]
    # argmax(softmax(x)) == argmax(x): softmax dropped (pure perf, same result)
    path_point_token = jnp.stack([jnp.argmax(logits_x, axis=-1),
                                  jnp.argmax(logits_y, axis=-1)], axis=-1)
    return {
        'path_point_token': path_point_token,
        'path_point_probability': [logits_x, logits_y],
        'path_point_feature': feat,
    }


# ---------------------------------------------------------------------------
# Positional embeddings (match the PyTorch buffers)
# ---------------------------------------------------------------------------

def sincos_pos_embed_1d(L, d):
    half = d // 2
    inv_freq = 1.0 / (10000.0 ** (jnp.arange(half, dtype=jnp.float32) / half))
    ang = jnp.arange(L, dtype=jnp.float32)[:, None] * inv_freq[None, :]
    pe = jnp.zeros((L, d), jnp.float32)
    pe = pe.at[:, 0::2].set(jnp.sin(ang))
    pe = pe.at[:, 1::2].set(jnp.cos(ang))
    return pe[None]


def sincos_pos_embed_2d(H, W, d):
    gy, gx = jnp.meshgrid(jnp.arange(H, dtype=jnp.float32),
                          jnp.arange(W, dtype=jnp.float32), indexing='ij')
    y = gy.reshape(-1)
    x = gx.reshape(-1)
    half = d // 2
    dim_t = jnp.arange(half, dtype=jnp.float32)
    inv_freq = 1.0 / (10000.0 ** (2.0 * dim_t / half))
    enc_x = x[:, None] * inv_freq[None, :]
    enc_y = y[:, None] * inv_freq[None, :]
    pe = jnp.zeros((H * W, d), jnp.float32)
    pe = pe.at[:, 0::4].set(jnp.sin(enc_x[:, : half // 2]))
    pe = pe.at[:, 1::4].set(jnp.cos(enc_x[:, : half // 2]))
    pe = pe.at[:, 2::4].set(jnp.sin(enc_y[:, half // 2:]))
    pe = pe.at[:, 3::4].set(jnp.cos(enc_y[:, half // 2:]))
    return pe[None]


# ---------------------------------------------------------------------------
# Parameter construction (packed layouts the kernel expects)
# ---------------------------------------------------------------------------

def init_params(key, d, nhead, num_layers, dff, tok_x, tok_y):
    bf16 = jnp.bfloat16
    W_out = ((tok_x + tok_y + 127) // 128) * 128
    keys = iter(jax.random.split(key, 10 * num_layers + 16))

    def rnd(shape, scale=0.02):
        return scale * jax.random.normal(next(keys), shape, jnp.float32)

    w_attn, ffw1, ffw2, norm_g = [], [], [], []
    for _ in range(num_layers):
        # columns: [qkv_self | wo_self | q_cross | kv_cross | wo_cross]
        pieces = [rnd((d, d)) for _ in range(3)]        # q, k, v (self)
        pieces += [rnd((d, d))]                         # wo_self
        pieces += [rnd((d, d))]                         # q_cross
        pieces += [rnd((d, d)), rnd((d, d))]            # k, v (cross)
        pieces += [rnd((d, d))]                         # wo_cross
        w_attn.append(jnp.concatenate(pieces, axis=1))  # [d, 8d]
        ffw1.append(rnd((d, dff)))
        ffw2.append(rnd((dff, d)))
        norm_g.append(jnp.ones((3, d), jnp.float32))    # norm1/2/3 (bias=False)

    # fused + lane-padded decode second linears / biases
    w2x, b2x = rnd((d, tok_x)), rnd((1, tok_x))
    w2y, b2y = rnd((d, tok_y)), rnd((1, tok_y))
    dec_w2 = jnp.zeros((2, d, W_out), jnp.float32)
    dec_w2 = dec_w2.at[0, :, :tok_x].set(w2x)
    dec_w2 = dec_w2.at[1, :, tok_x:tok_x + tok_y].set(w2y)
    dec_b2 = jnp.zeros((1, W_out), jnp.float32)
    dec_b2 = dec_b2.at[:, :tok_x].set(b2x)
    dec_b2 = dec_b2.at[:, tok_x:tok_x + tok_y].set(b2y)

    return {
        'emb_x': rnd((tok_x, d // 2), 1.0),
        'emb_y': rnd((tok_y, d // 2), 1.0),
        'ln_emb': jnp.concatenate([jnp.ones((1, d), jnp.float32),
                                   jnp.zeros((1, d), jnp.float32)], axis=0),
        # GEMM weights stored bf16 (MXU-native); accumulation is f32 in-kernel.
        'w_attn': jnp.stack(w_attn).astype(bf16),       # [NL, d, 8d]
        'ffw1': jnp.stack(ffw1).astype(bf16),           # [NL, d, dff]
        'ffw2': jnp.stack(ffw2).astype(bf16),           # [NL, dff, d]
        'norm_g': jnp.stack(norm_g),                    # [NL, 3, d]
        'dec_w1': jnp.concatenate([rnd((d, d)), rnd((d, d))],
                                  axis=1).astype(bf16),  # [d, 2d]
        'dec_b1': jnp.concatenate([rnd((1, d)), rnd((1, d))], axis=1),  # [1, 2d]
        'dec_ln': jnp.stack([jnp.stack([jnp.ones((d,)), jnp.zeros((d,))]),
                             jnp.stack([jnp.ones((d,)), jnp.zeros((d,))])]
                            ).astype(jnp.float32),      # [2, 2, d]
        'dec_w2': dec_w2.astype(bf16),                  # [2, d, W_out]
        'dec_b2': dec_b2,                               # [1, W_out]
    }


# ---------------------------------------------------------------------------
# Demo
# ---------------------------------------------------------------------------

if __name__ == "__main__":
    B = 2
    d_model = 32          # feature_dim
    nhead = 4             # tf_nhead
    num_layers = 2        # tf_num_layer
    dff = 2048            # PyTorch TransformerDecoderLayer default dim_feedforward
    fH = fW = 16          # map_bev['final_dim'][:2]
    tok_x, tok_y = fH + 2, fW + 2
    map_H = map_W = 4     # map_bev['map_down_sample']
    S = map_H * map_W
    L = 8                 # max_num_for_path
    pad_value = 17        # pad_value_for_path_point_token (< token_num)

    key = jax.random.PRNGKey(0)
    k_bev, k_tgt, k_par = jax.random.split(key, 3)

    bev_feature = jax.random.normal(k_bev, (B, S, d_model), jnp.float32)
    tgt_xi = jax.random.randint(k_tgt, (B, L), 1, tok_x - 1)
    tgt_yi = jax.random.randint(jax.random.fold_in(k_tgt, 1), (B, L), 1, tok_y - 1)
    tgt = jnp.stack([tgt_xi, tgt_yi], axis=-1)
    # mark the tail of batch 1 as padding tokens (never at position 0)
    tgt = tgt.at[1, L - 2:, 0].set(pad_value)

    params = init_params(k_par, d_model, nhead, num_layers, dff, tok_x, tok_y)
    cfg = {
        'nhead': nhead,
        'pad_value': pad_value,
        'tok_x': tok_x,
        'tok_y': tok_y,
        'pos_embed_pp': sincos_pos_embed_1d(L, d_model),
        'pos_embed_bev': sincos_pos_embed_2d(map_H, map_W, d_model),
    }

    fwd = jax.jit(lambda p, b, t: path_planning_head_forward(p, b, t, cfg))
    out = fwd(params, bev_feature, tgt)
    jax.block_until_ready(out)

    assert out['path_point_token'].shape == (B, L, 2)
    assert out['path_point_feature'].shape == (B, L, d_model)
    assert out['path_point_probability'][0].shape == (B, L, tok_x)
    assert out['path_point_probability'][1].shape == (B, L, tok_y)
    assert bool(jnp.all(jnp.isfinite(out['path_point_feature'])))
    assert bool(jnp.all(jnp.isfinite(out['path_point_probability'][0])))
    assert bool(jnp.all(jnp.isfinite(out['path_point_probability'][1])))
    print("KERNEL_OK")
</pallas_src>

<mosaic_0001>
module attributes {stable_mosaic.version = 11 : i64} {
  func.func @_fused_kernel(%arg0: i32, %arg1: i32, %arg2: memref<1x8x32xf32, #tpu.memory_space<vmem>>, %arg3: memref<1x16x32xf32, #tpu.memory_space<vmem>>, %arg4: memref<1x8x8xf32, #tpu.memory_space<vmem>>, %arg5: memref<2x32xf32, #tpu.memory_space<vmem>>, %arg6: memref<1x32x256xbf16, #tpu.memory_space<vmem>>, %arg7: memref<1x32x2048xbf16, #tpu.memory_space<vmem>>, %arg8: memref<1x2048x32xbf16, #tpu.memory_space<vmem>>, %arg9: memref<1x3x32xf32, #tpu.memory_space<vmem>>, %arg10: memref<32x64xbf16, #tpu.memory_space<vmem>>, %arg11: memref<1x64xf32, #tpu.memory_space<vmem>>, %arg12: memref<2x2x32xf32, #tpu.memory_space<vmem>>, %arg13: memref<2x32x128xbf16, #tpu.memory_space<vmem>>, %arg14: memref<1x128xf32, #tpu.memory_space<vmem>>, %arg15: memref<1x8x32xf32, #tpu.memory_space<vmem>>, %arg16: memref<1x8x128xf32, #tpu.memory_space<vmem>>, %arg17: memref<8x32xf32, #tpu.memory_space<vmem>>, %arg18: memref<16x32xf32, #tpu.memory_space<vmem>>, %arg19: memref<8x32xf32, #tpu.memory_space<vmem>>) attributes {dimension_semantics = [#tpu.dimension_semantics<parallel>, #tpu.dimension_semantics<arbitrary>], iteration_bounds = array<i64: 2, 3>, scalar_prefetch = 0 : i64, scratch_operands = 3 : i64, tpu.core_type = #tpu.core_type<tc>, window_params = [{transform_indices = @transform_0, window_bounds = array<i64: 1, 8, 32>}, {transform_indices = @transform_1, window_bounds = array<i64: 1, 16, 32>}, {transform_indices = @transform_2, window_bounds = array<i64: 1, 8, 8>}, {pipeline_mode = #tpu.pipeline_mode<synchronous>, transform_indices = @transform_3, window_bounds = array<i64: 2, 32>}, {transform_indices = @transform_4, window_bounds = array<i64: 1, 32, 256>}, {transform_indices = @transform_5, window_bounds = array<i64: 1, 32, 2048>}, {transform_indices = @transform_6, window_bounds = array<i64: 1, 2048, 32>}, {transform_indices = @transform_7, window_bounds = array<i64: 1, 3, 32>}, {pipeline_mode = #tpu.pipeline_mode<synchronous>, transform_indices = @transform_8, window_bounds = array<i64: 32, 64>}, {pipeline_mode = #tpu.pipeline_mode<synchronous>, transform_indices = @transform_9, window_bounds = array<i64: 1, 64>}, {pipeline_mode = #tpu.pipeline_mode<synchronous>, transform_indices = @transform_10, window_bounds = array<i64: 2, 2, 32>}, {pipeline_mode = #tpu.pipeline_mode<synchronous>, transform_indices = @transform_11, window_bounds = array<i64: 2, 32, 128>}, {pipeline_mode = #tpu.pipeline_mode<synchronous>, transform_indices = @transform_12, window_bounds = array<i64: 1, 128>}, {transform_indices = @transform_13, window_bounds = array<i64: 1, 8, 32>}, {transform_indices = @transform_14, window_bounds = array<i64: 1, 8, 128>}]} {
    %c0_i32 = arith.constant 0 : i32
    %0 = arith.cmpi eq, %arg1, %c0_i32 : i32
    %1 = arith.extui %0 : i1 to i32
    %c0_i32_0 = arith.constant 0 : i32
    %2 = arith.cmpi ne, %1, %c0_i32_0 : i32
    scf.if %2 {
      %c0 = arith.constant 0 : index
      %c0_4 = arith.constant 0 : index
      %9 = vector.load %arg5[%c0, %c0_4] : memref<2x32xf32, #tpu.memory_space<vmem>>, vector<2x32xf32>
      %10 = vector.extract_strided_slice %9 {offsets = [0, 0], sizes = [1, 32], strides = [1, 1]} : vector<2x32xf32> to vector<1x32xf32>
      %11 = vector.extract_strided_slice %9 {offsets = [1, 0], sizes = [1, 32], strides = [1, 1]} : vector<2x32xf32> to vector<1x32xf32>
      %c0_5 = arith.constant 0 : index
      %c0_6 = arith.constant 0 : index
      %c0_7 = arith.constant 0 : index
      %12 = vector.load %arg2[%c0_5, %c0_6, %c0_7] : memref<1x8x32xf32, #tpu.memory_space<vmem>>, vector<1x8x32xf32>
      %13 = vector.shape_cast %12 : vector<1x8x32xf32> to vector<8x32xf32>
      %cst = arith.constant dense<0.000000e+00> : vector<8xf32>
      %14 = vector.multi_reduction <add>, %13, %cst [1] : vector<8x32xf32> to vector<8xf32>
      %15 = vector.shape_cast %14 : vector<8xf32> to vector<8x1xf32>
      %cst_8 = arith.constant 3.200000e+01 : f32
      %16 = vector.broadcast %cst_8 : f32 to vector<8x1xf32>
      %17 = arith.divf %15, %16 : vector<8x1xf32>
      %18 = vector.broadcast %17 : vector<8x1xf32> to vector<8x32xf32>
      %19 = arith.subf %13, %18 : vector<8x32xf32>
      %20 = arith.mulf %19, %19 : vector<8x32xf32>
      %cst_9 = arith.constant dense<0.000000e+00> : vector<8xf32>
      %21 = vector.multi_reduction <add>, %20, %cst_9 [1] : vector<8x32xf32> to vector<8xf32>
      %22 = vector.shape_cast %21 : vector<8xf32> to vector<8x1xf32>
      %cst_10 = arith.constant 3.200000e+01 : f32
      %23 = vector.broadcast %cst_10 : f32 to vector<8x1xf32>
      %24 = arith.divf %22, %23 : vector<8x1xf32>
      %25 = vector.broadcast %17 : vector<8x1xf32> to vector<8x32xf32>
      %26 = arith.subf %13, %25 : vector<8x32xf32>
      %cst_11 = arith.constant 9.99999974E-6 : f32
      %27 = vector.broadcast %cst_11 : f32 to vector<8x1xf32>
      %28 = arith.addf %24, %27 : vector<8x1xf32>
      %29 = math.rsqrt %28 : vector<8x1xf32>
      %30 = vector.broadcast %29 : vector<8x1xf32> to vector<8x32xf32>
      %31 = arith.mulf %26, %30 : vector<8x32xf32>
      %32 = vector.broadcast %10 : vector<1x32xf32> to vector<8x32xf32>
      %33 = arith.mulf %31, %32 : vector<8x32xf32>
      %34 = vector.broadcast %11 : vector<1x32xf32> to vector<8x32xf32>
      %35 = arith.addf %33, %34 : vector<8x32xf32>
      %c0_12 = arith.constant 0 : index
      %c0_13 = arith.constant 0 : index
      %36 = vector.load %arg17[%c0_12, %c0_13] : memref<8x32xf32, #tpu.memory_space<vmem>>, vector<8x32xf32>
      tpu.vector_store %arg17[%c0_12, %c0_13], %35 {strides = array<i32>} : memref<8x32xf32, #tpu.memory_space<vmem>>, vector<8x32xf32>,
      %c0_14 = arith.constant 0 : index
      %c0_15 = arith.constant 0 : index
      %c0_16 = arith.constant 0 : index
      %37 = vector.load %arg3[%c0_14, %c0_15, %c0_16] : memref<1x16x32xf32, #tpu.memory_space<vmem>>, vector<1x16x32xf32>
      %38 = vector.shape_cast %37 : vector<1x16x32xf32> to vector<16x32xf32>
      %cst_17 = arith.constant dense<0.000000e+00> : vector<16xf32>
      %39 = vector.multi_reduction <add>, %38, %cst_17 [1] : vector<16x32xf32> to vector<16xf32>
      %40 = vector.shape_cast %39 : vector<16xf32> to vector<16x1xf32>
      %cst_18 = arith.constant 3.200000e+01 : f32
      %41 = vector.broadcast %cst_18 : f32 to vector<16x1xf32>
      %42 = arith.divf %40, %41 : vector<16x1xf32>
      %43 = vector.broadcast %42 : vector<16x1xf32> to vector<16x32xf32>
      %44 = arith.subf %38, %43 : vector<16x32xf32>
      %45 = arith.mulf %44, %44 : vector<16x32xf32>
      %cst_19 = arith.constant dense<0.000000e+00> : vector<16xf32>
      %46 = vector.multi_reduction <add>, %45, %cst_19 [1] : vector<16x32xf32> to vector<16xf32>
      %47 = vector.shape_cast %46 : vector<16xf32> to vector<16x1xf32>
      %cst_20 = arith.constant 3.200000e+01 : f32
      %48 = vector.broadcast %cst_20 : f32 to vector<16x1xf32>
      %49 = arith.divf %47, %48 : vector<16x1xf32>
      %50 = vector.broadcast %42 : vector<16x1xf32> to vector<16x32xf32>
      %51 = arith.subf %38, %50 : vector<16x32xf32>
      %cst_21 = arith.constant 9.99999974E-6 : f32
      %52 = vector.broadcast %cst_21 : f32 to vector<16x1xf32>
      %53 = arith.addf %49, %52 : vector<16x1xf32>
      %54 = math.rsqrt %53 : vector<16x1xf32>
      %55 = vector.broadcast %54 : vector<16x1xf32> to vector<16x32xf32>
      %56 = arith.mulf %51, %55 : vector<16x32xf32>
      %57 = vector.broadcast %10 : vector<1x32xf32> to vector<16x32xf32>
      %58 = arith.mulf %56, %57 : vector<16x32xf32>
      %59 = vector.broadcast %11 : vector<1x32xf32> to vector<16x32xf32>
      %60 = arith.addf %58, %59 : vector<16x32xf32>
      %c0_22 = arith.constant 0 : index
      %c0_23 = arith.constant 0 : index
      %61 = vector.load %arg18[%c0_22, %c0_23] : memref<16x32xf32, #tpu.memory_space<vmem>>, vector<16x32xf32>
      tpu.vector_store %arg18[%c0_22, %c0_23], %60 {strides = array<i32>} : memref<16x32xf32, #tpu.memory_space<vmem>>, vector<16x32xf32>,
    } else {
    }
    %c2_i32 = arith.constant 2 : i32
    %3 = arith.cmpi slt, %arg1, %c2_i32 : i32
    %4 = arith.extui %3 : i1 to i32
    %c0_i32_1 = arith.constant 0 : i32
    %5 = arith.cmpi ne, %4, %c0_i32_1 : i32
    scf.if %5 {
      %c0 = arith.constant 0 : index
      %c0_4 = arith.constant 0 : index
      %9 = vector.load %arg17[%c0, %c0_4] : memref<8x32xf32, #tpu.memory_space<vmem>>, vector<8x32xf32>
      %c0_5 = arith.constant 0 : index
      %c0_6 = arith.constant 0 : index
      %10 = vector.load %arg18[%c0_5, %c0_6] : memref<16x32xf32, #tpu.memory_space<vmem>>, vector<16x32xf32>
      %c0_7 = arith.constant 0 : index
      %c0_8 = arith.constant 0 : index
      %c0_9 = arith.constant 0 : index
      %11 = vector.load %arg6[%c0_7, %c0_8, %c0_9] : memref<1x32x256xbf16, #tpu.memory_space<vmem>>, vector<1x32x256xbf16>
      %12 = vector.shape_cast %11 : vector<1x32x256xbf16> to vector<32x256xbf16>
      %c0_10 = arith.constant 0 : index
      %c0_11 = arith.constant 0 : index
      %c0_12 = arith.constant 0 : index
      %13 = vector.load %arg9[%c0_10, %c0_11, %c0_12] : memref<1x3x32xf32, #tpu.memory_space<vmem>>, vector<1x3x32xf32>
      %14 = vector.shape_cast %13 : vector<1x3x32xf32> to vector<3x32xf32>
      %15 = vector.extract_strided_slice %12 {offsets = [0, 0], sizes = [32, 96], strides = [1, 1]} : vector<32x256xbf16> to vector<32x96xbf16>
      %16 = arith.truncf %9 : vector<8x32xf32> to vector<8x32xbf16>
      %cst = arith.constant dense<0.000000e+00> : vector<8x96xf32>
      %17 = tpu.matmul %16, %15, %cst {dimension_numbers = #tpu.dot_dimension_numbers<[1], [0], [0], [1], [0, 0, 1, 1], [], []>} : vector<8x32xbf16>, vector<32x96xbf16>, vector<8x96xf32> -> vector<8x96xf32>
      %c0_13 = arith.constant 0 : index
      %c0_14 = arith.constant 0 : index
      %c0_15 = arith.constant 0 : index
      %18 = vector.load %arg4[%c0_13, %c0_14, %c0_15] : memref<1x8x8xf32, #tpu.memory_space<vmem>>, vector<1x8x8xf32>
      %19 = vector.shape_cast %18 : vector<1x8x8xf32> to vector<8x8xf32>
      %20 = vector.extract_strided_slice %17 {offsets = [0, 0], sizes = [8, 8], strides = [1, 1]} : vector<8x96xf32> to vector<8x8xf32>
      %21 = arith.truncf %20 : vector<8x8xf32> to vector<8x8xbf16>
      %22 = vector.extract_strided_slice %17 {offsets = [0, 32], sizes = [8, 8], strides = [1, 1]} : vector<8x96xf32> to vector<8x8xf32>
      %23 = arith.truncf %22 : vector<8x8xf32> to vector<8x8xbf16>
      %24 = vector.extract_strided_slice %17 {offsets = [0, 64], sizes = [8, 8], strides = [1, 1]} : vector<8x96xf32> to vector<8x8xf32>
      %25 = arith.truncf %24 : vector<8x8xf32> to vector<8x8xbf16>
      %cst_16 = arith.constant dense<0.000000e+00> : vector<8x8xf32>
      %26 = tpu.matmul %21, %23, %cst_16 {dimension_numbers = #tpu.dot_dimension_numbers<[1], [1], [0], [0], [0, 0, 1, 0], [], []>} : vector<8x8xbf16>, vector<8x8xbf16>, vector<8x8xf32> -> vector<8x8xf32>
      %cst_17 = arith.constant 0.353553385 : f32
      %27 = vector.broadcast %cst_17 : f32 to vector<8x8xf32>
      %28 = arith.mulf %26, %27 : vector<8x8xf32>
      %29 = arith.addf %28, %19 : vector<8x8xf32>
      %cst_18 = arith.constant dense<0xFF800000> : vector<8xf32>
      %30 = vector.multi_reduction <maximumf>, %29, %cst_18 [1] : vector<8x8xf32> to vector<8xf32>
      %31 = vector.shape_cast %30 : vector<8xf32> to vector<8x1xf32>
      %32 = vector.broadcast %31 : vector<8x1xf32> to vector<8x8xf32>
      %33 = arith.subf %29, %32 : vector<8x8xf32>
      %34 = math.exp %33 : vector<8x8xf32>
      %cst_19 = arith.constant dense<0.000000e+00> : vector<8xf32>
      %35 = vector.multi_reduction <add>, %34, %cst_19 [1] : vector<8x8xf32> to vector<8xf32>
      %36 = vector.shape_cast %35 : vector<8xf32> to vector<8x1xf32>
      %37 = tpu.reciprocal %36 {approx = true} : vector<8x1xf32> -> vector<8x1xf32>
      %38 = vector.broadcast %37 : vector<8x1xf32> to vector<8x8xf32>
      %39 = arith.mulf %34, %38 : vector<8x8xf32>
      %40 = arith.truncf %39 : vector<8x8xf32> to vector<8x8xbf16>
      %cst_20 = arith.constant dense<0.000000e+00> : vector<8x8xf32>
      %41 = tpu.matmul %40, %25, %cst_20 {dimension_numbers = #tpu.dot_dimension_numbers<[1], [0], [0], [1], [0, 0, 1, 1], [], []>} : vector<8x8xbf16>, vector<8x8xbf16>, vector<8x8xf32> -> vector<8x8xf32>
      %c0_21 = arith.constant 0 : index
      %c0_22 = arith.constant 0 : index
      %42 = vector.load %arg19[%c0_21, %c0_22] : memref<8x32xf32, #tpu.memory_space<vmem>>, vector<8x8xf32>
      tpu.vector_store %arg19[%c0_21, %c0_22], %41 {strides = array<i32>} : memref<8x32xf32, #tpu.memory_space<vmem>>, vector<8x8xf32>,
      %43 = vector.extract_strided_slice %17 {offsets = [0, 8], sizes = [8, 8], strides = [1, 1]} : vector<8x96xf32> to vector<8x8xf32>
      %44 = arith.truncf %43 : vector<8x8xf32> to vector<8x8xbf16>
      %45 = vector.extract_strided_slice %17 {offsets = [0, 40], sizes = [8, 8], strides = [1, 1]} : vector<8x96xf32> to vector<8x8xf32>
      %46 = arith.truncf %45 : vector<8x8xf32> to vector<8x8xbf16>
      %47 = vector.extract_strided_slice %17 {offsets = [0, 72], sizes = [8, 8], strides = [1, 1]} : vector<8x96xf32> to vector<8x8xf32>
      %48 = arith.truncf %47 : vector<8x8xf32> to vector<8x8xbf16>
      %cst_23 = arith.constant dense<0.000000e+00> : vector<8x8xf32>
      %49 = tpu.matmul %44, %46, %cst_23 {dimension_numbers = #tpu.dot_dimension_numbers<[1], [1], [0], [0], [0, 0, 1, 0], [], []>} : vector<8x8xbf16>, vector<8x8xbf16>, vector<8x8xf32> -> vector<8x8xf32>
      %cst_24 = arith.constant 0.353553385 : f32
      %50 = vector.broadcast %cst_24 : f32 to vector<8x8xf32>
      %51 = arith.mulf %49, %50 : vector<8x8xf32>
      %52 = arith.addf %51, %19 : vector<8x8xf32>
      %cst_25 = arith.constant dense<0xFF800000> : vector<8xf32>
      %53 = vector.multi_reduction <maximumf>, %52, %cst_25 [1] : vector<8x8xf32> to vector<8xf32>
      %54 = vector.shape_cast %53 : vector<8xf32> to vector<8x1xf32>
      %55 = vector.broadcast %54 : vector<8x1xf32> to vector<8x8xf32>
      %56 = arith.subf %52, %55 : vector<8x8xf32>
      %57 = math.exp %56 : vector<8x8xf32>
      %cst_26 = arith.constant dense<0.000000e+00> : vector<8xf32>
      %58 = vector.multi_reduction <add>, %57, %cst_26 [1] : vector<8x8xf32> to vector<8xf32>
      %59 = vector.shape_cast %58 : vector<8xf32> to vector<8x1xf32>
      %60 = tpu.reciprocal %59 {approx = true} : vector<8x1xf32> -> vector<8x1xf32>
      %61 = vector.broadcast %60 : vector<8x1xf32> to vector<8x8xf32>
      %62 = arith.mulf %57, %61 : vector<8x8xf32>
      %63 = arith.truncf %62 : vector<8x8xf32> to vector<8x8xbf16>
      %cst_27 = arith.constant dense<0.000000e+00> : vector<8x8xf32>
      %64 = tpu.matmul %63, %48, %cst_27 {dimension_numbers = #tpu.dot_dimension_numbers<[1], [0], [0], [1], [0, 0, 1, 1], [], []>} : vector<8x8xbf16>, vector<8x8xbf16>, vector<8x8xf32> -> vector<8x8xf32>
      %c0_28 = arith.constant 0 : index
      %c8 = arith.constant 8 : index
      %65 = vector.load %arg19[%c0_28, %c8] : memref<8x32xf32, #tpu.memory_space<vmem>>, vector<8x8xf32>
      tpu.vector_store %arg19[%c0_28, %c8], %64 {strides = array<i32>} : memref<8x32xf32, #tpu.memory_space<vmem>>, vector<8x8xf32>,
      %66 = vector.extract_strided_slice %17 {offsets = [0, 16], sizes = [8, 8], strides = [1, 1]} : vector<8x96xf32> to vector<8x8xf32>
      %67 = arith.truncf %66 : vector<8x8xf32> to vector<8x8xbf16>
      %68 = vector.extract_strided_slice %17 {offsets = [0, 48], sizes = [8, 8], strides = [1, 1]} : vector<8x96xf32> to vector<8x8xf32>
      %69 = arith.truncf %68 : vector<8x8xf32> to vector<8x8xbf16>
      %70 = vector.extract_strided_slice %17 {offsets = [0, 80], sizes = [8, 8], strides = [1, 1]} : vector<8x96xf32> to vector<8x8xf32>
      %71 = arith.truncf %70 : vector<8x8xf32> to vector<8x8xbf16>
      %cst_29 = arith.constant dense<0.000000e+00> : vector<8x8xf32>
      %72 = tpu.matmul %67, %69, %cst_29 {dimension_numbers = #tpu.dot_dimension_numbers<[1], [1], [0], [0], [0, 0, 1, 0], [], []>} : vector<8x8xbf16>, vector<8x8xbf16>, vector<8x8xf32> -> vector<8x8xf32>
      %cst_30 = arith.constant 0.353553385 : f32
      %73 = vector.broadcast %cst_30 : f32 to vector<8x8xf32>
      %74 = arith.mulf %72, %73 : vector<8x8xf32>
      %75 = arith.addf %74, %19 : vector<8x8xf32>
      %cst_31 = arith.constant dense<0xFF800000> : vector<8xf32>
      %76 = vector.multi_reduction <maximumf>, %75, %cst_31 [1] : vector<8x8xf32> to vector<8xf32>
      %77 = vector.shape_cast %76 : vector<8xf32> to vector<8x1xf32>
      %78 = vector.broadcast %77 : vector<8x1xf32> to vector<8x8xf32>
      %79 = arith.subf %75, %78 : vector<8x8xf32>
      %80 = math.exp %79 : vector<8x8xf32>
      %cst_32 = arith.constant dense<0.000000e+00> : vector<8xf32>
      %81 = vector.multi_reduction <add>, %80, %cst_32 [1] : vector<8x8xf32> to vector<8xf32>
      %82 = vector.shape_cast %81 : vector<8xf32> to vector<8x1xf32>
      %83 = tpu.reciprocal %82 {approx = true} : vector<8x1xf32> -> vector<8x1xf32>
      %84 = vector.broadcast %83 : vector<8x1xf32> to vector<8x8xf32>
      %85 = arith.mulf %80, %84 : vector<8x8xf32>
      %86 = arith.truncf %85 : vector<8x8xf32> to vector<8x8xbf16>
      %cst_33 = arith.constant dense<0.000000e+00> : vector<8x8xf32>
      %87 = tpu.matmul %86, %71, %cst_33 {dimension_numbers = #tpu.dot_dimension_numbers<[1], [0], [0], [1], [0, 0, 1, 1], [], []>} : vector<8x8xbf16>, vector<8x8xbf16>, vector<8x8xf32> -> vector<8x8xf32>
      %c0_34 = arith.constant 0 : index
      %c16 = arith.constant 16 : index
      %88 = vector.load %arg19[%c0_34, %c16] : memref<8x32xf32, #tpu.memory_space<vmem>>, vector<8x8xf32>
      tpu.vector_store %arg19[%c0_34, %c16], %87 {strides = array<i32>} : memref<8x32xf32, #tpu.memory_space<vmem>>, vector<8x8xf32>,
      %89 = vector.extract_strided_slice %17 {offsets = [0, 24], sizes = [8, 8], strides = [1, 1]} : vector<8x96xf32> to vector<8x8xf32>
      %90 = arith.truncf %89 : vector<8x8xf32> to vector<8x8xbf16>
      %91 = vector.extract_strided_slice %17 {offsets = [0, 56], sizes = [8, 8], strides = [1, 1]} : vector<8x96xf32> to vector<8x8xf32>
      %92 = arith.truncf %91 : vector<8x8xf32> to vector<8x8xbf16>
      %93 = vector.extract_strided_slice %17 {offsets = [0, 88], sizes = [8, 8], strides = [1, 1]} : vector<8x96xf32> to vector<8x8xf32>
      %94 = arith.truncf %93 : vector<8x8xf32> to vector<8x8xbf16>
      %cst_35 = arith.constant dense<0.000000e+00> : vector<8x8xf32>
      %95 = tpu.matmul %90, %92, %cst_35 {dimension_numbers = #tpu.dot_dimension_numbers<[1], [1], [0], [0], [0, 0, 1, 0], [], []>} : vector<8x8xbf16>, vector<8x8xbf16>, vector<8x8xf32> -> vector<8x8xf32>
      %cst_36 = arith.constant 0.353553385 : f32
      %96 = vector.broadcast %cst_36 : f32 to vector<8x8xf32>
      %97 = arith.mulf %95, %96 : vector<8x8xf32>
      %98 = arith.addf %97, %19 : vector<8x8xf32>
      %cst_37 = arith.constant dense<0xFF800000> : vector<8xf32>
      %99 = vector.multi_reduction <maximumf>, %98, %cst_37 [1] : vector<8x8xf32> to vector<8xf32>
      %100 = vector.shape_cast %99 : vector<8xf32> to vector<8x1xf32>
      %101 = vector.broadcast %100 : vector<8x1xf32> to vector<8x8xf32>
      %102 = arith.subf %98, %101 : vector<8x8xf32>
      %103 = math.exp %102 : vector<8x8xf32>
      %cst_38 = arith.constant dense<0.000000e+00> : vector<8xf32>
      %104 = vector.multi_reduction <add>, %103, %cst_38 [1] : vector<8x8xf32> to vector<8xf32>
      %105 = vector.shape_cast %104 : vector<8xf32> to vector<8x1xf32>
      %106 = tpu.reciprocal %105 {approx = true} : vector<8x1xf32> -> vector<8x1xf32>
      %107 = vector.broadcast %106 : vector<8x1xf32> to vector<8x8xf32>
      %108 = arith.mulf %103, %107 : vector<8x8xf32>
      %109 = arith.truncf %108 : vector<8x8xf32> to vector<8x8xbf16>
      %cst_39 = arith.constant dense<0.000000e+00> : vector<8x8xf32>
      %110 = tpu.matmul %109, %94, %cst_39 {dimension_numbers = #tpu.dot_dimension_numbers<[1], [0], [0], [1], [0, 0, 1, 1], [], []>} : vector<8x8xbf16>, vector<8x8xbf16>, vector<8x8xf32> -> vector<8x8xf32>
      %c0_40 = arith.constant 0 : index
      %c24 = arith.constant 24 : index
      %111 = vector.load %arg19[%c0_40, %c24] : memref<8x32xf32, #tpu.memory_space<vmem>>, vector<8x8xf32>
      tpu.vector_store %arg19[%c0_40, %c24], %110 {strides = array<i32>} : memref<8x32xf32, #tpu.memory_space<vmem>>, vector<8x8xf32>,
      %c0_41 = arith.constant 0 : index
      %c0_42 = arith.constant 0 : index
      %112 = vector.load %arg19[%c0_41, %c0_42] : memref<8x32xf32, #tpu.memory_space<vmem>>, vector<8x32xf32>
      %113 = vector.extract_strided_slice %12 {offsets = [0, 96], sizes = [32, 32], strides = [1, 1]} : vector<32x256xbf16> to vector<32x32xbf16>
      %114 = arith.truncf %112 : vector<8x32xf32> to vector<8x32xbf16>
      %cst_43 = arith.constant dense<0.000000e+00> : vector<8x32xf32>
      %115 = tpu.matmul %114, %113, %cst_43 {dimension_numbers = #tpu.dot_dimension_numbers<[1], [0], [0], [1], [0, 0, 1, 1], [], []>} : vector<8x32xbf16>, vector<32x32xbf16>, vector<8x32xf32> -> vector<8x32xf32>
      %116 = arith.addf %9, %115 : vector<8x32xf32>
      %117 = vector.extract_strided_slice %14 {offsets = [0, 0], sizes = [1, 32], strides = [1, 1]} : vector<3x32xf32> to vector<1x32xf32>
      %cst_44 = arith.constant dense<0.000000e+00> : vector<8xf32>
      %118 = vector.multi_reduction <add>, %116, %cst_44 [1] : vector<8x32xf32> to vector<8xf32>
      %119 = vector.shape_cast %118 : vector<8xf32> to vector<8x1xf32>
      %cst_45 = arith.constant 3.200000e+01 : f32
      %120 = vector.broadcast %cst_45 : f32 to vector<8x1xf32>
      %121 = arith.divf %119, %120 : vector<8x1xf32>
      %122 = vector.broadcast %121 : vector<8x1xf32> to vector<8x32xf32>
      %123 = arith.subf %116, %122 : vector<8x32xf32>
      %124 = arith.mulf %123, %123 : vector<8x32xf32>
      %cst_46 = arith.constant dense<0.000000e+00> : vector<8xf32>
      %125 = vector.multi_reduction <add>, %124, %cst_46 [1] : vector<8x32xf32> to vector<8xf32>
      %126 = vector.shape_cast %125 : vector<8xf32> to vector<8x1xf32>
      %cst_47 = arith.constant 3.200000e+01 : f32
      %127 = vector.broadcast %cst_47 : f32 to vector<8x1xf32>
      %128 = arith.divf %126, %127 : vector<8x1xf32>
      %129 = vector.broadcast %121 : vector<8x1xf32> to vector<8x32xf32>
      %130 = arith.subf %116, %129 : vector<8x32xf32>
      %cst_48 = arith.constant 9.99999974E-6 : f32
      %131 = vector.broadcast %cst_48 : f32 to vector<8x1xf32>
      %132 = arith.addf %128, %131 : vector<8x1xf32>
      %133 = math.rsqrt %132 : vector<8x1xf32>
      %134 = vector.broadcast %133 : vector<8x1xf32> to vector<8x32xf32>
      %135 = arith.mulf %130, %134 : vector<8x32xf32>
      %136 = vector.broadcast %117 : vector<1x32xf32> to vector<8x32xf32>
      %137 = arith.mulf %135, %136 : vector<8x32xf32>
      %138 = vector.extract_strided_slice %12 {offsets = [0, 128], sizes = [32, 32], strides = [1, 1]} : vector<32x256xbf16> to vector<32x32xbf16>
      %139 = arith.truncf %137 : vector<8x32xf32> to vector<8x32xbf16>
      %cst_49 = arith.constant dense<0.000000e+00> : vector<8x32xf32>
      %140 = tpu.matmul %139, %138, %cst_49 {dimension_numbers = #tpu.dot_dimension_numbers<[1], [0], [0], [1], [0, 0, 1, 1], [], []>} : vector<8x32xbf16>, vector<32x32xbf16>, vector<8x32xf32> -> vector<8x32xf32>
      %141 = vector.extract_strided_slice %12 {offsets = [0, 160], sizes = [32, 64], strides = [1, 1]} : vector<32x256xbf16> to vector<32x64xbf16>
      %142 = arith.truncf %10 : vector<16x32xf32> to vector<16x32xbf16>
      %cst_50 = arith.constant dense<0.000000e+00> : vector<16x64xf32>
      %143 = tpu.matmul %142, %141, %cst_50 {dimension_numbers = #tpu.dot_dimension_numbers<[1], [0], [0], [1], [0, 0, 1, 1], [], []>} : vector<16x32xbf16>, vector<32x64xbf16>, vector<16x64xf32> -> vector<16x64xf32>
      %144 = vector.extract_strided_slice %140 {offsets = [0, 0], sizes = [8, 8], strides = [1, 1]} : vector<8x32xf32> to vector<8x8xf32>
      %145 = arith.truncf %144 : vector<8x8xf32> to vector<8x8xbf16>
      %146 = vector.extract_strided_slice %143 {offsets = [0, 0], sizes = [16, 8], strides = [1, 1]} : vector<16x64xf32> to vector<16x8xf32>
      %147 = arith.truncf %146 : vector<16x8xf32> to vector<16x8xbf16>
      %148 = vector.extract_strided_slice %143 {offsets = [0, 32], sizes = [16, 8], strides = [1, 1]} : vector<16x64xf32> to vector<16x8xf32>
      %149 = arith.truncf %148 : vector<16x8xf32> to vector<16x8xbf16>
      %cst_51 = arith.constant dense<0.000000e+00> : vector<8x16xf32>
      %150 = tpu.matmul %145, %147, %cst_51 {dimension_numbers = #tpu.dot_dimension_numbers<[1], [1], [0], [0], [0, 0, 1, 0], [], []>} : vector<8x8xbf16>, vector<16x8xbf16>, vector<8x16xf32> -> vector<8x16xf32>
      %cst_52 = arith.constant 0.353553385 : f32
      %151 = vector.broadcast %cst_52 : f32 to vector<8x16xf32>
      %152 = arith.mulf %150, %151 : vector<8x16xf32>
      %cst_53 = arith.constant dense<0xFF800000> : vector<8xf32>
      %153 = vector.multi_reduction <maximumf>, %152, %cst_53 [1] : vector<8x16xf32> to vector<8xf32>
      %154 = vector.shape_cast %153 : vector<8xf32> to vector<8x1xf32>
      %155 = vector.broadcast %154 : vector<8x1xf32> to vector<8x16xf32>
      %156 = arith.subf %152, %155 : vector<8x16xf32>
      %157 = math.exp %156 : vector<8x16xf32>
      %cst_54 = arith.constant dense<0.000000e+00> : vector<8xf32>
      %158 = vector.multi_reduction <add>, %157, %cst_54 [1] : vector<8x16xf32> to vector<8xf32>
      %159 = vector.shape_cast %158 : vector<8xf32> to vector<8x1xf32>
      %160 = tpu.reciprocal %159 {approx = true} : vector<8x1xf32> -> vector<8x1xf32>
      %161 = vector.broadcast %160 : vector<8x1xf32> to vector<8x16xf32>
      %162 = arith.mulf %157, %161 : vector<8x16xf32>
      %163 = arith.truncf %162 : vector<8x16xf32> to vector<8x16xbf16>
      %cst_55 = arith.constant dense<0.000000e+00> : vector<8x8xf32>
      %164 = tpu.matmul %163, %149, %cst_55 {dimension_numbers = #tpu.dot_dimension_numbers<[1], [0], [0], [1], [0, 0, 1, 1], [], []>} : vector<8x16xbf16>, vector<16x8xbf16>, vector<8x8xf32> -> vector<8x8xf32>
      %c0_56 = arith.constant 0 : index
      %c0_57 = arith.constant 0 : index
      %165 = vector.load %arg19[%c0_56, %c0_57] : memref<8x32xf32, #tpu.memory_space<vmem>>, vector<8x8xf32>
      tpu.vector_store %arg19[%c0_56, %c0_57], %164 {strides = array<i32>} : memref<8x32xf32, #tpu.memory_space<vmem>>, vector<8x8xf32>,
      %166 = vector.extract_strided_slice %140 {offsets = [0, 8], sizes = [8, 8], strides = [1, 1]} : vector<8x32xf32> to vector<8x8xf32>
      %167 = arith.truncf %166 : vector<8x8xf32> to vector<8x8xbf16>
      %168 = vector.extract_strided_slice %143 {offsets = [0, 8], sizes = [16, 8], strides = [1, 1]} : vector<16x64xf32> to vector<16x8xf32>
      %169 = arith.truncf %168 : vector<16x8xf32> to vector<16x8xbf16>
      %170 = vector.extract_strided_slice %143 {offsets = [0, 40], sizes = [16, 8], strides = [1, 1]} : vector<16x64xf32> to vector<16x8xf32>
      %171 = arith.truncf %170 : vector<16x8xf32> to vector<16x8xbf16>
      %cst_58 = arith.constant dense<0.000000e+00> : vector<8x16xf32>
      %172 = tpu.matmul %167, %169, %cst_58 {dimension_numbers = #tpu.dot_dimension_numbers<[1], [1], [0], [0], [0, 0, 1, 0], [], []>} : vector<8x8xbf16>, vector<16x8xbf16>, vector<8x16xf32> -> vector<8x16xf32>
      %cst_59 = arith.constant 0.353553385 : f32
      %173 = vector.broadcast %cst_59 : f32 to vector<8x16xf32>
      %174 = arith.mulf %172, %173 : vector<8x16xf32>
      %cst_60 = arith.constant dense<0xFF800000> : vector<8xf32>
      %175 = vector.multi_reduction <maximumf>, %174, %cst_60 [1] : vector<8x16xf32> to vector<8xf32>
      %176 = vector.shape_cast %175 : vector<8xf32> to vector<8x1xf32>
      %177 = vector.broadcast %176 : vector<8x1xf32> to vector<8x16xf32>
      %178 = arith.subf %174, %177 : vector<8x16xf32>
      %179 = math.exp %178 : vector<8x16xf32>
      %cst_61 = arith.constant dense<0.000000e+00> : vector<8xf32>
      %180 = vector.multi_reduction <add>, %179, %cst_61 [1] : vector<8x16xf32> to vector<8xf32>
      %181 = vector.shape_cast %180 : vector<8xf32> to vector<8x1xf32>
      %182 = tpu.reciprocal %181 {approx = true} : vector<8x1xf32> -> vector<8x1xf32>
      %183 = vector.broadcast %182 : vector<8x1xf32> to vector<8x16xf32>
      %184 = arith.mulf %179, %183 : vector<8x16xf32>
      %185 = arith.truncf %184 : vector<8x16xf32> to vector<8x16xbf16>
      %cst_62 = arith.constant dense<0.000000e+00> : vector<8x8xf32>
      %186 = tpu.matmul %185, %171, %cst_62 {dimension_numbers = #tpu.dot_dimension_numbers<[1], [0], [0], [1], [0, 0, 1, 1], [], []>} : vector<8x16xbf16>, vector<16x8xbf16>, vector<8x8xf32> -> vector<8x8xf32>
      %c0_63 = arith.constant 0 : index
      %c8_64 = arith.constant 8 : index
      %187 = vector.load %arg19[%c0_63, %c8_64] : memref<8x32xf32, #tpu.memory_space<vmem>>, vector<8x8xf32>
      tpu.vector_store %arg19[%c0_63, %c8_64], %186 {strides = array<i32>} : memref<8x32xf32, #tpu.memory_space<vmem>>, vector<8x8xf32>,
      %188 = vector.extract_strided_slice %140 {offsets = [0, 16], sizes = [8, 8], strides = [1, 1]} : vector<8x32xf32> to vector<8x8xf32>
      %189 = arith.truncf %188 : vector<8x8xf32> to vector<8x8xbf16>
      %190 = vector.extract_strided_slice %143 {offsets = [0, 16], sizes = [16, 8], strides = [1, 1]} : vector<16x64xf32> to vector<16x8xf32>
      %191 = arith.truncf %190 : vector<16x8xf32> to vector<16x8xbf16>
      %192 = vector.extract_strided_slice %143 {offsets = [0, 48], sizes = [16, 8], strides = [1, 1]} : vector<16x64xf32> to vector<16x8xf32>
      %193 = arith.truncf %192 : vector<16x8xf32> to vector<16x8xbf16>
      %cst_65 = arith.constant dense<0.000000e+00> : vector<8x16xf32>
      %194 = tpu.matmul %189, %191, %cst_65 {dimension_numbers = #tpu.dot_dimension_numbers<[1], [1], [0], [0], [0, 0, 1, 0], [], []>} : vector<8x8xbf16>, vector<16x8xbf16>, vector<8x16xf32> -> vector<8x16xf32>
      %cst_66 = arith.constant 0.353553385 : f32
      %195 = vector.broadcast %cst_66 : f32 to vector<8x16xf32>
      %196 = arith.mulf %194, %195 : vector<8x16xf32>
      %cst_67 = arith.constant dense<0xFF800000> : vector<8xf32>
      %197 = vector.multi_reduction <maximumf>, %196, %cst_67 [1] : vector<8x16xf32> to vector<8xf32>
      %198 = vector.shape_cast %197 : vector<8xf32> to vector<8x1xf32>
      %199 = vector.broadcast %198 : vector<8x1xf32> to vector<8x16xf32>
      %200 = arith.subf %196, %199 : vector<8x16xf32>
      %201 = math.exp %200 : vector<8x16xf32>
      %cst_68 = arith.constant dense<0.000000e+00> : vector<8xf32>
      %202 = vector.multi_reduction <add>, %201, %cst_68 [1] : vector<8x16xf32> to vector<8xf32>
      %203 = vector.shape_cast %202 : vector<8xf32> to vector<8x1xf32>
      %204 = tpu.reciprocal %203 {approx = true} : vector<8x1xf32> -> vector<8x1xf32>
      %205 = vector.broadcast %204 : vector<8x1xf32> to vector<8x16xf32>
      %206 = arith.mulf %201, %205 : vector<8x16xf32>
      %207 = arith.truncf %206 : vector<8x16xf32> to vector<8x16xbf16>
      %cst_69 = arith.constant dense<0.000000e+00> : vector<8x8xf32>
      %208 = tpu.matmul %207, %193, %cst_69 {dimension_numbers = #tpu.dot_dimension_numbers<[1], [0], [0], [1], [0, 0, 1, 1], [], []>} : vector<8x16xbf16>, vector<16x8xbf16>, vector<8x8xf32> -> vector<8x8xf32>
      %c0_70 = arith.constant 0 : index
      %c16_71 = arith.constant 16 : index
      %209 = vector.load %arg19[%c0_70, %c16_71] : memref<8x32xf32, #tpu.memory_space<vmem>>, vector<8x8xf32>
      tpu.vector_store %arg19[%c0_70, %c16_71], %208 {strides = array<i32>} : memref<8x32xf32, #tpu.memory_space<vmem>>, vector<8x8xf32>,
      %210 = vector.extract_strided_slice %140 {offsets = [0, 24], sizes = [8, 8], strides = [1, 1]} : vector<8x32xf32> to vector<8x8xf32>
      %211 = arith.truncf %210 : vector<8x8xf32> to vector<8x8xbf16>
      %212 = vector.extract_strided_slice %143 {offsets = [0, 24], sizes = [16, 8], strides = [1, 1]} : vector<16x64xf32> to vector<16x8xf32>
      %213 = arith.truncf %212 : vector<16x8xf32> to vector<16x8xbf16>
      %214 = vector.extract_strided_slice %143 {offsets = [0, 56], sizes = [16, 8], strides = [1, 1]} : vector<16x64xf32> to vector<16x8xf32>
      %215 = arith.truncf %214 : vector<16x8xf32> to vector<16x8xbf16>
      %cst_72 = arith.constant dense<0.000000e+00> : vector<8x16xf32>
      %216 = tpu.matmul %211, %213, %cst_72 {dimension_numbers = #tpu.dot_dimension_numbers<[1], [1], [0], [0], [0, 0, 1, 0], [], []>} : vector<8x8xbf16>, vector<16x8xbf16>, vector<8x16xf32> -> vector<8x16xf32>
      %cst_73 = arith.constant 0.353553385 : f32
      %217 = vector.broadcast %cst_73 : f32 to vector<8x16xf32>
      %218 = arith.mulf %216, %217 : vector<8x16xf32>
      %cst_74 = arith.constant dense<0xFF800000> : vector<8xf32>
      %219 = vector.multi_reduction <maximumf>, %218, %cst_74 [1] : vector<8x16xf32> to vector<8xf32>
      %220 = vector.shape_cast %219 : vector<8xf32> to vector<8x1xf32>
      %221 = vector.broadcast %220 : vector<8x1xf32> to vector<8x16xf32>
      %222 = arith.subf %218, %221 : vector<8x16xf32>
      %223 = math.exp %222 : vector<8x16xf32>
      %cst_75 = arith.constant dense<0.000000e+00> : vector<8xf32>
      %224 = vector.multi_reduction <add>, %223, %cst_75 [1] : vector<8x16xf32> to vector<8xf32>
      %225 = vector.shape_cast %224 : vector<8xf32> to vector<8x1xf32>
      %226 = tpu.reciprocal %225 {approx = true} : vector<8x1xf32> -> vector<8x1xf32>
      %227 = vector.broadcast %226 : vector<8x1xf32> to vector<8x16xf32>
      %228 = arith.mulf %223, %227 : vector<8x16xf32>
      %229 = arith.truncf %228 : vector<8x16xf32> to vector<8x16xbf16>
      %cst_76 = arith.constant dense<0.000000e+00> : vector<8x8xf32>
      %230 = tpu.matmul %229, %215, %cst_76 {dimension_numbers = #tpu.dot_dimension_numbers<[1], [0], [0], [1], [0, 0, 1, 1], [], []>} : vector<8x16xbf16>, vector<16x8xbf16>, vector<8x8xf32> -> vector<8x8xf32>
      %c0_77 = arith.constant 0 : index
      %c24_78 = arith.constant 24 : index
      %231 = vector.load %arg19[%c0_77, %c24_78] : memref<8x32xf32, #tpu.memory_space<vmem>>, vector<8x8xf32>
      tpu.vector_store %arg19[%c0_77, %c24_78], %230 {strides = array<i32>} : memref<8x32xf32, #tpu.memory_space<vmem>>, vector<8x8xf32>,
      %c0_79 = arith.constant 0 : index
      %c0_80 = arith.constant 0 : index
      %232 = vector.load %arg19[%c0_79, %c0_80] : memref<8x32xf32, #tpu.memory_space<vmem>>, vector<8x32xf32>
      %233 = vector.extract_strided_slice %12 {offsets = [0, 224], sizes = [32, 32], strides = [1, 1]} : vector<32x256xbf16> to vector<32x32xbf16>
      %234 = arith.truncf %232 : vector<8x32xf32> to vector<8x32xbf16>
      %cst_81 = arith.constant dense<0.000000e+00> : vector<8x32xf32>
      %235 = tpu.matmul %234, %233, %cst_81 {dimension_numbers = #tpu.dot_dimension_numbers<[1], [0], [0], [1], [0, 0, 1, 1], [], []>} : vector<8x32xbf16>, vector<32x32xbf16>, vector<8x32xf32> -> vector<8x32xf32>
      %236 = arith.addf %137, %235 : vector<8x32xf32>
      %237 = vector.extract_strided_slice %14 {offsets = [1, 0], sizes = [1, 32], strides = [1, 1]} : vector<3x32xf32> to vector<1x32xf32>
      %cst_82 = arith.constant dense<0.000000e+00> : vector<8xf32>
      %238 = vector.multi_reduction <add>, %236, %cst_82 [1] : vector<8x32xf32> to vector<8xf32>
      %239 = vector.shape_cast %238 : vector<8xf32> to vector<8x1xf32>
      %cst_83 = arith.constant 3.200000e+01 : f32
      %240 = vector.broadcast %cst_83 : f32 to vector<8x1xf32>
      %241 = arith.divf %239, %240 : vector<8x1xf32>
      %242 = vector.broadcast %241 : vector<8x1xf32> to vector<8x32xf32>
      %243 = arith.subf %236, %242 : vector<8x32xf32>
      %244 = arith.mulf %243, %243 : vector<8x32xf32>
      %cst_84 = arith.constant dense<0.000000e+00> : vector<8xf32>
      %245 = vector.multi_reduction <add>, %244, %cst_84 [1] : vector<8x32xf32> to vector<8xf32>
      %246 = vector.shape_cast %245 : vector<8xf32> to vector<8x1xf32>
      %cst_85 = arith.constant 3.200000e+01 : f32
      %247 = vector.broadcast %cst_85 : f32 to vector<8x1xf32>
      %248 = arith.divf %246, %247 : vector<8x1xf32>
      %249 = vector.broadcast %241 : vector<8x1xf32> to vector<8x32xf32>
      %250 = arith.subf %236, %249 : vector<8x32xf32>
      %cst_86 = arith.constant 9.99999974E-6 : f32
      %251 = vector.broadcast %cst_86 : f32 to vector<8x1xf32>
      %252 = arith.addf %248, %251 : vector<8x1xf32>
      %253 = math.rsqrt %252 : vector<8x1xf32>
      %254 = vector.broadcast %253 : vector<8x1xf32> to vector<8x32xf32>
      %255 = arith.mulf %250, %254 : vector<8x32xf32>
      %256 = vector.broadcast %237 : vector<1x32xf32> to vector<8x32xf32>
      %257 = arith.mulf %255, %256 : vector<8x32xf32>
      %c0_87 = arith.constant 0 : index
      %c0_88 = arith.constant 0 : index
      %c0_89 = arith.constant 0 : index
      %258 = vector.load %arg7[%c0_87, %c0_88, %c0_89] : memref<1x32x2048xbf16, #tpu.memory_space<vmem>>, vector<1x32x2048xbf16>
      %259 = vector.shape_cast %258 : vector<1x32x2048xbf16> to vector<32x2048xbf16>
      %260 = arith.truncf %257 : vector<8x32xf32> to vector<8x32xbf16>
      %cst_90 = arith.constant dense<0.000000e+00> : vector<8x2048xf32>
      %261 = tpu.matmul %260, %259, %cst_90 {dimension_numbers = #tpu.dot_dimension_numbers<[1], [0], [0], [1], [0, 0, 1, 1], [], []>} : vector<8x32xbf16>, vector<32x2048xbf16>, vector<8x2048xf32> -> vector<8x2048xf32>
      %cst_91 = arith.constant 0.000000e+00 : f32
      %262 = vector.broadcast %cst_91 : f32 to vector<8x2048xf32>
      %263 = arith.maximumf %261, %262 : vector<8x2048xf32>
      %264 = arith.truncf %263 : vector<8x2048xf32> to vector<8x2048xbf16>
      %c0_92 = arith.constant 0 : index
      %c0_93 = arith.constant 0 : index
      %c0_94 = arith.constant 0 : index
      %265 = vector.load %arg8[%c0_92, %c0_93, %c0_94] : memref<1x2048x32xbf16, #tpu.memory_space<vmem>>, vector<1x2048x32xbf16>
      %266 = vector.shape_cast %265 : vector<1x2048x32xbf16> to vector<2048x32xbf16>
      %cst_95 = arith.constant dense<0.000000e+00> : vector<8x32xf32>
      %267 = tpu.matmul %264, %266, %cst_95 {dimension_numbers = #tpu.dot_dimension_numbers<[1], [0], [0], [1], [0, 0, 1, 1], [], []>} : vector<8x2048xbf16>, vector<2048x32xbf16>, vector<8x32xf32> -> vector<8x32xf32>
      %268 = arith.addf %257, %267 : vector<8x32xf32>
      %269 = vector.extract_strided_slice %14 {offsets = [2, 0], sizes = [1, 32], strides = [1, 1]} : vector<3x32xf32> to vector<1x32xf32>
      %cst_96 = arith.constant dense<0.000000e+00> : vector<8xf32>
      %270 = vector.multi_reduction <add>, %268, %cst_96 [1] : vector<8x32xf32> to vector<8xf32>
      %271 = vector.shape_cast %270 : vector<8xf32> to vector<8x1xf32>
      %cst_97 = arith.constant 3.200000e+01 : f32
      %272 = vector.broadcast %cst_97 : f32 to vector<8x1xf32>
      %273 = arith.divf %271, %272 : vector<8x1xf32>
      %274 = vector.broadcast %273 : vector<8x1xf32> to vector<8x32xf32>
      %275 = arith.subf %268, %274 : vector<8x32xf32>
      %276 = arith.mulf %275, %275 : vector<8x32xf32>
      %cst_98 = arith.constant dense<0.000000e+00> : vector<8xf32>
      %277 = vector.multi_reduction <add>, %276, %cst_98 [1] : vector<8x32xf32> to vector<8xf32>
      %278 = vector.shape_cast %277 : vector<8xf32> to vector<8x1xf32>
      %cst_99 = arith.constant 3.200000e+01 : f32
      %279 = vector.broadcast %cst_99 : f32 to vector<8x1xf32>
      %280 = arith.divf %278, %279 : vector<8x1xf32>
      %281 = vector.broadcast %273 : vector<8x1xf32> to vector<8x32xf32>
      %282 = arith.subf %268, %281 : vector<8x32xf32>
      %cst_100 = arith.constant 9.99999974E-6 : f32
      %283 = vector.broadcast %cst_100 : f32 to vector<8x1xf32>
      %284 = arith.addf %280, %283 : vector<8x1xf32>
      %285 = math.rsqrt %284 : vector<8x1xf32>
      %286 = vector.broadcast %285 : vector<8x1xf32> to vector<8x32xf32>
      %287 = arith.mulf %282, %286 : vector<8x32xf32>
      %288 = vector.broadcast %269 : vector<1x32xf32> to vector<8x32xf32>
      %289 = arith.mulf %287, %288 : vector<8x32xf32>
      %c0_101 = arith.constant 0 : index
      %c0_102 = arith.constant 0 : index
      %290 = vector.load %arg17[%c0_101, %c0_102] : memref<8x32xf32, #tpu.memory_space<vmem>>, vector<8x32xf32>
      tpu.vector_store %arg17[%c0_101, %c0_102], %289 {strides = array<i32>} : memref<8x32xf32, #tpu.memory_space<vmem>>, vector<8x32xf32>,
    } else {
    }
    %c2_i32_2 = arith.constant 2 : i32
    %6 = arith.cmpi eq, %arg1, %c2_i32_2 : i32
    %7 = arith.extui %6 : i1 to i32
    %c0_i32_3 = arith.constant 0 : i32
    %8 = arith.cmpi ne, %7, %c0_i32_3 : i32
    scf.if %8 {
      %c0 = arith.constant 0 : index
      %c0_4 = arith.constant 0 : index
      %9 = vector.load %arg17[%c0, %c0_4] : memref<8x32xf32, #tpu.memory_space<vmem>>, vector<8x32xf32>
      %c0_5 = arith.constant 0 : index
      %c0_6 = arith.constant 0 : index
      %c0_7 = arith.constant 0 : index
      %10 = vector.load %arg15[%c0_5, %c0_6, %c0_7] : memref<1x8x32xf32, #tpu.memory_space<vmem>>, vector<1x8x32xf32>
      %11 = vector.shape_cast %10 : vector<1x8x32xf32> to vector<8x32xf32>
      %12 = vector.shape_cast %9 : vector<8x32xf32> to vector<1x8x32xf32>
      tpu.vector_store %arg15[%c0_5, %c0_6, %c0_7], %12 {strides = array<i32>} : memref<1x8x32xf32, #tpu.memory_space<vmem>>, vector<1x8x32xf32>,
      %c0_8 = arith.constant 0 : index
      %c0_9 = arith.constant 0 : index
      %13 = vector.load %arg10[%c0_8, %c0_9] : memref<32x64xbf16, #tpu.memory_space<vmem>>, vector<32x64xbf16>
      %14 = arith.truncf %9 : vector<8x32xf32> to vector<8x32xbf16>
      %cst = arith.constant dense<0.000000e+00> : vector<8x64xf32>
      %15 = tpu.matmul %14, %13, %cst {dimension_numbers = #tpu.dot_dimension_numbers<[1], [0], [0], [1], [0, 0, 1, 1], [], []>} : vector<8x32xbf16>, vector<32x64xbf16>, vector<8x64xf32> -> vector<8x64xf32>
      %c0_10 = arith.constant 0 : index
      %c0_11 = arith.constant 0 : index
      %16 = vector.load %arg11[%c0_10, %c0_11] : memref<1x64xf32, #tpu.memory_space<vmem>>, vector<1x64xf32>
      %17 = vector.broadcast %16 : vector<1x64xf32> to vector<8x64xf32>
      %18 = arith.addf %15, %17 : vector<8x64xf32>
      %c0_12 = arith.constant 0 : index
      %c0_13 = arith.constant 0 : index
      %c0_14 = arith.constant 0 : index
      %19 = vector.load %arg12[%c0_12, %c0_13, %c0_14] : memref<2x2x32xf32, #tpu.memory_space<vmem>>, vector<2x2x32xf32>
      %20 = vector.extract_strided_slice %18 {offsets = [0, 0], sizes = [8, 32], strides = [1, 1]} : vector<8x64xf32> to vector<8x32xf32>
      %21 = vector.extract_strided_slice %19 {offsets = [0, 0, 0], sizes = [1, 1, 32], strides = [1, 1, 1]} : vector<2x2x32xf32> to vector<1x1x32xf32>
      %22 = vector.shape_cast %21 : vector<1x1x32xf32> to vector<1x32xf32>
      %23 = vector.extract_strided_slice %19 {offsets = [0, 1, 0], sizes = [1, 1, 32], strides = [1, 1, 1]} : vector<2x2x32xf32> to vector<1x1x32xf32>
      %24 = vector.shape_cast %23 : vector<1x1x32xf32> to vector<1x32xf32>
      %cst_15 = arith.constant dense<0.000000e+00> : vector<8xf32>
      %25 = vector.multi_reduction <add>, %20, %cst_15 [1] : vector<8x32xf32> to vector<8xf32>
      %26 = vector.shape_cast %25 : vector<8xf32> to vector<8x1xf32>
      %cst_16 = arith.constant 3.200000e+01 : f32
      %27 = vector.broadcast %cst_16 : f32 to vector<8x1xf32>
      %28 = arith.divf %26, %27 : vector<8x1xf32>
      %29 = vector.broadcast %28 : vector<8x1xf32> to vector<8x32xf32>
      %30 = arith.subf %20, %29 : vector<8x32xf32>
      %31 = arith.mulf %30, %30 : vector<8x32xf32>
      %cst_17 = arith.constant dense<0.000000e+00> : vector<8xf32>
      %32 = vector.multi_reduction <add>, %31, %cst_17 [1] : vector<8x32xf32> to vector<8xf32>
      %33 = vector.shape_cast %32 : vector<8xf32> to vector<8x1xf32>
      %cst_18 = arith.constant 3.200000e+01 : f32
      %34 = vector.broadcast %cst_18 : f32 to vector<8x1xf32>
      %35 = arith.divf %33, %34 : vector<8x1xf32>
      %36 = vector.broadcast %28 : vector<8x1xf32> to vector<8x32xf32>
      %37 = arith.subf %20, %36 : vector<8x32xf32>
      %cst_19 = arith.constant 9.99999974E-6 : f32
      %38 = vector.broadcast %cst_19 : f32 to vector<8x1xf32>
      %39 = arith.addf %35, %38 : vector<8x1xf32>
      %40 = math.rsqrt %39 : vector<8x1xf32>
      %41 = vector.broadcast %40 : vector<8x1xf32> to vector<8x32xf32>
      %42 = arith.mulf %37, %41 : vector<8x32xf32>
      %43 = vector.broadcast %22 : vector<1x32xf32> to vector<8x32xf32>
      %44 = arith.mulf %42, %43 : vector<8x32xf32>
      %45 = vector.broadcast %24 : vector<1x32xf32> to vector<8x32xf32>
      %46 = arith.addf %44, %45 : vector<8x32xf32>
      %cst_20 = arith.constant 0.000000e+00 : f32
      %47 = vector.broadcast %cst_20 : f32 to vector<8x32xf32>
      %48 = arith.maximumf %46, %47 : vector<8x32xf32>
      %49 = vector.extract_strided_slice %18 {offsets = [0, 32], sizes = [8, 32], strides = [1, 1]} : vector<8x64xf32> to vector<8x32xf32>
      %50 = vector.extract_strided_slice %19 {offsets = [1, 0, 0], sizes = [1, 1, 32], strides = [1, 1, 1]} : vector<2x2x32xf32> to vector<1x1x32xf32>
      %51 = vector.shape_cast %50 : vector<1x1x32xf32> to vector<1x32xf32>
      %52 = vector.extract_strided_slice %19 {offsets = [1, 1, 0], sizes = [1, 1, 32], strides = [1, 1, 1]} : vector<2x2x32xf32> to vector<1x1x32xf32>
      %53 = vector.shape_cast %52 : vector<1x1x32xf32> to vector<1x32xf32>
      %cst_21 = arith.constant dense<0.000000e+00> : vector<8xf32>
      %54 = vector.multi_reduction <add>, %49, %cst_21 [1] : vector<8x32xf32> to vector<8xf32>
      %55 = vector.shape_cast %54 : vector<8xf32> to vector<8x1xf32>
      %cst_22 = arith.constant 3.200000e+01 : f32
      %56 = vector.broadcast %cst_22 : f32 to vector<8x1xf32>
      %57 = arith.divf %55, %56 : vector<8x1xf32>
      %58 = vector.broadcast %57 : vector<8x1xf32> to vector<8x32xf32>
      %59 = arith.subf %49, %58 : vector<8x32xf32>
      %60 = arith.mulf %59, %59 : vector<8x32xf32>
      %cst_23 = arith.constant dense<0.000000e+00> : vector<8xf32>
      %61 = vector.multi_reduction <add>, %60, %cst_23 [1] : vector<8x32xf32> to vector<8xf32>
      %62 = vector.shape_cast %61 : vector<8xf32> to vector<8x1xf32>
      %cst_24 = arith.constant 3.200000e+01 : f32
      %63 = vector.broadcast %cst_24 : f32 to vector<8x1xf32>
      %64 = arith.divf %62, %63 : vector<8x1xf32>
      %65 = vector.broadcast %57 : vector<8x1xf32> to vector<8x32xf32>
      %66 = arith.subf %49, %65 : vector<8x32xf32>
      %cst_25 = arith.constant 9.99999974E-6 : f32
      %67 = vector.broadcast %cst_25 : f32 to vector<8x1xf32>
      %68 = arith.addf %64, %67 : vector<8x1xf32>
      %69 = math.rsqrt %68 : vector<8x1xf32>
      %70 = vector.broadcast %69 : vector<8x1xf32> to vector<8x32xf32>
      %71 = arith.mulf %66, %70 : vector<8x32xf32>
      %72 = vector.broadcast %51 : vector<1x32xf32> to vector<8x32xf32>
      %73 = arith.mulf %71, %72 : vector<8x32xf32>
      %74 = vector.broadcast %53 : vector<1x32xf32> to vector<8x32xf32>
      %75 = arith.addf %73, %74 : vector<8x32xf32>
      %cst_26 = arith.constant 0.000000e+00 : f32
      %76 = vector.broadcast %cst_26 : f32 to vector<8x32xf32>
      %77 = arith.maximumf %75, %76 : vector<8x32xf32>
      %c0_27 = arith.constant 0 : index
      %c0_28 = arith.constant 0 : index
      %c0_29 = arith.constant 0 : index
      %78 = vector.load %arg13[%c0_27, %c0_28, %c0_29] : memref<2x32x128xbf16, #tpu.memory_space<vmem>>, vector<1x32x128xbf16>
      %79 = vector.shape_cast %78 : vector<1x32x128xbf16> to vector<32x128xbf16>
      %80 = arith.truncf %48 : vector<8x32xf32> to vector<8x32xbf16>
      %cst_30 = arith.constant dense<0.000000e+00> : vector<8x128xf32>
      %81 = tpu.matmul %80, %79, %cst_30 {dimension_numbers = #tpu.dot_dimension_numbers<[1], [0], [0], [1], [0, 0, 1, 1], [], []>} : vector<8x32xbf16>, vector<32x128xbf16>, vector<8x128xf32> -> vector<8x128xf32>
      %c1 = arith.constant 1 : index
      %c0_31 = arith.constant 0 : index
      %c0_32 = arith.constant 0 : index
      %82 = vector.load %arg13[%c1, %c0_31, %c0_32] : memref<2x32x128xbf16, #tpu.memory_space<vmem>>, vector<1x32x128xbf16>
      %83 = vector.shape_cast %82 : vector<1x32x128xbf16> to vector<32x128xbf16>
      %84 = arith.truncf %77 : vector<8x32xf32> to vector<8x32xbf16>
      %cst_33 = arith.constant dense<0.000000e+00> : vector<8x128xf32>
      %85 = tpu.matmul %84, %83, %cst_33 {dimension_numbers = #tpu.dot_dimension_numbers<[1], [0], [0], [1], [0, 0, 1, 1], [], []>} : vector<8x32xbf16>, vector<32x128xbf16>, vector<8x128xf32> -> vector<8x128xf32>
      %86 = arith.addf %81, %85 : vector<8x128xf32>
      %c0_34 = arith.constant 0 : index
      %c0_35 = arith.constant 0 : index
      %87 = vector.load %arg14[%c0_34, %c0_35] : memref<1x128xf32, #tpu.memory_space<vmem>>, vector<1x128xf32>
      %88 = vector.broadcast %87 : vector<1x128xf32> to vector<8x128xf32>
      %89 = arith.addf %86, %88 : vector<8x128xf32>
      %c0_36 = arith.constant 0 : index
      %c0_37 = arith.constant 0 : index
      %c0_38 = arith.constant 0 : index
      %90 = vector.load %arg16[%c0_36, %c0_37, %c0_38] : memref<1x8x128xf32, #tpu.memory_space<vmem>>, vector<1x8x128xf32>
      %91 = vector.shape_cast %90 : vector<1x8x128xf32> to vector<8x128xf32>
      %92 = vector.shape_cast %89 : vector<8x128xf32> to vector<1x8x128xf32>
      tpu.vector_store %arg16[%c0_36, %c0_37, %c0_38], %92 {strides = array<i32>} : memref<1x8x128xf32, #tpu.memory_space<vmem>>, vector<1x8x128xf32>,
    } else {
    }
    return
  }
  func.func @transform_0(%arg0: i32, %arg1: i32) -> (i32, i32, i32) {
    %c0_i32 = arith.constant 0 : i32
    %c0_i32_0 = arith.constant 0 : i32
    %c0_i32_1 = arith.constant 0 : i32
    return %arg0, %c0_i32, %c0_i32_0 : i32, i32, i32
  }
  func.func @transform_1(%arg0: i32, %arg1: i32) -> (i32, i32, i32) {
    %c0_i32 = arith.constant 0 : i32
    %c0_i32_0 = arith.constant 0 : i32
    %c0_i32_1 = arith.constant 0 : i32
    return %arg0, %c0_i32, %c0_i32_0 : i32, i32, i32
  }
  func.func @transform_2(%arg0: i32, %arg1: i32) -> (i32, i32, i32) {
    %c0_i32 = arith.constant 0 : i32
    %c0_i32_0 = arith.constant 0 : i32
    %c0_i32_1 = arith.constant 0 : i32
    return %arg0, %c0_i32, %c0_i32_0 : i32, i32, i32
  }
  func.func @transform_3(%arg0: i32, %arg1: i32) -> (i32, i32) {
    %c0_i32 = arith.constant 0 : i32
    %c0_i32_0 = arith.constant 0 : i32
    %c0_i32_1 = arith.constant 0 : i32
    return %c0_i32, %c0_i32_0 : i32, i32
  }
  func.func @transform_4(%arg0: i32, %arg1: i32) -> (i32, i32, i32) {
    %c1_i32 = arith.constant 1 : i32
    %0 = arith.minsi %arg1, %c1_i32 : i32
    %c0_i32 = arith.constant 0 : i32
    %c0_i32_0 = arith.constant 0 : i32
    %c0_i32_1 = arith.constant 0 : i32
    return %0, %c0_i32, %c0_i32_0 : i32, i32, i32
  }
  func.func @transform_5(%arg0: i32, %arg1: i32) -> (i32, i32, i32) {
    %c1_i32 = arith.constant 1 : i32
    %0 = arith.minsi %arg1, %c1_i32 : i32
    %c0_i32 = arith.constant 0 : i32
    %c0_i32_0 = arith.constant 0 : i32
    %c0_i32_1 = arith.constant 0 : i32
    return %0, %c0_i32, %c0_i32_0 : i32, i32, i32
  }
  func.func @transform_6(%arg0: i32, %arg1: i32) -> (i32, i32, i32) {
    %c1_i32 = arith.constant 1 : i32
    %0 = arith.minsi %arg1, %c1_i32 : i32
    %c0_i32 = arith.constant 0 : i32
    %c0_i32_0 = arith.constant 0 : i32
    %c0_i32_1 = arith.constant 0 : i32
    return %0, %c0_i32, %c0_i32_0 : i32, i32, i32
  }
  func.func @transform_7(%arg0: i32, %arg1: i32) -> (i32, i32, i32) {
    %c1_i32 = arith.constant 1 : i32
    %0 = arith.minsi %arg1, %c1_i32 : i32
    %c0_i32 = arith.constant 0 : i32
    %c0_i32_0 = arith.constant 0 : i32
    %c0_i32_1 = arith.constant 0 : i32
    return %0, %c0_i32, %c0_i32_0 : i32, i32, i32
  }
  func.func @transform_8(%arg0: i32, %arg1: i32) -> (i32, i32) {
    %c0_i32 = arith.constant 0 : i32
    %c0_i32_0 = arith.constant 0 : i32
    %c0_i32_1 = arith.constant 0 : i32
    return %c0_i32, %c0_i32_0 : i32, i32
  }
  func.func @transform_9(%arg0: i32, %arg1: i32) -> (i32, i32) {
    %c0_i32 = arith.constant 0 : i32
    %c0_i32_0 = arith.constant 0 : i32
    %c0_i32_1 = arith.constant 0 : i32
    return %c0_i32, %c0_i32_0 : i32, i32
  }
  func.func @transform_10(%arg0: i32, %arg1: i32) -> (i32, i32, i32) {
    %c0_i32 = arith.constant 0 : i32
    %c0_i32_0 = arith.constant 0 : i32
    %c0_i32_1 = arith.constant 0 : i32
    %c0_i32_2 = arith.constant 0 : i32
    return %c0_i32, %c0_i32_0, %c0_i32_1 : i32, i32, i32
  }
  func.func @transform_11(%arg0: i32, %arg1: i32) -> (i32, i32, i32) {
    %c0_i32 = arith.constant 0 : i32
    %c0_i32_0 = arith.constant 0 : i32
    %c0_i32_1 = arith.constant 0 : i32
    %c0_i32_2 = arith.constant 0 : i32
    return %c0_i32, %c0_i32_0, %c0_i32_1 : i32, i32, i32
  }
  func.func @transform_12(%arg0: i32, %arg1: i32) -> (i32, i32) {
    %c0_i32 = arith.constant 0 : i32
    %c0_i32_0 = arith.constant 0 : i32
    %c0_i32_1 = arith.constant 0 : i32
    return %c0_i32, %c0_i32_0 : i32, i32
  }
  func.func @transform_13(%arg0: i32, %arg1: i32) -> (i32, i32, i32) {
    %c0_i32 = arith.constant 0 : i32
    %c0_i32_0 = arith.constant 0 : i32
    %c0_i32_1 = arith.constant 0 : i32
    return %arg0, %c0_i32, %c0_i32_0 : i32, i32, i32
  }
  func.func @transform_14(%arg0: i32, %arg1: i32) -> (i32, i32, i32) {
    %c0_i32 = arith.constant 0 : i32
    %c0_i32_0 = arith.constant 0 : i32
    %c0_i32_1 = arith.constant 0 : i32
    return %arg0, %c0_i32, %c0_i32_0 : i32, i32, i32
  }
}

</mosaic_0001>

<llo_original>
// kernel: _lambda_.1
$region0: #{_lambda_.1}
  #allocation0 [shape = 'u32[]', space=smem, size = 0x4, offset = 0x4, fixed_abs, tag = 'smem constant byte address 0x4 - core index']
  #allocation1 [shape = 'u32[144,128]{1,0:T(1,128)}', space=vmem, size = 0x12000, scoped, tag = 'internal scratch']
  #allocation2 [shape = 'f32[8,32]{1,0:T(8,128)}', space=vmem, size = 0x1000, scoped, tag = 'scratch operand']
  #allocation3 [shape = 'f32[16,32]{1,0:T(8,128)}', space=vmem, size = 0x2000, scoped, tag = 'scratch operand']
  #allocation4 [shape = 'f32[8,32]{1,0:T(8,128)}', space=vmem, size = 0x1000, scoped, tag = 'scratch operand']
  %s0 = inlined_call_operand.vmem [shape: f32[2,8,32], index: 0, kind: input, shape index: {}]
  %s1 = inlined_call_operand.vmem [shape: f32[2,16,32], index: 1, kind: input, shape index: {}]
  %s2 = inlined_call_operand.vmem [shape: f32[2,8,8], index: 2, kind: input, shape index: {}]
  %s3 = inlined_call_operand.vmem [shape: f32[2,32], index: 3, kind: input, shape index: {}]
  %s4 = inlined_call_operand.vmem [shape: bf16[2,32,256], index: 4, kind: input, shape index: {}]
  %s5 = inlined_call_operand.vmem [shape: bf16[2,32,2048], index: 5, kind: input, shape index: {}]
  %s6 = inlined_call_operand.vmem [shape: bf16[2,2048,32], index: 6, kind: input, shape index: {}]
  %s7 = inlined_call_operand.vmem [shape: f32[2,3,32], index: 7, kind: input, shape index: {}]
  %s8 = inlined_call_operand.vmem [shape: bf16[32,64], index: 8, kind: input, shape index: {}]
  %s9 = inlined_call_operand.vmem [shape: f32[1,64], index: 9, kind: input, shape index: {}]
  %s10 = inlined_call_operand.vmem [shape: f32[2,2,32], index: 10, kind: input, shape index: {}]
  %s11 = inlined_call_operand.vmem [shape: bf16[2,32,128], index: 11, kind: input, shape index: {}]
  %s12 = inlined_call_operand.vmem [shape: f32[1,128], index: 12, kind: input, shape index: {}]
  %s13 = inlined_call_operand.hbm [shape: f32[2,8,32], index: 13, kind: output, shape index: {0}]
  %s14 = inlined_call_operand.vmem [shape: f32[2,8,128], index: 14, kind: output, shape index: {1}]
  %15 = xla_tuple %s13, %s14
  %s16 = sld [smem:[#allocation0]]
  $region105: #{_lambda_.1} parent=0
    _
  %s18 = ssub.s32 1, %s16
  %s19 = scalar_select 0, %s18, %s16
  $region1: #{_lambda_.1} parent=0
    #allocation5 [shape = 'u8[8192]{0}', space=vmem, size = 0x2000, scoped, tag = 'output window, operand 0']
    #allocation6 [shape = 's32[2]{0}', space=sflag, size = 0x8, scoped, tag = 'scoped memory for _lambda_.1']
    %20 = vsyncpa [#allocation6], 0
    %s21 = scalar_lea.sflag [#allocation6], 1
    %22 = vsyncpa %s21, 0
    loop: start=0, step=1, limit=8
    $region2: #{_lambda_.1} parent=1 // loop_pre_header
      _
    $region3: #{_lambda_.1} parent=1 // loop_header
      %s24 = sphi 0, %s28
      %p25 = scmp.ge.s32.totalorder %s24, 8
      %s31 = sphi 0, %s43
      %s32 = sphi 0, %s39
      %s33 = sphi 0, %s31
      %s34 = sphi 0, %s32
      %s35 = sphi 0, %s33
      %s36 = sphi 0, %s34
      %s46 = sphi 0, %s48
      %s49 = sphi 0, %s46
      %s50 = sphi 0, %s49
      %s66 = sphi 0, %s50
      %s72 = sphi 0, %s74
      %s75 = sphi 0, %s72
      %s76 = sphi 0, %s75
      %s92 = sphi 0, %s76
      %s98 = sphi 0, %s100
      %s101 = sphi 0, %s98
      %s102 = sphi 0, %s101
      %s118 = sphi 0, %s102
      %s122 = sphi 0, %s122
      %s124 = sphi 0, %s122
      %s125 = sphi 0, %s124
      %s139 = sphi 0, %s125
      %s149 = sphi 0, %s151
      %s152 = sphi 0, %s149
      %s153 = sphi 0, %s152
      %s169 = sphi 0, %s153
      %s179 = sphi 0, %s181
      %s182 = sphi 0, %s179
      %s183 = sphi 0, %s182
      %s199 = sphi 0, %s183
      %s209 = sphi 0, %s211
      %s212 = sphi 0, %s209
      %s213 = sphi 0, %s212
      %s229 = sphi 0, %s213
      %s239 = sphi 0, %s241
      %s242 = sphi 0, %s239
      %s243 = sphi 0, %s242
      %s259 = sphi 0, %s243
      %s263 = sphi 0, %s263
      %s265 = sphi 0, %s263
      %s266 = sphi 0, %s265
      %s280 = sphi 0, %s266
      %s284 = sphi 0, %s284
      %s286 = sphi 0, %s284
      %s287 = sphi 0, %s286
      %s301 = sphi 0, %s287
      %s305 = sphi 0, %s305
      %s307 = sphi 0, %s305
      %s308 = sphi 0, %s307
      %s322 = sphi 0, %s308
      %s326 = sphi 0, %s326
      %s328 = sphi 0, %s326
      %s329 = sphi 0, %s328
      %s343 = sphi 0, %s329
      %s347 = sphi 0, %s347
      %s349 = sphi 0, %s347
      %s350 = sphi 0, %s349
      %s364 = sphi 0, %s350
      %s370 = sphi 0, %s372
      %s373 = sphi 0, %s370
      %s374 = sphi 0, %s373
      %s390 = sphi 0, %s374
      %s396 = sphi 0, %s398
      %s399 = sphi 0, %s396
      %s400 = sphi 0, %s399
      %s416 = sphi 0, %s400
    $region4: #{_lambda_.1} parent=1 // loop_header_branch
      %27 = sbr.rel (%p25) target = $region8
    $region5: #{_lambda_.1} parent=1 // loop_body
      %s29 = ssub.s32 %s24, 1
      %s30 = ssub.s32 %s24, 2
      %s37 = sadd.s32 1, %s32
      %p38 = scmp.ge.s32.totalorder %s37, 3
      %s39 = scalar_select %p38, 0, %s37
      %s40 = sadd.s32 1, %s31
      %s41 = scalar_select %p38, %s40, %s31
      %p42 = scmp.ge.s32.totalorder %s41, 2
      %s43 = scalar_select %p42, 0, %s41
      %s44 = ssub.s32 %s31, %s43
      %p45 = scmp.eq.s32.totalorder %s44, 0
      %s47 = sadd.s32 %s46, 1
      %s48 = scalar_select %p45, %s46, %s47
      %p51 = pneg %p45
      %p52 = scmp.eq.s32.totalorder %s24, 5
      %p53 = por %p51, %p52
      %p54 = scmp.ne.s32.totalorder %s46, %s49
      %p55 = scmp.eq.s32.totalorder %s24, 0
      %p56 = por %p54, %p55
      %p57 = scmp.ne.s32.totalorder %s46, %s49
      %p58 = scmp.eq.s32.totalorder %s29, 5
      %p59 = por %p57, %p58
      %p60 = scmp.ne.s32.totalorder %s49, %s50
      %p61 = scmp.eq.s32.totalorder %s29, 0
      %p62 = por %p60, %p61
      %p63 = scmp.ne.s32.totalorder %s49, %s50
      %p64 = scmp.eq.s32.totalorder %s30, 5
      %p65 = por %p63, %p64
      %p67 = scmp.ne.s32.totalorder %s50, %s66
      %p68 = scmp.eq.s32.totalorder %s30, 0
      %p69 = por %p67, %p68
      %s70 = ssub.s32 %s31, %s43
      %p71 = scmp.eq.s32.totalorder %s70, 0
      %s73 = sadd.s32 %s72, 1
      %s74 = scalar_select %p71, %s72, %s73
      %p77 = pneg %p71
      %p78 = scmp.eq.s32.totalorder %s24, 5
      %p79 = por %p77, %p78
      %p80 = scmp.ne.s32.totalorder %s72, %s75
      %p81 = scmp.eq.s32.totalorder %s24, 0
      %p82 = por %p80, %p81
      %p83 = scmp.ne.s32.totalorder %s72, %s75
      %p84 = scmp.eq.s32.totalorder %s29, 5
      %p85 = por %p83, %p84
      %p86 = scmp.ne.s32.totalorder %s75, %s76
      %p87 = scmp.eq.s32.totalorder %s29, 0
      %p88 = por %p86, %p87
      %p89 = scmp.ne.s32.totalorder %s75, %s76
      %p90 = scmp.eq.s32.totalorder %s30, 5
      %p91 = por %p89, %p90
      %p93 = scmp.ne.s32.totalorder %s76, %s92
      %p94 = scmp.eq.s32.totalorder %s30, 0
      %p95 = por %p93, %p94
      %s96 = ssub.s32 %s31, %s43
      %p97 = scmp.eq.s32.totalorder %s96, 0
      %s99 = sadd.s32 %s98, 1
      %s100 = scalar_select %p97, %s98, %s99
      %p103 = pneg %p97
      %p104 = scmp.eq.s32.totalorder %s24, 5
      %p105 = por %p103, %p104
      %p106 = scmp.ne.s32.totalorder %s98, %s101
      %p107 = scmp.eq.s32.totalorder %s24, 0
      %p108 = por %p106, %p107
      %p109 = scmp.ne.s32.totalorder %s98, %s101
      %p110 = scmp.eq.s32.totalorder %s29, 5
      %p111 = por %p109, %p110
      %p112 = scmp.ne.s32.totalorder %s101, %s102
      %p113 = scmp.eq.s32.totalorder %s29, 0
      %p114 = por %p112, %p113
      %p115 = scmp.ne.s32.totalorder %s101, %s102
      %p116 = scmp.eq.s32.totalorder %s30, 5
      %p117 = por %p115, %p116
      %p119 = scmp.ne.s32.totalorder %s102, %s118
      %p120 = scmp.eq.s32.totalorder %s30, 0
      %p121 = por %p119, %p120
      %s123 = sadd.s32 %s122, 1
      %p126 = scmp.eq.s32.totalorder %s24, 5
      %p127 = scmp.ne.s32.totalorder %s122, %s124
      %p128 = scmp.eq.s32.totalorder %s24, 0
      %p129 = por %p127, %p128
      %p130 = scmp.ne.s32.totalorder %s122, %s124
      %p131 = scmp.eq.s32.totalorder %s29, 5
      %p132 = por %p130, %p131
      %p133 = scmp.ne.s32.totalorder %s124, %s125
      %p134 = scmp.eq.s32.totalorder %s29, 0
      %p135 = por %p133, %p134
      %p136 = scmp.ne.s32.totalorder %s124, %s125
      %p137 = scmp.eq.s32.totalorder %s30, 5
      %p138 = por %p136, %p137
      %p140 = scmp.ne.s32.totalorder %s125, %s139
      %p141 = scmp.eq.s32.totalorder %s30, 0
      %p142 = por %p140, %p141
      %p143 = scmp.lt.s32.totalorder %s32, 1
      %s144 = scalar_select %p143, %s32, 1
      %p145 = scmp.lt.s32.totalorder %s39, 1
      %s146 = scalar_select %p145, %s39, 1
      %s147 = ssub.s32 %s144, %s146
      %p148 = scmp.eq.s32.totalorder %s147, 0
      %s150 = sadd.s32 %s149, 1
      %s151 = scalar_select %p148, %s149, %s150
      %p154 = pneg %p148
      %p155 = scmp.eq.s32.totalorder %s24, 5
      %p156 = por %p154, %p155
      %p157 = scmp.ne.s32.totalorder %s149, %s152
      %p158 = scmp.eq.s32.totalorder %s24, 0
      %p159 = por %p157, %p158
      %p160 = scmp.ne.s32.totalorder %s149, %s152
      %p161 = scmp.eq.s32.totalorder %s29, 5
      %p162 = por %p160, %p161
      %p163 = scmp.ne.s32.totalorder %s152, %s153
      %p164 = scmp.eq.s32.totalorder %s29, 0
      %p165 = por %p163, %p164
      %p166 = scmp.ne.s32.totalorder %s152, %s153
      %p167 = scmp.eq.s32.totalorder %s30, 5
      %p168 = por %p166, %p167
      %p170 = scmp.ne.s32.totalorder %s153, %s169
      %p171 = scmp.eq.s32.totalorder %s30, 0
      %p172 = por %p170, %p171
      %p173 = scmp.lt.s32.totalorder %s32, 1
      %s174 = scalar_select %p173, %s32, 1
      %p175 = scmp.lt.s32.totalorder %s39, 1
      %s176 = scalar_select %p175, %s39, 1
      %s177 = ssub.s32 %s174, %s176
      %p178 = scmp.eq.s32.totalorder %s177, 0
      %s180 = sadd.s32 %s179, 1
      %s181 = scalar_select %p178, %s179, %s180
      %p184 = pneg %p178
      %p185 = scmp.eq.s32.totalorder %s24, 5
      %p186 = por %p184, %p185
      %p187 = scmp.ne.s32.totalorder %s179, %s182
      %p188 = scmp.eq.s32.totalorder %s24, 0
      %p189 = por %p187, %p188
      %p190 = scmp.ne.s32.totalorder %s179, %s182
      %p191 = scmp.eq.s32.totalorder %s29, 5
      %p192 = por %p190, %p191
      %p193 = scmp.ne.s32.totalorder %s182, %s183
      %p194 = scmp.eq.s32.totalorder %s29, 0
      %p195 = por %p193, %p194
      %p196 = scmp.ne.s32.totalorder %s182, %s183
      %p197 = scmp.eq.s32.totalorder %s30, 5
      %p198 = por %p196, %p197
      %p200 = scmp.ne.s32.totalorder %s183, %s199
      %p201 = scmp.eq.s32.totalorder %s30, 0
      %p202 = por %p200, %p201
      %p203 = scmp.lt.s32.totalorder %s32, 1
      %s204 = scalar_select %p203, %s32, 1
      %p205 = scmp.lt.s32.totalorder %s39, 1
      %s206 = scalar_select %p205, %s39, 1
      %s207 = ssub.s32 %s204, %s206
      %p208 = scmp.eq.s32.totalorder %s207, 0
      %s210 = sadd.s32 %s209, 1
      %s211 = scalar_select %p208, %s209, %s210
      %p214 = pneg %p208
      %p215 = scmp.eq.s32.totalorder %s24, 5
      %p216 = por %p214, %p215
      %p217 = scmp.ne.s32.totalorder %s209, %s212
      %p218 = scmp.eq.s32.totalorder %s24, 0
      %p219 = por %p217, %p218
      %p220 = scmp.ne.s32.totalorder %s209, %s212
      %p221 = scmp.eq.s32.totalorder %s29, 5
      %p222 = por %p220, %p221
      %p223 = scmp.ne.s32.totalorder %s212, %s213
      %p224 = scmp.eq.s32.totalorder %s29, 0
      %p225 = por %p223, %p224
      %p226 = scmp.ne.s32.totalorder %s212, %s213
      %p227 = scmp.eq.s32.totalorder %s30, 5
      %p228 = por %p226, %p227
      %p230 = scmp.ne.s32.totalorder %s213, %s229
      %p231 = scmp.eq.s32.totalorder %s30, 0
      %p232 = por %p230, %p231
      %p233 = scmp.lt.s32.totalorder %s32, 1
      %s234 = scalar_select %p233, %s32, 1
      %p235 = scmp.lt.s32.totalorder %s39, 1
      %s236 = scalar_select %p235, %s39, 1
      %s237 = ssub.s32 %s234, %s236
      %p238 = scmp.eq.s32.totalorder %s237, 0
      %s240 = sadd.s32 %s239, 1
      %s241 = scalar_select %p238, %s239, %s240
      %p244 = pneg %p238
      %p245 = scmp.eq.s32.totalorder %s24, 5
      %p246 = por %p244, %p245
      %p247 = scmp.ne.s32.totalorder %s239, %s242
      %p248 = scmp.eq.s32.totalorder %s24, 0
      %p249 = por %p247, %p248
      %p250 = scmp.ne.s32.totalorder %s239, %s242
      %p251 = scmp.eq.s32.totalorder %s29, 5
      %p252 = por %p250, %p251
      %p253 = scmp.ne.s32.totalorder %s242, %s243
      %p254 = scmp.eq.s32.totalorder %s29, 0
      %p255 = por %p253, %p254
      %p256 = scmp.ne.s32.totalorder %s242, %s243
      %p257 = scmp.eq.s32.totalorder %s30, 5
      %p258 = por %p256, %p257
      %p260 = scmp.ne.s32.totalorder %s243, %s259
      %p261 = scmp.eq.s32.totalorder %s30, 0
      %p262 = por %p260, %p261
      %s264 = sadd.s32 %s263, 1
      %p267 = scmp.eq.s32.totalorder %s24, 5
      %p268 = scmp.ne.s32.totalorder %s263, %s265
      %p269 = scmp.eq.s32.totalorder %s24, 0
      %p270 = por %p268, %p269
      %p271 = scmp.ne.s32.totalorder %s263, %s265
      %p272 = scmp.eq.s32.totalorder %s29, 5
      %p273 = por %p271, %p272
      %p274 = scmp.ne.s32.totalorder %s265, %s266
      %p275 = scmp.eq.s32.totalorder %s29, 0
      %p276 = por %p274, %p275
      %p277 = scmp.ne.s32.totalorder %s265, %s266
      %p278 = scmp.eq.s32.totalorder %s30, 5
      %p279 = por %p277, %p278
      %p281 = scmp.ne.s32.totalorder %s266, %s280
      %p282 = scmp.eq.s32.totalorder %s30, 0
      %p283 = por %p281, %p282
      %s285 = sadd.s32 %s284, 1
      %p288 = scmp.eq.s32.totalorder %s24, 5
      %p289 = scmp.ne.s32.totalorder %s284, %s286
      %p290 = scmp.eq.s32.totalorder %s24, 0
      %p291 = por %p289, %p290
      %p292 = scmp.ne.s32.totalorder %s284, %s286
      %p293 = scmp.eq.s32.totalorder %s29, 5
      %p294 = por %p292, %p293
      %p295 = scmp.ne.s32.totalorder %s286, %s287
      %p296 = scmp.eq.s32.totalorder %s29, 0
      %p297 = por %p295, %p296
      %p298 = scmp.ne.s32.totalorder %s286, %s287
      %p299 = scmp.eq.s32.totalorder %s30, 5
      %p300 = por %p298, %p299
      %p302 = scmp.ne.s32.totalorder %s287, %s301
      %p303 = scmp.eq.s32.totalorder %s30, 0
      %p304 = por %p302, %p303
      %s306 = sadd.s32 %s305, 1
      %p309 = scmp.eq.s32.totalorder %s24, 5
      %p310 = scmp.ne.s32.totalorder %s305, %s307
      %p311 = scmp.eq.s32.totalorder %s24, 0
      %p312 = por %p310, %p311
      %p313 = scmp.ne.s32.totalorder %s305, %s307
      %p314 = scmp.eq.s32.totalorder %s29, 5
      %p315 = por %p313, %p314
      %p316 = scmp.ne.s32.totalorder %s307, %s308
      %p317 = scmp.eq.s32.totalorder %s29, 0
      %p318 = por %p316, %p317
      %p319 = scmp.ne.s32.totalorder %s307, %s308
      %p320 = scmp.eq.s32.totalorder %s30, 5
      %p321 = por %p319, %p320
      %p323 = scmp.ne.s32.totalorder %s308, %s322
      %p324 = scmp.eq.s32.totalorder %s30, 0
      %p325 = por %p323, %p324
      %s327 = sadd.s32 %s326, 1
      %p330 = scmp.eq.s32.totalorder %s24, 5
      %p331 = scmp.ne.s32.totalorder %s326, %s328
      %p332 = scmp.eq.s32.totalorder %s24, 0
      %p333 = por %p331, %p332
      %p334 = scmp.ne.s32.totalorder %s326, %s328
      %p335 = scmp.eq.s32.totalorder %s29, 5
      %p336 = por %p334, %p335
      %p337 = scmp.ne.s32.totalorder %s328, %s329
      %p338 = scmp.eq.s32.totalorder %s29, 0
      %p339 = por %p337, %p338
      %p340 = scmp.ne.s32.totalorder %s328, %s329
      %p341 = scmp.eq.s32.totalorder %s30, 5
      %p342 = por %p340, %p341
      %p344 = scmp.ne.s32.totalorder %s329, %s343
      %p345 = scmp.eq.s32.totalorder %s30, 0
      %p346 = por %p344, %p345
      %s348 = sadd.s32 %s347, 1
      %p351 = scmp.eq.s32.totalorder %s24, 5
      %p352 = scmp.ne.s32.totalorder %s347, %s349
      %p353 = scmp.eq.s32.totalorder %s24, 0
      %p354 = por %p352, %p353
      %p355 = scmp.ne.s32.totalorder %s347, %s349
      %p356 = scmp.eq.s32.totalorder %s29, 5
      %p357 = por %p355, %p356
      %p358 = scmp.ne.s32.totalorder %s349, %s350
      %p359 = scmp.eq.s32.totalorder %s29, 0
      %p360 = por %p358, %p359
      %p361 = scmp.ne.s32.totalorder %s349, %s350
      %p362 = scmp.eq.s32.totalorder %s30, 5
      %p363 = por %p361, %p362
      %p365 = scmp.ne.s32.totalorder %s350, %s364
      %p366 = scmp.eq.s32.totalorder %s30, 0
      %p367 = por %p365, %p366
      %s368 = ssub.s32 %s31, %s43
      %p369 = scmp.eq.s32.totalorder %s368, 0
      %s371 = sadd.s32 %s370, 1
      %s372 = scalar_select %p369, %s370, %s371
      %p375 = pneg %p369
      %p376 = scmp.eq.s32.totalorder %s24, 5
      %p377 = por %p375, %p376
      %p378 = scmp.ne.s32.totalorder %s370, %s373
      %p379 = scmp.eq.s32.totalorder %s24, 0
      %p380 = por %p378, %p379
      %p381 = scmp.ne.s32.totalorder %s370, %s373
      %p382 = scmp.eq.s32.totalorder %s29, 5
      %p383 = por %p381, %p382
      %p384 = scmp.ne.s32.totalorder %s373, %s374
      %p385 = scmp.eq.s32.totalorder %s29, 0
      %p386 = por %p384, %p385
      %p387 = scmp.ne.s32.totalorder %s373, %s374
      %p388 = scmp.eq.s32.totalorder %s30, 5
      %p389 = por %p387, %p388
      %p391 = scmp.ne.s32.totalorder %s374, %s390
      %p392 = scmp.eq.s32.totalorder %s30, 0
      %p393 = por %p391, %p392
      %s394 = ssub.s32 %s31, %s43
      %p395 = scmp.eq.s32.totalorder %s394, 0
      %s397 = sadd.s32 %s396, 1
      %s398 = scalar_select %p395, %s396, %s397
      %p401 = pneg %p395
      %p402 = scmp.eq.s32.totalorder %s24, 5
      %p403 = por %p401, %p402
      %p404 = scmp.ne.s32.totalorder %s396, %s399
      %p405 = scmp.eq.s32.totalorder %s24, 0
      %p406 = por %p404, %p405
      %p407 = scmp.ne.s32.totalorder %s396, %s399
      %p408 = scmp.eq.s32.totalorder %s29, 5
      %p409 = por %p407, %p408
      %p410 = scmp.ne.s32.totalorder %s399, %s400
      %p411 = scmp.eq.s32.totalorder %s29, 0
      %p412 = por %p410, %p411
      %p413 = scmp.ne.s32.totalorder %s399, %s400
      %p414 = scmp.eq.s32.totalorder %s30, 5
      %p415 = por %p413, %p414
      %p417 = scmp.ne.s32.totalorder %s400, %s416
      %p418 = scmp.eq.s32.totalorder %s30, 0
      %p419 = por %p417, %p418
      %p420 = scmp.le.s32.totalorder 1, %s24
      %p421 = scmp.lt.s32.totalorder %s24, 7
      %p422 = pnand %p420, %p421
      %p423 = pneg %p422
      // Predicated region
      $region9: #{_lambda_.1} parent=5 // pred_check
        _
      $region10: #{_lambda_.1} parent=5 // pred_check_branch
        %425 = sbr.rel (%p422) target = $region12
      $region11: #{_lambda_.1} parent=5 // pred_region
        %s426 = ssub.s32 %s24, 1
        // Predicated region
        $region13: #{_lambda_.1} parent=11 // pred_check
          %p427 = pneg %p135
        $region14: #{_lambda_.1} parent=11 // pred_check_branch
          %429 = sbr.rel (%p427) target = $region16
        $region15: #{_lambda_.1} parent=11 // pred_region
          _
        $region16: #{_lambda_.1} parent=11 // pred_fallthru
          _
        // Predicated region
        $region17: #{_lambda_.1} parent=11 // pred_check
          %p430 = pneg %p276
        $region18: #{_lambda_.1} parent=11 // pred_check_branch
          %432 = sbr.rel (%p430) target = $region20
        $region19: #{_lambda_.1} parent=11 // pred_region
          _
        $region20: #{_lambda_.1} parent=11 // pred_fallthru
          _
        // Predicated region
        $region21: #{_lambda_.1} parent=11 // pred_check
          %p433 = pneg %p297
        $region22: #{_lambda_.1} parent=11 // pred_check_branch
          %435 = sbr.rel (%p433) target = $region24
        $region23: #{_lambda_.1} parent=11 // pred_region
          _
        $region24: #{_lambda_.1} parent=11 // pred_fallthru
          _
        // Predicated region
        $region25: #{_lambda_.1} parent=11 // pred_check
          %p436 = pneg %p318
        $region26: #{_lambda_.1} parent=11 // pred_check_branch
          %438 = sbr.rel (%p436) target = $region28
        $region27: #{_lambda_.1} parent=11 // pred_region
          _
        $region28: #{_lambda_.1} parent=11 // pred_fallthru
          _
        // Predicated region
        $region29: #{_lambda_.1} parent=11 // pred_check
          %p439 = pneg %p339
        $region30: #{_lambda_.1} parent=11 // pred_check_branch
          %441 = sbr.rel (%p439) target = $region32
        $region31: #{_lambda_.1} parent=11 // pred_region
          _
        $region32: #{_lambda_.1} parent=11 // pred_fallthru
          _
        // Predicated region
        $region33: #{_lambda_.1} parent=11 // pred_check
          %p442 = pneg %p360
        $region34: #{_lambda_.1} parent=11 // pred_check_branch
          %444 = sbr.rel (%p442) target = $region36
        $region35: #{_lambda_.1} parent=11 // pred_region
          _
        $region36: #{_lambda_.1} parent=11 // pred_fallthru
          _
      $region12: #{_lambda_.1} parent=5 // pred_fallthru
        _
      %p445 = scmp.lt.s32.totalorder %s24, 6
      // Predicated region
      $region37: #{_lambda_.1} parent=5 // pred_check
        %p446 = pneg %p445
      $region38: #{_lambda_.1} parent=5 // pred_check_branch
        %448 = sbr.rel (%p446) target = $region40
      $region39: #{_lambda_.1} parent=5 // pred_region
        // Predicated region
        $region41: #{_lambda_.1} parent=39 // pred_check
          %p449 = pneg %p56
        $region42: #{_lambda_.1} parent=39 // pred_check_branch
          %451 = sbr.rel (%p449) target = $region44
        $region43: #{_lambda_.1} parent=39 // pred_region
          %p452 = scmp.lt.s32.totalorder %s31, 1
          %s453 = scalar_select %p452, %s31, 1
          %s454 = smul.addr %s453, 8
          %s455 = scalar_lea.vmem %s0, %s454
        $region44: #{_lambda_.1} parent=39 // pred_fallthru
          _
        // Predicated region
        $region45: #{_lambda_.1} parent=39 // pred_check
          %p456 = pneg %p82
        $region46: #{_lambda_.1} parent=39 // pred_check_branch
          %458 = sbr.rel (%p456) target = $region48
        $region47: #{_lambda_.1} parent=39 // pred_region
          %p459 = scmp.lt.s32.totalorder %s31, 1
          %s460 = scalar_select %p459, %s31, 1
          %s461 = smul.addr %s460, 2
          %s462 = smul.addr %s461, 8
          %s463 = scalar_lea.vmem %s1, %s462
        $region48: #{_lambda_.1} parent=39 // pred_fallthru
          _
        // Predicated region
        $region49: #{_lambda_.1} parent=39 // pred_check
          %p464 = pneg %p108
        $region50: #{_lambda_.1} parent=39 // pred_check_branch
          %466 = sbr.rel (%p464) target = $region52
        $region51: #{_lambda_.1} parent=39 // pred_region
          %p467 = scmp.lt.s32.totalorder %s31, 1
          %s468 = scalar_select %p467, %s31, 1
          %s469 = smul.addr %s468, 8
          %s470 = scalar_lea.vmem %s2, %s469
        $region52: #{_lambda_.1} parent=39 // pred_fallthru
          _
        // Predicated region
        $region53: #{_lambda_.1} parent=39 // pred_check
          %p471 = pneg %p159
        $region54: #{_lambda_.1} parent=39 // pred_check_branch
          %473 = sbr.rel (%p471) target = $region56
        $region55: #{_lambda_.1} parent=39 // pred_region
          %p474 = scmp.lt.s32.totalorder %s32, 1
          %s475 = scalar_select %p474, %s32, 1
          %p476 = scmp.lt.s32.totalorder %s475, 1
          %s477 = scalar_select %p476, %s475, 1
          %s478 = smul.addr %s477, 8
          %s479 = smul.addr %s478, 4
          %s480 = scalar_lea.vmem %s4, %s479
          %p481 = scmp.lt.s32.totalorder %s32, 1
          %s482 = scalar_select %p481, %s32, 1
        $region56: #{_lambda_.1} parent=39 // pred_fallthru
          _
        // Predicated region
        $region57: #{_lambda_.1} parent=39 // pred_check
          %p483 = pneg %p189
        $region58: #{_lambda_.1} parent=39 // pred_check_branch
          %485 = sbr.rel (%p483) target = $region60
        $region59: #{_lambda_.1} parent=39 // pred_region
          %p486 = scmp.lt.s32.totalorder %s32, 1
          %s487 = scalar_select %p486, %s32, 1
          %p488 = scmp.lt.s32.totalorder %s487, 1
          %s489 = scalar_select %p488, %s487, 1
          %s490 = smul.addr %s489, 64
          %s491 = smul.addr %s490, 4
          %s492 = scalar_lea.vmem %s5, %s491
          %p493 = scmp.lt.s32.totalorder %s32, 1
          %s494 = scalar_select %p493, %s32, 1
        $region60: #{_lambda_.1} parent=39 // pred_fallthru
          _
        // Predicated region
        $region61: #{_lambda_.1} parent=39 // pred_check
          %p495 = pneg %p219
        $region62: #{_lambda_.1} parent=39 // pred_check_branch
          %497 = sbr.rel (%p495) target = $region64
        $region63: #{_lambda_.1} parent=39 // pred_region
          %p498 = scmp.lt.s32.totalorder %s32, 1
          %s499 = scalar_select %p498, %s32, 1
          %p500 = scmp.lt.s32.totalorder %s499, 1
          %s501 = scalar_select %p500, %s499, 1
          %s502 = smul.addr %s501, 256
          %s503 = smul.addr %s502, 4
          %s504 = scalar_lea.vmem %s6, %s503
          %p505 = scmp.lt.s32.totalorder %s32, 1
          %s506 = scalar_select %p505, %s32, 1
        $region64: #{_lambda_.1} parent=39 // pred_fallthru
          _
        // Predicated region
        $region65: #{_lambda_.1} parent=39 // pred_check
          %p507 = pneg %p249
        $region66: #{_lambda_.1} parent=39 // pred_check_branch
          %509 = sbr.rel (%p507) target = $region68
        $region67: #{_lambda_.1} parent=39 // pred_region
          %p510 = scmp.lt.s32.totalorder %s32, 1
          %s511 = scalar_select %p510, %s32, 1
          %p512 = scmp.lt.s32.totalorder %s511, 1
          %s513 = scalar_select %p512, %s511, 1
          %s514 = smul.addr %s513, 4
          %s515 = scalar_lea.vmem %s7, %s514
          %p516 = scmp.lt.s32.totalorder %s32, 1
          %s517 = scalar_select %p516, %s32, 1
        $region68: #{_lambda_.1} parent=39 // pred_fallthru
          _
      $region40: #{_lambda_.1} parent=5 // pred_fallthru
        _
      %p518 = scmp.le.s32.totalorder 1, %s24
      %p519 = scmp.lt.s32.totalorder %s24, 7
      %p520 = pnand %p518, %p519
      %p521 = pneg %p520
      // Predicated region
      $region69: #{_lambda_.1} parent=5 // pred_check
        _
      $region70: #{_lambda_.1} parent=5 // pred_check_branch
        %523 = sbr.rel (%p520) target = $region72
      $region71: #{_lambda_.1} parent=5 // pred_region
        %s524 = ssub.s32 %s24, 1
        %p525 = scmp.lt.s32.totalorder %s33, 1
        %s526 = scalar_select %p525, %s33, 1
        %s527 = smul.addr %s526, 8
        %s528 = scalar_lea.vmem %s0, %s527
        %p529 = pneg %p62
        %p530 = pneg %p59
        %p531 = scmp.lt.s32.totalorder %s33, 1
        %s532 = scalar_select %p531, %s33, 1
        %s533 = smul.addr %s532, 2
        %s534 = smul.addr %s533, 8
        %s535 = scalar_lea.vmem %s1, %s534
        %p536 = pneg %p88
        %p537 = pneg %p85
        %p538 = scmp.lt.s32.totalorder %s33, 1
        %s539 = scalar_select %p538, %s33, 1
        %s540 = smul.addr %s539, 8
        %s541 = scalar_lea.vmem %s2, %s540
        %p542 = pneg %p114
        %p543 = pneg %p111
        %p544 = pneg %p135
        %p545 = pneg %p132
        %p546 = scmp.lt.s32.totalorder %s34, 1
        %s547 = scalar_select %p546, %s34, 1
        %p548 = scmp.lt.s32.totalorder %s547, 1
        %s549 = scalar_select %p548, %s547, 1
        %s550 = smul.addr %s549, 8
        %s551 = smul.addr %s550, 4
        %s552 = scalar_lea.vmem %s4, %s551
        %p553 = pneg %p165
        %p554 = pneg %p162
        %p555 = scmp.lt.s32.totalorder %s34, 1
        %s556 = scalar_select %p555, %s34, 1
        %p557 = scmp.lt.s32.totalorder %s556, 1
        %s558 = scalar_select %p557, %s556, 1
        %s559 = smul.addr %s558, 64
        %s560 = smul.addr %s559, 4
        %s561 = scalar_lea.vmem %s5, %s560
        %p562 = pneg %p195
        %p563 = pneg %p192
        %p564 = scmp.lt.s32.totalorder %s34, 1
        %s565 = scalar_select %p564, %s34, 1
        %p566 = scmp.lt.s32.totalorder %s565, 1
        %s567 = scalar_select %p566, %s565, 1
        %s568 = smul.addr %s567, 256
        %s569 = smul.addr %s568, 4
        %s570 = scalar_lea.vmem %s6, %s569
        %p571 = pneg %p225
        %p572 = pneg %p222
        %p573 = scmp.lt.s32.totalorder %s34, 1
        %s574 = scalar_select %p573, %s34, 1
        %p575 = scmp.lt.s32.totalorder %s574, 1
        %s576 = scalar_select %p575, %s574, 1
        %s577 = smul.addr %s576, 4
        %s578 = scalar_lea.vmem %s7, %s577
        %p579 = pneg %p255
        %p580 = pneg %p252
        %p581 = pneg %p276
        %p582 = pneg %p273
        %p583 = pneg %p297
        %p584 = pneg %p294
        %p585 = pneg %p318
        %p586 = pneg %p315
        %p587 = pneg %p339
        %p588 = pneg %p336
        %p589 = pneg %p360
        %p590 = pneg %p357
        %p591 = pneg %p386
        %p592 = pneg %p383
        %s593 = sand.u32 %s373, 1
        %s594 = scalar_lea.sflag [#allocation6], %s593
        %s595 = sand.u32 %s373, 1
        %s596 = smul.addr %s595, 8
        %s597 = scalar_lea.vmem [#allocation5], %s596
        %p598 = pneg %p412
        %p599 = pneg %p409
        %p600 = scmp.lt.s32.totalorder %s33, 1
        %s601 = scalar_select %p600, %s33, 1
        %s602 = smul.addr %s601, 8
        %s603 = scalar_lea.vmem %s14, %s602
        %p604 = scmp.lt.s32.totalorder %s33, 1
        %s605 = scalar_select %p604, %s33, 1
        %s606 = smul.addr %s605, 8
        %s607 = scalar_lea.vmem %s0, %s606
        %p608 = scmp.lt.s32.totalorder %s33, 1
        %s609 = scalar_select %p608, %s33, 1
        %s610 = smul.addr %s609, 2
        %s611 = smul.addr %s610, 8
        %s612 = scalar_lea.vmem %s1, %s611
        %p613 = scmp.lt.s32.totalorder %s33, 1
        %s614 = scalar_select %p613, %s33, 1
        %s615 = smul.addr %s614, 8
        %s616 = scalar_lea.vmem %s2, %s615
        %p617 = scmp.lt.s32.totalorder %s34, 1
        %s618 = scalar_select %p617, %s34, 1
        %p619 = scmp.lt.s32.totalorder %s618, 1
        %s620 = scalar_select %p619, %s618, 1
        %s621 = smul.addr %s620, 8
        %s622 = smul.addr %s621, 4
        %s623 = scalar_lea.vmem %s4, %s622
        %p624 = scmp.lt.s32.totalorder %s34, 1
        %s625 = scalar_select %p624, %s34, 1
        %p626 = scmp.lt.s32.totalorder %s34, 1
        %s627 = scalar_select %p626, %s34, 1
        %p628 = scmp.lt.s32.totalorder %s627, 1
        %s629 = scalar_select %p628, %s627, 1
        %s630 = smul.addr %s629, 64
        %s631 = smul.addr %s630, 4
        %s632 = scalar_lea.vmem %s5, %s631
        %p633 = scmp.lt.s32.totalorder %s34, 1
        %s634 = scalar_select %p633, %s34, 1
        %p635 = scmp.lt.s32.totalorder %s34, 1
        %s636 = scalar_select %p635, %s34, 1
        %p637 = scmp.lt.s32.totalorder %s636, 1
        %s638 = scalar_select %p637, %s636, 1
        %s639 = smul.addr %s638, 256
        %s640 = smul.addr %s639, 4
        %s641 = scalar_lea.vmem %s6, %s640
        %p642 = scmp.lt.s32.totalorder %s34, 1
        %s643 = scalar_select %p642, %s34, 1
        %p644 = scmp.lt.s32.totalorder %s34, 1
        %s645 = scalar_select %p644, %s34, 1
        %p646 = scmp.lt.s32.totalorder %s645, 1
        %s647 = scalar_select %p646, %s645, 1
        %s648 = smul.addr %s647, 4
        %s649 = scalar_lea.vmem %s7, %s648
        %p650 = scmp.lt.s32.totalorder %s34, 1
        %s651 = scalar_select %p650, %s34, 1
        %p652 = scmp.lt.s32.totalorder %s33, 1
        %s653 = scalar_select %p652, %s33, 1
        %s654 = smul.addr %s653, 8
        %s655 = scalar_lea.vmem %s14, %s654
        %p657 = scmp.eq.s32.totalorder %s34, 0
        // Predicated region
        $region73: #{_lambda_.1} parent=71 // pred_check
          %p658 = pneg %p657
        $region74: #{_lambda_.1} parent=71 // pred_check_branch
          %660 = sbr.rel (%p658) target = $region76
        $region75: #{_lambda_.1} parent=71 // pred_region
          %v661 = vld [vmem:[%s3] sm:$0x3]
          %v662 = vld [vmem:[%s607] sm:$0xff]
          %vm663 = vcmask 261120
          %v664 = vsel %vm663, %v662, 0.0
          %665 = vadd.xlane.f32.xlu0 %v664
          %v666 = vpop.xlane.xlu0 %665
          %v667 = vrcp.pop 32.0
          %v668 = vmul.f32 %v666, %v667
          %v669 = vsub.f32 %v662, %v668
          %v670 = vmul.f32 %v669, %v669
          %v671 = vsel %vm663, %v670, 0.0
          %672 = vadd.xlane.f32.xlu0 %v671
          %v673 = vpop.xlane.xlu0 %672
          %v674 = vmul.f32 %v673, %v667
          %v675 = vadd.f32 %v674, 1e-05
          %v676 = vrsqrt.pop %v675
          %v677 = vmul.f32 %v669, %v676
          %v678 = vlaneseq
          %v679 = vshrl.u32 %v678, 7
          %v680 = vsub.s32 0, %v679
          %v681 = vrot.slane %v661, %v680
          %v682 = vmul.f32 %v677, %v681
          %v683 = vlaneseq
          %v684 = vshrl.u32 %v683, 7
          %v685 = vsub.s32 1, %v684
          %v686 = vrot.slane %v661, %v685
          %v687 = vadd.f32 %v682, %v686
          %688 = vst.msk [vmem:[#allocation2] sm:$0xff] %vm663, %v687
          %v689 = vld [vmem:[%s612] sm:$0xff]
          %v690 = vld [vmem:[%s612 + $0x8] sm:$0xff]
          %v691 = vsel %vm663, %v689, 0.0
          %692 = vadd.xlane.f32.xlu0 %v691
          %v693 = vpop.xlane.xlu0 %692
          %v694 = vsel %vm663, %v690, 0.0
          %695 = vadd.xlane.f32.xlu0 %v694
          %v696 = vpop.xlane.xlu0 %695
          %v697 = vmul.f32 %v693, %v667
          %v698 = vmul.f32 %v696, %v667
          %v699 = vsub.f32 %v689, %v697
          %v700 = vsub.f32 %v690, %v698
          %v701 = vmul.f32 %v699, %v699
          %v702 = vmul.f32 %v700, %v700
          %v703 = vsel %vm663, %v701, 0.0
          %704 = vadd.xlane.f32.xlu0 %v703
          %v705 = vpop.xlane.xlu0 %704
          %v706 = vsel %vm663, %v702, 0.0
          %707 = vadd.xlane.f32.xlu0 %v706
          %v708 = vpop.xlane.xlu0 %707
          %v709 = vmul.f32 %v705, %v667
          %v710 = vmul.f32 %v708, %v667
          %v711 = vadd.f32 %v709, 1e-05
          %v712 = vadd.f32 %v710, 1e-05
          %v713 = vrsqrt.pop %v711
          %v714 = vrsqrt.pop %v712
          %v715 = vmul.f32 %v699, %v713
          %v716 = vmul.f32 %v700, %v714
          %v717 = vmul.f32 %v715, %v681
          %v718 = vmul.f32 %v716, %v681
          %v719 = vadd.f32 %v717, %v686
          %v720 = vadd.f32 %v718, %v686
          %721 = vst.msk [vmem:[#allocation3] sm:$0xff] %vm663, %v719
          %722 = vst.msk [vmem:[#allocation3 + $0x8] sm:$0xff] %vm663, %v720
        $region76: #{_lambda_.1} parent=71 // pred_fallthru
          _
        %p723 = scmp.lt.s32.totalorder %s34, 2
        // Predicated region
        $region77: #{_lambda_.1} parent=71 // pred_check
          %p724 = pneg %p723
        $region78: #{_lambda_.1} parent=71 // pred_check_branch
          %726 = sbr.rel (%p724) target = $region80
        $region79: #{_lambda_.1} parent=71 // pred_region
          %v727 = vld [vmem:[#allocation2] sm:$0xff]
          %v728 = vld [vmem:[#allocation3] sm:$0xff]
          %v729 = vld [vmem:[#allocation3 + $0x8] sm:$0xff]
          %v730 = vld [vmem:[%s623] sm:$0xff]
          %v731 = vld [vmem:[%s623 + $0x8] sm:$0xff]
          %v732 = vld [vmem:[%s623 + $0x10] sm:$0xff]
          %v733 = vld [vmem:[%s623 + $0x18] sm:$0xff]
          %v734 = vld [vmem:[%s649] sm:$0x7]
          %v735 = vpack.c.bf16 %v727, %v727
          %v740 = vunpack.c.l.b16 %v730
          %v741 = vunpack.c.l.b16 %v731
          %v742 = vunpack.c.l.b16 %v732
          %v743 = vunpack.c.l.b16 %v733
          %v744 = vpack.c.b16 %v741, %v740
          %v745 = vpack.c.b16 %v743, %v742
          %vm748 = vcmask 261120
          %v750 = vsel %vm748, %v735, 0
          %752 = vmatprep.subr.bf16.mxu0 0
          %753 = vmatpush1.bf16.msra.mxu0 %v744
          %754 = vmatprep.subr.bf16.mxu0 0
          %755 = vmatpush1.bf16.msra.mxu0 %v745
          %756 = vmatprep.subr.bf16.mxu0 0
          %757 = vmatpush1.bf16.msra.mxu0 0
          %758 = vmatprep.subr.bf16.mxu0 0
          %759 = vmatpush1.bf16.msra.mxu0 0
          %760 = vmatprep.subr.bf16.mxu0 0
          %761 = vmatpush1.bf16.msra.mxu0 0
          %762 = vmatprep.subr.bf16.mxu0 0
          %763 = vmatpush1.bf16.msra.mxu0 0
          %764 = vmatprep.subr.bf16.mxu0 0
          %765 = vmatpush1.bf16.msra.mxu0 0
          %766 = vmatprep.subr.bf16.mxu0 0
          %767 = vmatpush1.bf16.msra.mxu0 0
          %768 = vmatprep.subr.bf16.mxu0 0
          %769 = vmatpush1.bf16.msra.mxu0 0
          %770 = vmatprep.subr.bf16.mxu0 0
          %771 = vmatpush1.bf16.msra.mxu0 0
          %772 = vmatprep.subr.bf16.mxu0 0
          %773 = vmatpush1.bf16.msra.mxu0 0
          %774 = vmatprep.subr.bf16.mxu0 0
          %775 = vmatpush1.bf16.msra.mxu0 0
          %776 = vmatprep.subr.bf16.mxu0 0
          %777 = vmatpush1.bf16.msra.mxu0 0
          %778 = vmatprep.subr.bf16.mxu0 0
          %779 = vmatpush1.bf16.msra.mxu0 0
          %780 = vmatprep.subr.bf16.mxu0 0
          %781 = vmatpush1.bf16.msra.mxu0 0
          %782 = vmatprep.subr.bf16.mxu0 0
          %783 = vmatpush1.bf16.msra.mxu0 0
          %784 = vmatprep.mubr.bf16.mxu0 0
          %785 = vmatmul.mubr.bf16.gmra.mrb[0].mxu0 %v750
          %v786 = vpop.f32.mrb[0].mxu0
          %v787 = vadd.f32 0.0, %v786
          %v788 = vpop.f32.mrb[0].mxu0
          %v789 = vpop.f32.mrb[0].mxu0
          %v790 = vpop.f32.mrb[0].mxu0
          %791 = vdwg.mxu0
          %v792 = vld [vmem:[%s616] sm:$0xff]
          %v793 = vpack.c.bf16 %v787, %v787
          %795 = vrot.lane.b32.xlu0 %v793, 96
          %v796 = vpop.permute.xlu0 %795
          %vm797 = vcmask 64512
          %v799 = vsel %vm797, %v793, 0
          %v802 = vsel %vm797, %v796, 0
          %804 = vmatprep.subr.bf16.mxu0 0
          %805 = vmatpush1.bf16.xpose.msra.mxu0 %v802
          %806 = vmatprep.subr.bf16.mxu0 0
          %807 = vmatpush1.bf16.xpose.msra.mxu0 0
          %808 = vmatprep.subr.bf16.mxu0 0
          %809 = vmatpush1.bf16.xpose.msra.mxu0 0
          %810 = vmatprep.subr.bf16.mxu0 0
          %811 = vmatpush1.bf16.xpose.msra.mxu0 0
          %812 = vmatprep.subr.bf16.mxu0 0
          %813 = vmatpush1.bf16.xpose.msra.mxu0 0
          %814 = vmatprep.subr.bf16.mxu0 0
          %815 = vmatpush1.bf16.xpose.msra.mxu0 0
          %816 = vmatprep.subr.bf16.mxu0 0
          %817 = vmatpush1.bf16.xpose.msra.mxu0 0
          %818 = vmatprep.subr.bf16.mxu0 0
          %819 = vmatpush1.bf16.xpose.msra.mxu0 0
          %820 = vmatprep.subr.bf16.mxu0 0
          %821 = vmatpush1.bf16.xpose.msra.mxu0 0
          %822 = vmatprep.subr.bf16.mxu0 0
          %823 = vmatpush1.bf16.xpose.msra.mxu0 0
          %824 = vmatprep.subr.bf16.mxu0 0
          %825 = vmatpush1.bf16.xpose.msra.mxu0 0
          %826 = vmatprep.subr.bf16.mxu0 0
          %827 = vmatpush1.bf16.xpose.msra.mxu0 0
          %828 = vmatprep.subr.bf16.mxu0 0
          %829 = vmatpush1.bf16.xpose.msra.mxu0 0
          %830 = vmatprep.subr.bf16.mxu0 0
          %831 = vmatpush1.bf16.xpose.msra.mxu0 0
          %832 = vmatprep.subr.bf16.mxu0 0
          %833 = vmatpush1.bf16.xpose.msra.mxu0 0
          %834 = vmatprep.subr.bf16.mxu0 0
          %835 = vmatpush1.bf16.xpose.msra.mxu0 0
          %836 = vmatprep.mubr.bf16.mxu0 0
          %837 = vmatmul.mubr.bf16.gmra.mrb[0].mxu0 %v799
          %v838 = vpop.f32.mrb[0].mxu0
          %v839 = vadd.f32 0.0, %v838
          %v840 = vpop.f32.mrb[0].mxu0
          %v841 = vpop.f32.mrb[0].mxu0
          %v842 = vpop.f32.mrb[0].mxu0
          %843 = vdwg.mxu0
          %v844 = vmul.f32 %v839, 0.35355338
          %v845 = vadd.f32 %v844, %v792
          %v846 = vsel %vm797, %v845, -inf
          %847 = vmax.xlane.f32.xlu0 %v846
          %v848 = vpop.xlane.xlu0 %847
          %v849 = vsub.f32 %v845, %v848
          %v850 = vmul.f32 %v849, 1.442695
          %v851 = vpow.pop %v850
          %v852 = vsel %vm797, %v851, 0.0
          %853 = vadd.xlane.f32.xlu0 %v852
          %v854 = vpop.xlane.xlu0 %853
          %v855 = vrcp.pop %v854
          %v856 = vmul.f32 %v851, %v855
          %v857 = vpack.c.bf16 %v856, %v856
          %858 = vrot.lane.b32.xlu0 %v793, 64
          %v859 = vpop.permute.xlu0 %858
          %v861 = vsel %vm797, %v857, 0
          %vm863 = vcmask 1043456
          %v865 = vsel %vm863, %v859, 0
          %867 = vmatprep.subr.bf16.mxu0 0
          %868 = vmatpush1.bf16.msra.mxu0 %v865
          %869 = vmatprep.subr.bf16.mxu0 0
          %870 = vmatpush1.bf16.msra.mxu0 0
          %871 = vmatprep.subr.bf16.mxu0 0
          %872 = vmatpush1.bf16.msra.mxu0 0
          %873 = vmatprep.subr.bf16.mxu0 0
          %874 = vmatpush1.bf16.msra.mxu0 0
          %875 = vmatprep.subr.bf16.mxu0 0
          %876 = vmatpush1.bf16.msra.mxu0 0
          %877 = vmatprep.subr.bf16.mxu0 0
          %878 = vmatpush1.bf16.msra.mxu0 0
          %879 = vmatprep.subr.bf16.mxu0 0
          %880 = vmatpush1.bf16.msra.mxu0 0
          %881 = vmatprep.subr.bf16.mxu0 0
          %882 = vmatpush1.bf16.msra.mxu0 0
          %883 = vmatprep.subr.bf16.mxu0 0
          %884 = vmatpush1.bf16.msra.mxu0 0
          %885 = vmatprep.subr.bf16.mxu0 0
          %886 = vmatpush1.bf16.msra.mxu0 0
          %887 = vmatprep.subr.bf16.mxu0 0
          %888 = vmatpush1.bf16.msra.mxu0 0
          %889 = vmatprep.subr.bf16.mxu0 0
          %890 = vmatpush1.bf16.msra.mxu0 0
          %891 = vmatprep.subr.bf16.mxu0 0
          %892 = vmatpush1.bf16.msra.mxu0 0
          %893 = vmatprep.subr.bf16.mxu0 0
          %894 = vmatpush1.bf16.msra.mxu0 0
          %895 = vmatprep.subr.bf16.mxu0 0
          %896 = vmatpush1.bf16.msra.mxu0 0
          %897 = vmatprep.subr.bf16.mxu0 0
          %898 = vmatpush1.bf16.msra.mxu0 0
          %899 = vmatprep.mubr.bf16.mxu0 0
          %900 = vmatmul.mubr.bf16.gmra.mrb[0].mxu0 %v861
          %v901 = vpop.f32.mrb[0].mxu0
          %v902 = vadd.f32 0.0, %v901
          %v903 = vpop.f32.mrb[0].mxu0
          %v904 = vpop.f32.mrb[0].mxu0
          %v905 = vpop.f32.mrb[0].mxu0
          %906 = vdwg.mxu0
          %907 = vst.msk [vmem:[#allocation4] sm:$0xff] %vm797, %v902
          %908 = vrot.lane.b32.xlu0 %v793, 120
          %v909 = vpop.permute.xlu0 %908
          %910 = vrot.lane.b32.xlu0 %v793, 88
          %v911 = vpop.permute.xlu0 %910
          %v913 = vsel %vm797, %v909, 0
          %v916 = vsel %vm797, %v911, 0
          %918 = vmatprep.subr.bf16.mxu0 0
          %919 = vmatpush1.bf16.xpose.msra.mxu0 %v916
          %920 = vmatprep.subr.bf16.mxu0 0
          %921 = vmatpush1.bf16.xpose.msra.mxu0 0
          %922 = vmatprep.subr.bf16.mxu0 0
          %923 = vmatpush1.bf16.xpose.msra.mxu0 0
          %924 = vmatprep.subr.bf16.mxu0 0
          %925 = vmatpush1.bf16.xpose.msra.mxu0 0
          %926 = vmatprep.subr.bf16.mxu0 0
          %927 = vmatpush1.bf16.xpose.msra.mxu0 0
          %928 = vmatprep.subr.bf16.mxu0 0
          %929 = vmatpush1.bf16.xpose.msra.mxu0 0
          %930 = vmatprep.subr.bf16.mxu0 0
          %931 = vmatpush1.bf16.xpose.msra.mxu0 0
          %932 = vmatprep.subr.bf16.mxu0 0
          %933 = vmatpush1.bf16.xpose.msra.mxu0 0
          %934 = vmatprep.subr.bf16.mxu0 0
          %935 = vmatpush1.bf16.xpose.msra.mxu0 0
          %936 = vmatprep.subr.bf16.mxu0 0
          %937 = vmatpush1.bf16.xpose.msra.mxu0 0
          %938 = vmatprep.subr.bf16.mxu0 0
          %939 = vmatpush1.bf16.xpose.msra.mxu0 0
          %940 = vmatprep.subr.bf16.mxu0 0
          %941 = vmatpush1.bf16.xpose.msra.mxu0 0
          %942 = vmatprep.subr.bf16.mxu0 0
          %943 = vmatpush1.bf16.xpose.msra.mxu0 0
          %944 = vmatprep.subr.bf16.mxu0 0
          %945 = vmatpush1.bf16.xpose.msra.mxu0 0
          %946 = vmatprep.subr.bf16.mxu0 0
          %947 = vmatpush1.bf16.xpose.msra.mxu0 0
          %948 = vmatprep.subr.bf16.mxu0 0
          %949 = vmatpush1.bf16.xpose.msra.mxu0 0
          %950 = vmatprep.mubr.bf16.mxu0 0
          %951 = vmatmul.mubr.bf16.gmra.mrb[0].mxu0 %v913
          %v952 = vpop.f32.mrb[0].mxu0
          %v953 = vadd.f32 0.0, %v952
          %v954 = vpop.f32.mrb[0].mxu0
          %v955 = vpop.f32.mrb[0].mxu0
          %v956 = vpop.f32.mrb[0].mxu0
          %957 = vdwg.mxu0
          %v958 = vmul.f32 %v953, 0.35355338
          %v959 = vadd.f32 %v958, %v792
          %v960 = vsel %vm797, %v959, -inf
          %961 = vmax.xlane.f32.xlu0 %v960
          %v962 = vpop.xlane.xlu0 %961
          %v963 = vsub.f32 %v959, %v962
          %v964 = vmul.f32 %v963, 1.442695
          %v965 = vpow.pop %v964
          %v966 = vsel %vm797, %v965, 0.0
          %967 = vadd.xlane.f32.xlu0 %v966
          %v968 = vpop.xlane.xlu0 %967
          %v969 = vrcp.pop %v968
          %v970 = vmul.f32 %v965, %v969
          %v971 = vpack.c.bf16 %v970, %v970
          %972 = vrot.lane.b32.xlu0 %v793, 56
          %v973 = vpop.permute.xlu0 %972
          %v975 = vsel %vm797, %v971, 0
          %v978 = vsel %vm863, %v973, 0
          %980 = vmatprep.subr.bf16.mxu0 0
          %981 = vmatpush1.bf16.msra.mxu0 %v978
          %982 = vmatprep.subr.bf16.mxu0 0
          %983 = vmatpush1.bf16.msra.mxu0 0
          %984 = vmatprep.subr.bf16.mxu0 0
          %985 = vmatpush1.bf16.msra.mxu0 0
          %986 = vmatprep.subr.bf16.mxu0 0
          %987 = vmatpush1.bf16.msra.mxu0 0
          %988 = vmatprep.subr.bf16.mxu0 0
          %989 = vmatpush1.bf16.msra.mxu0 0
          %990 = vmatprep.subr.bf16.mxu0 0
          %991 = vmatpush1.bf16.msra.mxu0 0
          %992 = vmatprep.subr.bf16.mxu0 0
          %993 = vmatpush1.bf16.msra.mxu0 0
          %994 = vmatprep.subr.bf16.mxu0 0
          %995 = vmatpush1.bf16.msra.mxu0 0
          %996 = vmatprep.subr.bf16.mxu0 0
          %997 = vmatpush1.bf16.msra.mxu0 0
          %998 = vmatprep.subr.bf16.mxu0 0
          %999 = vmatpush1.bf16.msra.mxu0 0
          %1000 = vmatprep.subr.bf16.mxu0 0
          %1001 = vmatpush1.bf16.msra.mxu0 0
          %1002 = vmatprep.subr.bf16.mxu0 0
          %1003 = vmatpush1.bf16.msra.mxu0 0
          %1004 = vmatprep.subr.bf16.mxu0 0
          %1005 = vmatpush1.bf16.msra.mxu0 0
          %1006 = vmatprep.subr.bf16.mxu0 0
          %1007 = vmatpush1.bf16.msra.mxu0 0
          %1008 = vmatprep.subr.bf16.mxu0 0
          %1009 = vmatpush1.bf16.msra.mxu0 0
          %1010 = vmatprep.subr.bf16.mxu0 0
          %1011 = vmatpush1.bf16.msra.mxu0 0
          %1012 = vmatprep.mubr.bf16.mxu0 0
          %1013 = vmatmul.mubr.bf16.gmra.mrb[0].mxu0 %v975
          %v1014 = vpop.f32.mrb[0].mxu0
          %v1015 = vadd.f32 0.0, %v1014
          %v1016 = vpop.f32.mrb[0].mxu0
          %v1017 = vpop.f32.mrb[0].mxu0
          %v1018 = vpop.f32.mrb[0].mxu0
          %1019 = vdwg.mxu0
          %1021 = vrot.lane.b32.xlu0 %v1015, 8
          %v1022 = vpop.permute.xlu0 %1021
          %vm1024 = vcmask 130112
          %1025 = vst.msk [vmem:[#allocation4] sm:$0xff] %vm1024, %v1022
          %1026 = vrot.lane.b32.xlu0 %v793, 112
          %v1027 = vpop.permute.xlu0 %1026
          %1028 = vrot.lane.b32.xlu0 %v793, 80
          %v1029 = vpop.permute.xlu0 %1028
          %v1031 = vsel %vm797, %v1027, 0
          %v1034 = vsel %vm797, %v1029, 0
          %1036 = vmatprep.subr.bf16.mxu0 0
          %1037 = vmatpush1.bf16.xpose.msra.mxu0 %v1034
          %1038 = vmatprep.subr.bf16.mxu0 0
          %1039 = vmatpush1.bf16.xpose.msra.mxu0 0
          %1040 = vmatprep.subr.bf16.mxu0 0
          %1041 = vmatpush1.bf16.xpose.msra.mxu0 0
          %1042 = vmatprep.subr.bf16.mxu0 0
          %1043 = vmatpush1.bf16.xpose.msra.mxu0 0
          %1044 = vmatprep.subr.bf16.mxu0 0
          %1045 = vmatpush1.bf16.xpose.msra.mxu0 0
          %1046 = vmatprep.subr.bf16.mxu0 0
          %1047 = vmatpush1.bf16.xpose.msra.mxu0 0
          %1048 = vmatprep.subr.bf16.mxu0 0
          %1049 = vmatpush1.bf16.xpose.msra.mxu0 0
          %1050 = vmatprep.subr.bf16.mxu0 0
          %1051 = vmatpush1.bf16.xpose.msra.mxu0 0
          %1052 = vmatprep.subr.bf16.mxu0 0
          %1053 = vmatpush1.bf16.xpose.msra.mxu0 0
          %1054 = vmatprep.subr.bf16.mxu0 0
          %1055 = vmatpush1.bf16.xpose.msra.mxu0 0
          %1056 = vmatprep.subr.bf16.mxu0 0
          %1057 = vmatpush1.bf16.xpose.msra.mxu0 0
          %1058 = vmatprep.subr.bf16.mxu0 0
          %1059 = vmatpush1.bf16.xpose.msra.mxu0 0
          %1060 = vmatprep.subr.bf16.mxu0 0
          %1061 = vmatpush1.bf16.xpose.msra.mxu0 0
          %1062 = vmatprep.subr.bf16.mxu0 0
          %1063 = vmatpush1.bf16.xpose.msra.mxu0 0
          %1064 = vmatprep.subr.bf16.mxu0 0
          %1065 = vmatpush1.bf16.xpose.msra.mxu0 0
          %1066 = vmatprep.subr.bf16.mxu0 0
          %1067 = vmatpush1.bf16.xpose.msra.mxu0 0
          %1068 = vmatprep.mubr.bf16.mxu0 0
          %1069 = vmatmul.mubr.bf16.gmra.mrb[0].mxu0 %v1031
          %v1070 = vpop.f32.mrb[0].mxu0
          %v1071 = vadd.f32 0.0, %v1070
          %v1072 = vpop.f32.mrb[0].mxu0
          %v1073 = vpop.f32.mrb[0].mxu0
          %v1074 = vpop.f32.mrb[0].mxu0
          %1075 = vdwg.mxu0
          %v1076 = vmul.f32 %v1071, 0.35355338
          %v1077 = vadd.f32 %v1076, %v792
          %v1078 = vsel %vm797, %v1077, -inf
          %1079 = vmax.xlane.f32.xlu0 %v1078
          %v1080 = vpop.xlane.xlu0 %1079
          %v1081 = vsub.f32 %v1077, %v1080
          %v1082 = vmul.f32 %v1081, 1.442695
          %v1083 = vpow.pop %v1082
          %v1084 = vsel %vm797, %v1083, 0.0
          %1085 = vadd.xlane.f32.xlu0 %v1084
          %v1086 = vpop.xlane.xlu0 %1085
          %v1087 = vrcp.pop %v1086
          %v1088 = vmul.f32 %v1083, %v1087
          %v1089 = vpack.c.bf16 %v1088, %v1088
          %1090 = vrot.lane.b32.xlu0 %v793, 48
          %v1091 = vpop.permute.xlu0 %1090
          %v1093 = vsel %vm797, %v1089, 0
          %v1096 = vsel %vm863, %v1091, 0
          %1098 = vmatprep.subr.bf16.mxu0 0
          %1099 = vmatpush1.bf16.msra.mxu0 %v1096
          %1100 = vmatprep.subr.bf16.mxu0 0
          %1101 = vmatpush1.bf16.msra.mxu0 0
          %1102 = vmatprep.subr.bf16.mxu0 0
          %1103 = vmatpush1.bf16.msra.mxu0 0
          %1104 = vmatprep.subr.bf16.mxu0 0
          %1105 = vmatpush1.bf16.msra.mxu0 0
          %1106 = vmatprep.subr.bf16.mxu0 0
          %1107 = vmatpush1.bf16.msra.mxu0 0
          %1108 = vmatprep.subr.bf16.mxu0 0
          %1109 = vmatpush1.bf16.msra.mxu0 0
          %1110 = vmatprep.subr.bf16.mxu0 0
          %1111 = vmatpush1.bf16.msra.mxu0 0
          %1112 = vmatprep.subr.bf16.mxu0 0
          %1113 = vmatpush1.bf16.msra.mxu0 0
          %1114 = vmatprep.subr.bf16.mxu0 0
          %1115 = vmatpush1.bf16.msra.mxu0 0
          %1116 = vmatprep.subr.bf16.mxu0 0
          %1117 = vmatpush1.bf16.msra.mxu0 0
          %1118 = vmatprep.subr.bf16.mxu0 0
          %1119 = vmatpush1.bf16.msra.mxu0 0
          %1120 = vmatprep.subr.bf16.mxu0 0
          %1121 = vmatpush1.bf16.msra.mxu0 0
          %1122 = vmatprep.subr.bf16.mxu0 0
          %1123 = vmatpush1.bf16.msra.mxu0 0
          %1124 = vmatprep.subr.bf16.mxu0 0
          %1125 = vmatpush1.bf16.msra.mxu0 0
          %1126 = vmatprep.subr.bf16.mxu0 0
          %1127 = vmatpush1.bf16.msra.mxu0 0
          %1128 = vmatprep.subr.bf16.mxu0 0
          %1129 = vmatpush1.bf16.msra.mxu0 0
          %1130 = vmatprep.mubr.bf16.mxu0 0
          %1131 = vmatmul.mubr.bf16.gmra.mrb[0].mxu0 %v1093
          %v1132 = vpop.f32.mrb[0].mxu0
          %v1133 = vadd.f32 0.0, %v1132
          %v1134 = vpop.f32.mrb[0].mxu0
          %v1135 = vpop.f32.mrb[0].mxu0
          %v1136 = vpop.f32.mrb[0].mxu0
          %1137 = vdwg.mxu0
          %1139 = vrot.lane.b32.xlu0 %v1133, 16
          %v1140 = vpop.permute.xlu0 %1139
          %vm1142 = vcmask 195712
          %1143 = vst.msk [vmem:[#allocation4] sm:$0xff] %vm1142, %v1140
          %1144 = vrot.lane.b32.xlu0 %v793, 104
          %v1145 = vpop.permute.xlu0 %1144
          %1146 = vrot.lane.b32.xlu0 %v793, 72
          %v1147 = vpop.permute.xlu0 %1146
          %v1149 = vsel %vm797, %v1145, 0
          %v1152 = vsel %vm797, %v1147, 0
          %1154 = vmatprep.subr.bf16.mxu0 0
          %1155 = vmatpush1.bf16.xpose.msra.mxu0 %v1152
          %1156 = vmatprep.subr.bf16.mxu0 0
          %1157 = vmatpush1.bf16.xpose.msra.mxu0 0
          %1158 = vmatprep.subr.bf16.mxu0 0
          %1159 = vmatpush1.bf16.xpose.msra.mxu0 0
          %1160 = vmatprep.subr.bf16.mxu0 0
          %1161 = vmatpush1.bf16.xpose.msra.mxu0 0
          %1162 = vmatprep.subr.bf16.mxu0 0
          %1163 = vmatpush1.bf16.xpose.msra.mxu0 0
          %1164 = vmatprep.subr.bf16.mxu0 0
          %1165 = vmatpush1.bf16.xpose.msra.mxu0 0
          %1166 = vmatprep.subr.bf16.mxu0 0
          %1167 = vmatpush1.bf16.xpose.msra.mxu0 0
          %1168 = vmatprep.subr.bf16.mxu0 0
          %1169 = vmatpush1.bf16.xpose.msra.mxu0 0
          %1170 = vmatprep.subr.bf16.mxu0 0
          %1171 = vmatpush1.bf16.xpose.msra.mxu0 0
          %1172 = vmatprep.subr.bf16.mxu0 0
          %1173 = vmatpush1.bf16.xpose.msra.mxu0 0
          %1174 = vmatprep.subr.bf16.mxu0 0
          %1175 = vmatpush1.bf16.xpose.msra.mxu0 0
          %1176 = vmatprep.subr.bf16.mxu0 0
          %1177 = vmatpush1.bf16.xpose.msra.mxu0 0
          %1178 = vmatprep.subr.bf16.mxu0 0
          %1179 = vmatpush1.bf16.xpose.msra.mxu0 0
          %1180 = vmatprep.subr.bf16.mxu0 0
          %1181 = vmatpush1.bf16.xpose.msra.mxu0 0
          %1182 = vmatprep.subr.bf16.mxu0 0
          %1183 = vmatpush1.bf16.xpose.msra.mxu0 0
          %1184 = vmatprep.subr.bf16.mxu0 0
          %1185 = vmatpush1.bf16.xpose.msra.mxu0 0
          %1186 = vmatprep.mubr.bf16.mxu0 0
          %1187 = vmatmul.mubr.bf16.gmra.mrb[0].mxu0 %v1149
          %v1188 = vpop.f32.mrb[0].mxu0
          %v1189 = vadd.f32 0.0, %v1188
          %v1190 = vpop.f32.mrb[0].mxu0
          %v1191 = vpop.f32.mrb[0].mxu0
          %v1192 = vpop.f32.mrb[0].mxu0
          %1193 = vdwg.mxu0
          %v1194 = vmul.f32 %v1189, 0.35355338
          %v1195 = vadd.f32 %v1194, %v792
          %v1196 = vsel %vm797, %v1195, -inf
          %1197 = vmax.xlane.f32.xlu0 %v1196
          %v1198 = vpop.xlane.xlu0 %1197
          %v1199 = vsub.f32 %v1195, %v1198
          %v1200 = vmul.f32 %v1199, 1.442695
          %v1201 = vpow.pop %v1200
          %v1202 = vsel %vm797, %v1201, 0.0
          %1203 = vadd.xlane.f32.xlu0 %v1202
          %v1204 = vpop.xlane.xlu0 %1203
          %v1205 = vrcp.pop %v1204
          %v1206 = vmul.f32 %v1201, %v1205
          %v1207 = vpack.c.bf16 %v1206, %v1206
          %1208 = vrot.lane.b32.xlu0 %v793, 40
          %v1209 = vpop.permute.xlu0 %1208
          %v1211 = vsel %vm797, %v1207, 0
          %v1214 = vsel %vm863, %v1209, 0
          %1216 = vmatprep.subr.bf16.mxu0 0
          %1217 = vmatpush1.bf16.msra.mxu0 %v1214
          %1218 = vmatprep.subr.bf16.mxu0 0
          %1219 = vmatpush1.bf16.msra.mxu0 0
          %1220 = vmatprep.subr.bf16.mxu0 0
          %1221 = vmatpush1.bf16.msra.mxu0 0
          %1222 = vmatprep.subr.bf16.mxu0 0
          %1223 = vmatpush1.bf16.msra.mxu0 0
          %1224 = vmatprep.subr.bf16.mxu0 0
          %1225 = vmatpush1.bf16.msra.mxu0 0
          %1226 = vmatprep.subr.bf16.mxu0 0
          %1227 = vmatpush1.bf16.msra.mxu0 0
          %1228 = vmatprep.subr.bf16.mxu0 0
          %1229 = vmatpush1.bf16.msra.mxu0 0
          %1230 = vmatprep.subr.bf16.mxu0 0
          %1231 = vmatpush1.bf16.msra.mxu0 0
          %1232 = vmatprep.subr.bf16.mxu0 0
          %1233 = vmatpush1.bf16.msra.mxu0 0
          %1234 = vmatprep.subr.bf16.mxu0 0
          %1235 = vmatpush1.bf16.msra.mxu0 0
          %1236 = vmatprep.subr.bf16.mxu0 0
          %1237 = vmatpush1.bf16.msra.mxu0 0
          %1238 = vmatprep.subr.bf16.mxu0 0
          %1239 = vmatpush1.bf16.msra.mxu0 0
          %1240 = vmatprep.subr.bf16.mxu0 0
          %1241 = vmatpush1.bf16.msra.mxu0 0
          %1242 = vmatprep.subr.bf16.mxu0 0
          %1243 = vmatpush1.bf16.msra.mxu0 0
          %1244 = vmatprep.subr.bf16.mxu0 0
          %1245 = vmatpush1.bf16.msra.mxu0 0
          %1246 = vmatprep.subr.bf16.mxu0 0
          %1247 = vmatpush1.bf16.msra.mxu0 0
          %1248 = vmatprep.mubr.bf16.mxu0 0
          %1249 = vmatmul.mubr.bf16.gmra.mrb[0].mxu0 %v1211
          %v1250 = vpop.f32.mrb[0].mxu0
          %v1251 = vadd.f32 0.0, %v1250
          %v1252 = vpop.f32.mrb[0].mxu0
          %v1253 = vpop.f32.mrb[0].mxu0
          %v1254 = vpop.f32.mrb[0].mxu0
          %1255 = vdwg.mxu0
          %1257 = vrot.lane.b32.xlu0 %v1251, 24
          %v1258 = vpop.permute.xlu0 %1257
          %vm1260 = vcmask 261312
          %1261 = vst.msk [vmem:[#allocation4] sm:$0xff] %vm1260, %v1258
          %v1262 = vld [vmem:[#allocation4] sm:$0xff]
          %v1263 = vpack.c.bf16 %v1262, %v1262
          %1264 = vrot.lane.b32.xlu0 %v744, 32
          %v1265 = vpop.permute.xlu0 %1264
          %1266 = vrot.lane.b32.xlu0 %v745, 32
          %v1267 = vpop.permute.xlu0 %1266
          %v1271 = vsel %vm748, %v1263, 0
          %1273 = vmatprep.subr.bf16.mxu0 0
          %1274 = vmatpush1.bf16.msra.mxu0 %v1265
          %1275 = vmatprep.subr.bf16.mxu0 0
          %1276 = vmatpush1.bf16.msra.mxu0 %v1267
          %1277 = vmatprep.subr.bf16.mxu0 0
          %1278 = vmatpush1.bf16.msra.mxu0 0
          %1279 = vmatprep.subr.bf16.mxu0 0
          %1280 = vmatpush1.bf16.msra.mxu0 0
          %1281 = vmatprep.subr.bf16.mxu0 0
          %1282 = vmatpush1.bf16.msra.mxu0 0
          %1283 = vmatprep.subr.bf16.mxu0 0
          %1284 = vmatpush1.bf16.msra.mxu0 0
          %1285 = vmatprep.subr.bf16.mxu0 0
          %1286 = vmatpush1.bf16.msra.mxu0 0
          %1287 = vmatprep.subr.bf16.mxu0 0
          %1288 = vmatpush1.bf16.msra.mxu0 0
          %1289 = vmatprep.subr.bf16.mxu0 0
          %1290 = vmatpush1.bf16.msra.mxu0 0
          %1291 = vmatprep.subr.bf16.mxu0 0
          %1292 = vmatpush1.bf16.msra.mxu0 0
          %1293 = vmatprep.subr.bf16.mxu0 0
          %1294 = vmatpush1.bf16.msra.mxu0 0
          %1295 = vmatprep.subr.bf16.mxu0 0
          %1296 = vmatpush1.bf16.msra.mxu0 0
          %1297 = vmatprep.subr.bf16.mxu0 0
          %1298 = vmatpush1.bf16.msra.mxu0 0
          %1299 = vmatprep.subr.bf16.mxu0 0
          %1300 = vmatpush1.bf16.msra.mxu0 0
          %1301 = vmatprep.subr.bf16.mxu0 0
          %1302 = vmatpush1.bf16.msra.mxu0 0
          %1303 = vmatprep.subr.bf16.mxu0 0
          %1304 = vmatpush1.bf16.msra.mxu0 0
          %1305 = vmatprep.mubr.bf16.mxu0 0
          %1306 = vmatmul.mubr.bf16.gmra.mrb[0].mxu0 %v1271
          %v1307 = vpop.f32.mrb[0].mxu0
          %v1308 = vadd.f32 0.0, %v1307
          %v1309 = vpop.f32.mrb[0].mxu0
          %v1310 = vpop.f32.mrb[0].mxu0
          %v1311 = vpop.f32.mrb[0].mxu0
          %1312 = vdwg.mxu0
          %v1313 = vadd.f32 %v727, %v1308
          %v1314 = vsel %vm748, %v1313, 0.0
          %1315 = vadd.xlane.f32.xlu0 %v1314
          %v1316 = vpop.xlane.xlu0 %1315
          %v1317 = vrcp.pop 32.0
          %v1318 = vmul.f32 %v1316, %v1317
          %v1319 = vsub.f32 %v1313, %v1318
          %v1320 = vmul.f32 %v1319, %v1319
          %v1321 = vsel %vm748, %v1320, 0.0
          %1322 = vadd.xlane.f32.xlu0 %v1321
          %v1323 = vpop.xlane.xlu0 %1322
          %v1324 = vmul.f32 %v1323, %v1317
          %v1325 = vadd.f32 %v1324, 1e-05
          %v1326 = vrsqrt.pop %v1325
          %v1327 = vmul.f32 %v1319, %v1326
          %v1328 = vlaneseq
          %v1329 = vshrl.u32 %v1328, 7
          %v1330 = vsub.s32 0, %v1329
          %v1331 = vrot.slane %v734, %v1330
          %v1332 = vmul.f32 %v1327, %v1331
          %v1333 = vpack.c.bf16 %v1332, %v1332
          %v1334 = vunpack.c.h.b16 %v730
          %v1335 = vunpack.c.h.b16 %v731
          %v1336 = vunpack.c.h.b16 %v732
          %v1337 = vunpack.c.h.b16 %v733
          %v1338 = vpack.c.b16 %v1335, %v1334
          %v1339 = vpack.c.b16 %v1337, %v1336
          %v1343 = vsel %vm748, %v1333, 0
          %1345 = vmatprep.subr.bf16.mxu0 0
          %1346 = vmatpush1.bf16.msra.mxu0 %v1338
          %1347 = vmatprep.subr.bf16.mxu0 0
          %1348 = vmatpush1.bf16.msra.mxu0 %v1339
          %1349 = vmatprep.subr.bf16.mxu0 0
          %1350 = vmatpush1.bf16.msra.mxu0 0
          %1351 = vmatprep.subr.bf16.mxu0 0
          %1352 = vmatpush1.bf16.msra.mxu0 0
          %1353 = vmatprep.subr.bf16.mxu0 0
          %1354 = vmatpush1.bf16.msra.mxu0 0
          %1355 = vmatprep.subr.bf16.mxu0 0
          %1356 = vmatpush1.bf16.msra.mxu0 0
          %1357 = vmatprep.subr.bf16.mxu0 0
          %1358 = vmatpush1.bf16.msra.mxu0 0
          %1359 = vmatprep.subr.bf16.mxu0 0
          %1360 = vmatpush1.bf16.msra.mxu0 0
          %1361 = vmatprep.subr.bf16.mxu0 0
          %1362 = vmatpush1.bf16.msra.mxu0 0
          %1363 = vmatprep.subr.bf16.mxu0 0
          %1364 = vmatpush1.bf16.msra.mxu0 0
          %1365 = vmatprep.subr.bf16.mxu0 0
          %1366 = vmatpush1.bf16.msra.mxu0 0
          %1367 = vmatprep.subr.bf16.mxu0 0
          %1368 = vmatpush1.bf16.msra.mxu0 0
          %1369 = vmatprep.subr.bf16.mxu0 0
          %1370 = vmatpush1.bf16.msra.mxu0 0
          %1371 = vmatprep.subr.bf16.mxu0 0
          %1372 = vmatpush1.bf16.msra.mxu0 0
          %1373 = vmatprep.subr.bf16.mxu0 0
          %1374 = vmatpush1.bf16.msra.mxu0 0
          %1375 = vmatprep.subr.bf16.mxu0 0
          %1376 = vmatpush1.bf16.msra.mxu0 0
          %1377 = vmatprep.mubr.bf16.mxu0 0
          %1378 = vmatmul.mubr.bf16.gmra.mrb[0].mxu0 %v1343
          %v1379 = vpop.f32.mrb[0].mxu0
          %v1380 = vadd.f32 0.0, %v1379
          %v1381 = vpop.f32.mrb[0].mxu0
          %v1382 = vpop.f32.mrb[0].mxu0
          %v1383 = vpop.f32.mrb[0].mxu0
          %1384 = vdwg.mxu0
          %v1385 = vpack.c.bf16 %v729, %v728
          %1386 = vrot.lane.b32.xlu0 %v1338, 96
          %v1387 = vpop.permute.xlu0 %1386
          %1388 = vrot.lane.b32.xlu0 %v1339, 96
          %v1389 = vpop.permute.xlu0 %1388
          %v1393 = vsel %vm748, %v1385, 0
          %1395 = vmatprep.subr.bf16.mxu0 0
          %1396 = vmatpush1.bf16.msra.mxu0 %v1387
          %1397 = vmatprep.subr.bf16.mxu0 0
          %1398 = vmatpush1.bf16.msra.mxu0 %v1389
          %1399 = vmatprep.subr.bf16.mxu0 0
          %1400 = vmatpush1.bf16.msra.mxu0 0
          %1401 = vmatprep.subr.bf16.mxu0 0
          %1402 = vmatpush1.bf16.msra.mxu0 0
          %1403 = vmatprep.subr.bf16.mxu0 0
          %1404 = vmatpush1.bf16.msra.mxu0 0
          %1405 = vmatprep.subr.bf16.mxu0 0
          %1406 = vmatpush1.bf16.msra.mxu0 0
          %1407 = vmatprep.subr.bf16.mxu0 0
          %1408 = vmatpush1.bf16.msra.mxu0 0
          %1409 = vmatprep.subr.bf16.mxu0 0
          %1410 = vmatpush1.bf16.msra.mxu0 0
          %1411 = vmatprep.subr.bf16.mxu0 0
          %1412 = vmatpush1.bf16.msra.mxu0 0
          %1413 = vmatprep.subr.bf16.mxu0 0
          %1414 = vmatpush1.bf16.msra.mxu0 0
          %1415 = vmatprep.subr.bf16.mxu0 0
          %1416 = vmatpush1.bf16.msra.mxu0 0
          %1417 = vmatprep.subr.bf16.mxu0 0
          %1418 = vmatpush1.bf16.msra.mxu0 0
          %1419 = vmatprep.subr.bf16.mxu0 0
          %1420 = vmatpush1.bf16.msra.mxu0 0
          %1421 = vmatprep.subr.bf16.mxu0 0
          %1422 = vmatpush1.bf16.msra.mxu0 0
          %1423 = vmatprep.subr.bf16.mxu0 0
          %1424 = vmatpush1.bf16.msra.mxu0 0
          %1425 = vmatprep.subr.bf16.mxu0 0
          %1426 = vmatpush1.bf16.msra.mxu0 0
          %1427 = vmatprep.mubr.bf16.mxu0 0
          %1428 = vmatmul.mubr.bf16.gmra.mrb[0].mxu0 %v1393
          %v1429 = vpop.f32.mrb[0].mxu0
          %v1430 = vadd.f32 0.0, %v1429
          %v1431 = vpop.f32.mrb[0].mxu0
          %v1432 = vpop.f32.mrb[0].mxu0
          %v1433 = vadd.f32 0.0, %v1432
          %v1434 = vpop.f32.mrb[0].mxu0
          %1435 = vdwg.mxu0
          %v1436 = vpack.c.bf16 %v1380, %v1380
          %v1437 = vpack.c.bf16 %v1433, %v1430
          %v1439 = vsel %vm797, %v1436, 0
          %v1442 = vsel %vm797, %v1437, 0
          %1444 = vmatprep.subr.bf16.mxu0 0
          %1445 = vmatpush1.bf16.xpose.msra.mxu0 %v1442
          %1446 = vmatprep.subr.bf16.mxu0 0
          %1447 = vmatpush1.bf16.xpose.msra.mxu0 0
          %1448 = vmatprep.subr.bf16.mxu0 0
          %1449 = vmatpush1.bf16.xpose.msra.mxu0 0
          %1450 = vmatprep.subr.bf16.mxu0 0
          %1451 = vmatpush1.bf16.xpose.msra.mxu0 0
          %1452 = vmatprep.subr.bf16.mxu0 0
          %1453 = vmatpush1.bf16.xpose.msra.mxu0 0
          %1454 = vmatprep.subr.bf16.mxu0 0
          %1455 = vmatpush1.bf16.xpose.msra.mxu0 0
          %1456 = vmatprep.subr.bf16.mxu0 0
          %1457 = vmatpush1.bf16.xpose.msra.mxu0 0
          %1458 = vmatprep.subr.bf16.mxu0 0
          %1459 = vmatpush1.bf16.xpose.msra.mxu0 0
          %1460 = vmatprep.subr.bf16.mxu0 0
          %1461 = vmatpush1.bf16.xpose.msra.mxu0 0
          %1462 = vmatprep.subr.bf16.mxu0 0
          %1463 = vmatpush1.bf16.xpose.msra.mxu0 0
          %1464 = vmatprep.subr.bf16.mxu0 0
          %1465 = vmatpush1.bf16.xpose.msra.mxu0 0
          %1466 = vmatprep.subr.bf16.mxu0 0
          %1467 = vmatpush1.bf16.xpose.msra.mxu0 0
          %1468 = vmatprep.subr.bf16.mxu0 0
          %1469 = vmatpush1.bf16.xpose.msra.mxu0 0
          %1470 = vmatprep.subr.bf16.mxu0 0
          %1471 = vmatpush1.bf16.xpose.msra.mxu0 0
          %1472 = vmatprep.subr.bf16.mxu0 0
          %1473 = vmatpush1.bf16.xpose.msra.mxu0 0
          %1474 = vmatprep.subr.bf16.mxu0 0
          %1475 = vmatpush1.bf16.xpose.msra.mxu0 0
          %1476 = vmatprep.mubr.bf16.mxu0 0
          %1477 = vmatmul.mubr.bf16.gmra.mrb[0].mxu0 %v1439
          %v1478 = vpop.f32.mrb[0].mxu0
          %v1479 = vadd.f32 0.0, %v1478
          %v1480 = vpop.f32.mrb[0].mxu0
          %v1481 = vpop.f32.mrb[0].mxu0
          %v1482 = vpop.f32.mrb[0].mxu0
          %1483 = vdwg.mxu0
          %v1484 = vmul.f32 %v1479, 0.35355338
          %vm1485 = vcmask 130048
          %v1486 = vsel %vm1485, %v1484, -inf
          %1487 = vmax.xlane.f32.xlu0 %v1486
          %v1488 = vpop.xlane.xlu0 %1487
          %v1489 = vsub.f32 %v1484, %v1488
          %v1490 = vmul.f32 %v1489, 1.442695
          %v1491 = vpow.pop %v1490
          %v1492 = vsel %vm1485, %v1491, 0.0
          %1493 = vadd.xlane.f32.xlu0 %v1492
          %v1494 = vpop.xlane.xlu0 %1493
          %v1495 = vrcp.pop %v1494
          %v1496 = vmul.f32 %v1491, %v1495
          %v1497 = vpack.c.bf16 %v1496, %v1496
          %1499 = vrot.lane.b32.xlu0 %v1437, 96
          %v1500 = vpop.permute.xlu0 %1499
          %v1503 = vsel %vm1485, %v1497, 0
          %1505 = vmatprep.subr.bf16.mxu0 0
          %1506 = vmatpush1.bf16.msra.mxu0 %v1500
          %1507 = vmatprep.subr.bf16.mxu0 0
          %1508 = vmatpush1.bf16.msra.mxu0 0
          %1509 = vmatprep.subr.bf16.mxu0 0
          %1510 = vmatpush1.bf16.msra.mxu0 0
          %1511 = vmatprep.subr.bf16.mxu0 0
          %1512 = vmatpush1.bf16.msra.mxu0 0
          %1513 = vmatprep.subr.bf16.mxu0 0
          %1514 = vmatpush1.bf16.msra.mxu0 0
          %1515 = vmatprep.subr.bf16.mxu0 0
          %1516 = vmatpush1.bf16.msra.mxu0 0
          %1517 = vmatprep.subr.bf16.mxu0 0
          %1518 = vmatpush1.bf16.msra.mxu0 0
          %1519 = vmatprep.subr.bf16.mxu0 0
          %1520 = vmatpush1.bf16.msra.mxu0 0
          %1521 = vmatprep.subr.bf16.mxu0 0
          %1522 = vmatpush1.bf16.msra.mxu0 0
          %1523 = vmatprep.subr.bf16.mxu0 0
          %1524 = vmatpush1.bf16.msra.mxu0 0
          %1525 = vmatprep.subr.bf16.mxu0 0
          %1526 = vmatpush1.bf16.msra.mxu0 0
          %1527 = vmatprep.subr.bf16.mxu0 0
          %1528 = vmatpush1.bf16.msra.mxu0 0
          %1529 = vmatprep.subr.bf16.mxu0 0
          %1530 = vmatpush1.bf16.msra.mxu0 0
          %1531 = vmatprep.subr.bf16.mxu0 0
          %1532 = vmatpush1.bf16.msra.mxu0 0
          %1533 = vmatprep.subr.bf16.mxu0 0
          %1534 = vmatpush1.bf16.msra.mxu0 0
          %1535 = vmatprep.subr.bf16.mxu0 0
          %1536 = vmatpush1.bf16.msra.mxu0 0
          %1537 = vmatprep.mubr.bf16.mxu0 0
          %1538 = vmatmul.mubr.bf16.gmra.mrb[0].mxu0 %v1503
          %v1539 = vpop.f32.mrb[0].mxu0
          %v1540 = vadd.f32 0.0, %v1539
          %v1541 = vpop.f32.mrb[0].mxu0
          %v1542 = vpop.f32.mrb[0].mxu0
          %v1543 = vpop.f32.mrb[0].mxu0
          %1544 = vdwg.mxu0
          %1545 = vst.msk [vmem:[#allocation4] sm:$0xff] %vm797, %v1540
          %1547 = vrot.lane.b32.xlu0 %v1436, 120
          %v1548 = vpop.permute.xlu0 %1547
          %1549 = vrot.lane.b32.xlu0 %v1437, 120
          %v1550 = vpop.permute.xlu0 %1549
          %v1552 = vsel %vm797, %v1548, 0
          %v1555 = vsel %vm797, %v1550, 0
          %1557 = vmatprep.subr.bf16.mxu0 0
          %1558 = vmatpush1.bf16.xpose.msra.mxu0 %v1555
          %1559 = vmatprep.subr.bf16.mxu0 0
          %1560 = vmatpush1.bf16.xpose.msra.mxu0 0
          %1561 = vmatprep.subr.bf16.mxu0 0
          %1562 = vmatpush1.bf16.xpose.msra.mxu0 0
          %1563 = vmatprep.subr.bf16.mxu0 0
          %1564 = vmatpush1.bf16.xpose.msra.mxu0 0
          %1565 = vmatprep.subr.bf16.mxu0 0
          %1566 = vmatpush1.bf16.xpose.msra.mxu0 0
          %1567 = vmatprep.subr.bf16.mxu0 0
          %1568 = vmatpush1.bf16.xpose.msra.mxu0 0
          %1569 = vmatprep.subr.bf16.mxu0 0
          %1570 = vmatpush1.bf16.xpose.msra.mxu0 0
          %1571 = vmatprep.subr.bf16.mxu0 0
          %1572 = vmatpush1.bf16.xpose.msra.mxu0 0
          %1573 = vmatprep.subr.bf16.mxu0 0
          %1574 = vmatpush1.bf16.xpose.msra.mxu0 0
          %1575 = vmatprep.subr.bf16.mxu0 0
          %1576 = vmatpush1.bf16.xpose.msra.mxu0 0
          %1577 = vmatprep.subr.bf16.mxu0 0
          %1578 = vmatpush1.bf16.xpose.msra.mxu0 0
          %1579 = vmatprep.subr.bf16.mxu0 0
          %1580 = vmatpush1.bf16.xpose.msra.mxu0 0
          %1581 = vmatprep.subr.bf16.mxu0 0
          %1582 = vmatpush1.bf16.xpose.msra.mxu0 0
          %1583 = vmatprep.subr.bf16.mxu0 0
          %1584 = vmatpush1.bf16.xpose.msra.mxu0 0
          %1585 = vmatprep.subr.bf16.mxu0 0
          %1586 = vmatpush1.bf16.xpose.msra.mxu0 0
          %1587 = vmatprep.subr.bf16.mxu0 0
          %1588 = vmatpush1.bf16.xpose.msra.mxu0 0
          %1589 = vmatprep.mubr.bf16.mxu0 0
          %1590 = vmatmul.mubr.bf16.gmra.mrb[0].mxu0 %v1552
          %v1591 = vpop.f32.mrb[0].mxu0
          %v1592 = vadd.f32 0.0, %v1591
          %v1593 = vpop.f32.mrb[0].mxu0
          %v1594 = vpop.f32.mrb[0].mxu0
          %v1595 = vpop.f32.mrb[0].mxu0
          %1596 = vdwg.mxu0
          %v1597 = vmul.f32 %v1592, 0.35355338
          %v1598 = vsel %vm1485, %v1597, -inf
          %1599 = vmax.xlane.f32.xlu0 %v1598
          %v1600 = vpop.xlane.xlu0 %1599
          %v1601 = vsub.f32 %v1597, %v1600
          %v1602 = vmul.f32 %v1601, 1.442695
          %v1603 = vpow.pop %v1602
          %v1604 = vsel %vm1485, %v1603, 0.0
          %1605 = vadd.xlane.f32.xlu0 %v1604
          %v1606 = vpop.xlane.xlu0 %1605
          %v1607 = vrcp.pop %v1606
          %v1608 = vmul.f32 %v1603, %v1607
          %v1609 = vpack.c.bf16 %v1608, %v1608
          %1610 = vrot.lane.b32.xlu0 %v1437, 88
          %v1611 = vpop.permute.xlu0 %1610
          %v1614 = vsel %vm1485, %v1609, 0
          %1616 = vmatprep.subr.bf16.mxu0 0
          %1617 = vmatpush1.bf16.msra.mxu0 %v1611
          %1618 = vmatprep.subr.bf16.mxu0 0
          %1619 = vmatpush1.bf16.msra.mxu0 0
          %1620 = vmatprep.subr.bf16.mxu0 0
          %1621 = vmatpush1.bf16.msra.mxu0 0
          %1622 = vmatprep.subr.bf16.mxu0 0
          %1623 = vmatpush1.bf16.msra.mxu0 0
          %1624 = vmatprep.subr.bf16.mxu0 0
          %1625 = vmatpush1.bf16.msra.mxu0 0
          %1626 = vmatprep.subr.bf16.mxu0 0
          %1627 = vmatpush1.bf16.msra.mxu0 0
          %1628 = vmatprep.subr.bf16.mxu0 0
          %1629 = vmatpush1.bf16.msra.mxu0 0
          %1630 = vmatprep.subr.bf16.mxu0 0
          %1631 = vmatpush1.bf16.msra.mxu0 0
          %1632 = vmatprep.subr.bf16.mxu0 0
          %1633 = vmatpush1.bf16.msra.mxu0 0
          %1634 = vmatprep.subr.bf16.mxu0 0
          %1635 = vmatpush1.bf16.msra.mxu0 0
          %1636 = vmatprep.subr.bf16.mxu0 0
          %1637 = vmatpush1.bf16.msra.mxu0 0
          %1638 = vmatprep.subr.bf16.mxu0 0
          %1639 = vmatpush1.bf16.msra.mxu0 0
          %1640 = vmatprep.subr.bf16.mxu0 0
          %1641 = vmatpush1.bf16.msra.mxu0 0
          %1642 = vmatprep.subr.bf16.mxu0 0
          %1643 = vmatpush1.bf16.msra.mxu0 0
          %1644 = vmatprep.subr.bf16.mxu0 0
          %1645 = vmatpush1.bf16.msra.mxu0 0
          %1646 = vmatprep.subr.bf16.mxu0 0
          %1647 = vmatpush1.bf16.msra.mxu0 0
          %1648 = vmatprep.mubr.bf16.mxu0 0
          %1649 = vmatmul.mubr.bf16.gmra.mrb[0].mxu0 %v1614
          %v1650 = vpop.f32.mrb[0].mxu0
          %v1651 = vadd.f32 0.0, %v1650
          %v1652 = vpop.f32.mrb[0].mxu0
          %v1653 = vpop.f32.mrb[0].mxu0
          %v1654 = vpop.f32.mrb[0].mxu0
          %1655 = vdwg.mxu0
          %1657 = vrot.lane.b32.xlu0 %v1651, 8
          %v1658 = vpop.permute.xlu0 %1657
          %1660 = vst.msk [vmem:[#allocation4] sm:$0xff] %vm1024, %v1658
          %1661 = vrot.lane.b32.xlu0 %v1436, 112
          %v1662 = vpop.permute.xlu0 %1661
          %1663 = vrot.lane.b32.xlu0 %v1437, 112
          %v1664 = vpop.permute.xlu0 %1663
          %v1666 = vsel %vm797, %v1662, 0
          %v1669 = vsel %vm797, %v1664, 0
          %1671 = vmatprep.subr.bf16.mxu0 0
          %1672 = vmatpush1.bf16.xpose.msra.mxu0 %v1669
          %1673 = vmatprep.subr.bf16.mxu0 0
          %1674 = vmatpush1.bf16.xpose.msra.mxu0 0
          %1675 = vmatprep.subr.bf16.mxu0 0
          %1676 = vmatpush1.bf16.xpose.msra.mxu0 0
          %1677 = vmatprep.subr.bf16.mxu0 0
          %1678 = vmatpush1.bf16.xpose.msra.mxu0 0
          %1679 = vmatprep.subr.bf16.mxu0 0
          %1680 = vmatpush1.bf16.xpose.msra.mxu0 0
          %1681 = vmatprep.subr.bf16.mxu0 0
          %1682 = vmatpush1.bf16.xpose.msra.mxu0 0
          %1683 = vmatprep.subr.bf16.mxu0 0
          %1684 = vmatpush1.bf16.xpose.msra.mxu0 0
          %1685 = vmatprep.subr.bf16.mxu0 0
          %1686 = vmatpush1.bf16.xpose.msra.mxu0 0
          %1687 = vmatprep.subr.bf16.mxu0 0
          %1688 = vmatpush1.bf16.xpose.msra.mxu0 0
          %1689 = vmatprep.subr.bf16.mxu0 0
          %1690 = vmatpush1.bf16.xpose.msra.mxu0 0
          %1691 = vmatprep.subr.bf16.mxu0 0
          %1692 = vmatpush1.bf16.xpose.msra.mxu0 0
          %1693 = vmatprep.subr.bf16.mxu0 0
          %1694 = vmatpush1.bf16.xpose.msra.mxu0 0
          %1695 = vmatprep.subr.bf16.mxu0 0
          %1696 = vmatpush1.bf16.xpose.msra.mxu0 0
          %1697 = vmatprep.subr.bf16.mxu0 0
          %1698 = vmatpush1.bf16.xpose.msra.mxu0 0
          %1699 = vmatprep.subr.bf16.mxu0 0
          %1700 = vmatpush1.bf16.xpose.msra.mxu0 0
          %1701 = vmatprep.subr.bf16.mxu0 0
          %1702 = vmatpush1.bf16.xpose.msra.mxu0 0
          %1703 = vmatprep.mubr.bf16.mxu0 0
          %1704 = vmatmul.mubr.bf16.gmra.mrb[0].mxu0 %v1666
          %v1705 = vpop.f32.mrb[0].mxu0
          %v1706 = vadd.f32 0.0, %v1705
          %v1707 = vpop.f32.mrb[0].mxu0
          %v1708 = vpop.f32.mrb[0].mxu0
          %v1709 = vpop.f32.mrb[0].mxu0
          %1710 = vdwg.mxu0
          %v1711 = vmul.f32 %v1706, 0.35355338
          %v1712 = vsel %vm1485, %v1711, -inf
          %1713 = vmax.xlane.f32.xlu0 %v1712
          %v1714 = vpop.xlane.xlu0 %1713
          %v1715 = vsub.f32 %v1711, %v1714
          %v1716 = vmul.f32 %v1715, 1.442695
          %v1717 = vpow.pop %v1716
          %v1718 = vsel %vm1485, %v1717, 0.0
          %1719 = vadd.xlane.f32.xlu0 %v1718
          %v1720 = vpop.xlane.xlu0 %1719
          %v1721 = vrcp.pop %v1720
          %v1722 = vmul.f32 %v1717, %v1721
          %v1723 = vpack.c.bf16 %v1722, %v1722
          %1724 = vrot.lane.b32.xlu0 %v1437, 80
          %v1725 = vpop.permute.xlu0 %1724
          %v1728 = vsel %vm1485, %v1723, 0
          %1730 = vmatprep.subr.bf16.mxu0 0
          %1731 = vmatpush1.bf16.msra.mxu0 %v1725
          %1732 = vmatprep.subr.bf16.mxu0 0
          %1733 = vmatpush1.bf16.msra.mxu0 0
          %1734 = vmatprep.subr.bf16.mxu0 0
          %1735 = vmatpush1.bf16.msra.mxu0 0
          %1736 = vmatprep.subr.bf16.mxu0 0
          %1737 = vmatpush1.bf16.msra.mxu0 0
          %1738 = vmatprep.subr.bf16.mxu0 0
          %1739 = vmatpush1.bf16.msra.mxu0 0
          %1740 = vmatprep.subr.bf16.mxu0 0
          %1741 = vmatpush1.bf16.msra.mxu0 0
          %1742 = vmatprep.subr.bf16.mxu0 0
          %1743 = vmatpush1.bf16.msra.mxu0 0
          %1744 = vmatprep.subr.bf16.mxu0 0
          %1745 = vmatpush1.bf16.msra.mxu0 0
          %1746 = vmatprep.subr.bf16.mxu0 0
          %1747 = vmatpush1.bf16.msra.mxu0 0
          %1748 = vmatprep.subr.bf16.mxu0 0
          %1749 = vmatpush1.bf16.msra.mxu0 0
          %1750 = vmatprep.subr.bf16.mxu0 0
          %1751 = vmatpush1.bf16.msra.mxu0 0
          %1752 = vmatprep.subr.bf16.mxu0 0
          %1753 = vmatpush1.bf16.msra.mxu0 0
          %1754 = vmatprep.subr.bf16.mxu0 0
          %1755 = vmatpush1.bf16.msra.mxu0 0
          %1756 = vmatprep.subr.bf16.mxu0 0
          %1757 = vmatpush1.bf16.msra.mxu0 0
          %1758 = vmatprep.subr.bf16.mxu0 0
          %1759 = vmatpush1.bf16.msra.mxu0 0
          %1760 = vmatprep.subr.bf16.mxu0 0
          %1761 = vmatpush1.bf16.msra.mxu0 0
          %1762 = vmatprep.mubr.bf16.mxu0 0
          %1763 = vmatmul.mubr.bf16.gmra.mrb[0].mxu0 %v1728
          %v1764 = vpop.f32.mrb[0].mxu0
          %v1765 = vadd.f32 0.0, %v1764
          %v1766 = vpop.f32.mrb[0].mxu0
          %v1767 = vpop.f32.mrb[0].mxu0
          %v1768 = vpop.f32.mrb[0].mxu0
          %1769 = vdwg.mxu0
          %1771 = vrot.lane.b32.xlu0 %v1765, 16
          %v1772 = vpop.permute.xlu0 %1771
          %1774 = vst.msk [vmem:[#allocation4] sm:$0xff] %vm1142, %v1772
          %1775 = vrot.lane.b32.xlu0 %v1436, 104
          %v1776 = vpop.permute.xlu0 %1775
          %1777 = vrot.lane.b32.xlu0 %v1437, 104
          %v1778 = vpop.permute.xlu0 %1777
          %v1780 = vsel %vm797, %v1776, 0
          %v1783 = vsel %vm797, %v1778, 0
          %1785 = vmatprep.subr.bf16.mxu0 0
          %1786 = vmatpush1.bf16.xpose.msra.mxu0 %v1783
          %1787 = vmatprep.subr.bf16.mxu0 0
          %1788 = vmatpush1.bf16.xpose.msra.mxu0 0
          %1789 = vmatprep.subr.bf16.mxu0 0
          %1790 = vmatpush1.bf16.xpose.msra.mxu0 0
          %1791 = vmatprep.subr.bf16.mxu0 0
          %1792 = vmatpush1.bf16.xpose.msra.mxu0 0
          %1793 = vmatprep.subr.bf16.mxu0 0
          %1794 = vmatpush1.bf16.xpose.msra.mxu0 0
          %1795 = vmatprep.subr.bf16.mxu0 0
          %1796 = vmatpush1.bf16.xpose.msra.mxu0 0
          %1797 = vmatprep.subr.bf16.mxu0 0
          %1798 = vmatpush1.bf16.xpose.msra.mxu0 0
          %1799 = vmatprep.subr.bf16.mxu0 0
          %1800 = vmatpush1.bf16.xpose.msra.mxu0 0
          %1801 = vmatprep.subr.bf16.mxu0 0
          %1802 = vmatpush1.bf16.xpose.msra.mxu0 0
          %1803 = vmatprep.subr.bf16.mxu0 0
          %1804 = vmatpush1.bf16.xpose.msra.mxu0 0
          %1805 = vmatprep.subr.bf16.mxu0 0
          %1806 = vmatpush1.bf16.xpose.msra.mxu0 0
          %1807 = vmatprep.subr.bf16.mxu0 0
          %1808 = vmatpush1.bf16.xpose.msra.mxu0 0
          %1809 = vmatprep.subr.bf16.mxu0 0
          %1810 = vmatpush1.bf16.xpose.msra.mxu0 0
          %1811 = vmatprep.subr.bf16.mxu0 0
          %1812 = vmatpush1.bf16.xpose.msra.mxu0 0
          %1813 = vmatprep.subr.bf16.mxu0 0
          %1814 = vmatpush1.bf16.xpose.msra.mxu0 0
          %1815 = vmatprep.subr.bf16.mxu0 0
          %1816 = vmatpush1.bf16.xpose.msra.mxu0 0
          %1817 = vmatprep.mubr.bf16.mxu0 0
          %1818 = vmatmul.mubr.bf16.gmra.mrb[0].mxu0 %v1780
          %v1819 = vpop.f32.mrb[0].mxu0
          %v1820 = vadd.f32 0.0, %v1819
          %v1821 = vpop.f32.mrb[0].mxu0
          %v1822 = vpop.f32.mrb[0].mxu0
          %v1823 = vpop.f32.mrb[0].mxu0
          %1824 = vdwg.mxu0
          %v1825 = vmul.f32 %v1820, 0.35355338
          %v1826 = vsel %vm1485, %v1825, -inf
          %1827 = vmax.xlane.f32.xlu0 %v1826
          %v1828 = vpop.xlane.xlu0 %1827
          %v1829 = vsub.f32 %v1825, %v1828
          %v1830 = vmul.f32 %v1829, 1.442695
          %v1831 = vpow.pop %v1830
          %v1832 = vsel %vm1485, %v1831, 0.0
          %1833 = vadd.xlane.f32.xlu0 %v1832
          %v1834 = vpop.xlane.xlu0 %1833
          %v1835 = vrcp.pop %v1834
          %v1836 = vmul.f32 %v1831, %v1835
          %v1837 = vpack.c.bf16 %v1836, %v1836
          %1838 = vrot.lane.b32.xlu0 %v1437, 72
          %v1839 = vpop.permute.xlu0 %1838
          %v1842 = vsel %vm1485, %v1837, 0
          %1844 = vmatprep.subr.bf16.mxu0 0
          %1845 = vmatpush1.bf16.msra.mxu0 %v1839
          %1846 = vmatprep.subr.bf16.mxu0 0
          %1847 = vmatpush1.bf16.msra.mxu0 0
          %1848 = vmatprep.subr.bf16.mxu0 0
          %1849 = vmatpush1.bf16.msra.mxu0 0
          %1850 = vmatprep.subr.bf16.mxu0 0
          %1851 = vmatpush1.bf16.msra.mxu0 0
          %1852 = vmatprep.subr.bf16.mxu0 0
          %1853 = vmatpush1.bf16.msra.mxu0 0
          %1854 = vmatprep.subr.bf16.mxu0 0
          %1855 = vmatpush1.bf16.msra.mxu0 0
          %1856 = vmatprep.subr.bf16.mxu0 0
          %1857 = vmatpush1.bf16.msra.mxu0 0
          %1858 = vmatprep.subr.bf16.mxu0 0
          %1859 = vmatpush1.bf16.msra.mxu0 0
          %1860 = vmatprep.subr.bf16.mxu0 0
          %1861 = vmatpush1.bf16.msra.mxu0 0
          %1862 = vmatprep.subr.bf16.mxu0 0
          %1863 = vmatpush1.bf16.msra.mxu0 0
          %1864 = vmatprep.subr.bf16.mxu0 0
          %1865 = vmatpush1.bf16.msra.mxu0 0
          %1866 = vmatprep.subr.bf16.mxu0 0
          %1867 = vmatpush1.bf16.msra.mxu0 0
          %1868 = vmatprep.subr.bf16.mxu0 0
          %1869 = vmatpush1.bf16.msra.mxu0 0
          %1870 = vmatprep.subr.bf16.mxu0 0
          %1871 = vmatpush1.bf16.msra.mxu0 0
          %1872 = vmatprep.subr.bf16.mxu0 0
          %1873 = vmatpush1.bf16.msra.mxu0 0
          %1874 = vmatprep.subr.bf16.mxu0 0
          %1875 = vmatpush1.bf16.msra.mxu0 0
          %1876 = vmatprep.mubr.bf16.mxu0 0
          %1877 = vmatmul.mubr.bf16.gmra.mrb[0].mxu0 %v1842
          %v1878 = vpop.f32.mrb[0].mxu0
          %v1879 = vadd.f32 0.0, %v1878
          %v1880 = vpop.f32.mrb[0].mxu0
          %v1881 = vpop.f32.mrb[0].mxu0
          %v1882 = vpop.f32.mrb[0].mxu0
          %1883 = vdwg.mxu0
          %1885 = vrot.lane.b32.xlu0 %v1879, 24
          %v1886 = vpop.permute.xlu0 %1885
          %1888 = vst.msk [vmem:[#allocation4] sm:$0xff] %vm1260, %v1886
          %v1889 = vld [vmem:[#allocation4] sm:$0xff]
          %v1890 = vpack.c.bf16 %v1889, %v1889
          %1891 = vrot.lane.b32.xlu0 %v1338, 32
          %v1892 = vpop.permute.xlu0 %1891
          %1893 = vrot.lane.b32.xlu0 %v1339, 32
          %v1894 = vpop.permute.xlu0 %1893
          %v1898 = vsel %vm748, %v1890, 0
          %1900 = vmatprep.subr.bf16.mxu0 0
          %1901 = vmatpush1.bf16.msra.mxu0 %v1892
          %1902 = vmatprep.subr.bf16.mxu0 0
          %1903 = vmatpush1.bf16.msra.mxu0 %v1894
          %1904 = vmatprep.subr.bf16.mxu0 0
          %1905 = vmatpush1.bf16.msra.mxu0 0
          %1906 = vmatprep.subr.bf16.mxu0 0
          %1907 = vmatpush1.bf16.msra.mxu0 0
          %1908 = vmatprep.subr.bf16.mxu0 0
          %1909 = vmatpush1.bf16.msra.mxu0 0
          %1910 = vmatprep.subr.bf16.mxu0 0
          %1911 = vmatpush1.bf16.msra.mxu0 0
          %1912 = vmatprep.subr.bf16.mxu0 0
          %1913 = vmatpush1.bf16.msra.mxu0 0
          %1914 = vmatprep.subr.bf16.mxu0 0
          %1915 = vmatpush1.bf16.msra.mxu0 0
          %1916 = vmatprep.subr.bf16.mxu0 0
          %1917 = vmatpush1.bf16.msra.mxu0 0
          %1918 = vmatprep.subr.bf16.mxu0 0
          %1919 = vmatpush1.bf16.msra.mxu0 0
          %1920 = vmatprep.subr.bf16.mxu0 0
          %1921 = vmatpush1.bf16.msra.mxu0 0
          %1922 = vmatprep.subr.bf16.mxu0 0
          %1923 = vmatpush1.bf16.msra.mxu0 0
          %1924 = vmatprep.subr.bf16.mxu0 0
          %1925 = vmatpush1.bf16.msra.mxu0 0
          %1926 = vmatprep.subr.bf16.mxu0 0
          %1927 = vmatpush1.bf16.msra.mxu0 0
          %1928 = vmatprep.subr.bf16.mxu0 0
          %1929 = vmatpush1.bf16.msra.mxu0 0
          %1930 = vmatprep.subr.bf16.mxu0 0
          %1931 = vmatpush1.bf16.msra.mxu0 0
          %1932 = vmatprep.mubr.bf16.mxu0 0
          %1933 = vmatmul.mubr.bf16.gmra.mrb[0].mxu0 %v1898
          %v1934 = vpop.f32.mrb[0].mxu0
          %v1935 = vadd.f32 0.0, %v1934
          %v1936 = vpop.f32.mrb[0].mxu0
          %v1937 = vpop.f32.mrb[0].mxu0
          %v1938 = vpop.f32.mrb[0].mxu0
          %1939 = vdwg.mxu0
          %v1940 = vadd.f32 %v1332, %v1935
          %v1941 = vsel %vm748, %v1940, 0.0
          %1942 = vadd.xlane.f32.xlu0 %v1941
          %v1943 = vpop.xlane.xlu0 %1942
          %v1944 = vmul.f32 %v1943, %v1317
          %v1945 = vsub.f32 %v1940, %v1944
          %v1946 = vmul.f32 %v1945, %v1945
          %v1947 = vsel %vm748, %v1946, 0.0
          %1948 = vadd.xlane.f32.xlu0 %v1947
          %v1949 = vpop.xlane.xlu0 %1948
          %v1950 = vmul.f32 %v1949, %v1317
          %v1951 = vadd.f32 %v1950, 1e-05
          %v1952 = vrsqrt.pop %v1951
          %v1953 = vmul.f32 %v1945, %v1952
          %v1954 = vlaneseq
          %v1955 = vshrl.u32 %v1954, 7
          %v1956 = vsub.s32 1, %v1955
          %v1957 = vrot.slane %v734, %v1956
          %v1958 = vmul.f32 %v1953, %v1957
          %v1959 = vld [vmem:[%s632] sm:$0xff]
          %v1960 = vld [vmem:[%s632 + $0x8] sm:$0xff]
          %v1961 = vld [vmem:[%s632 + $0x10] sm:$0xff]
          %v1962 = vld [vmem:[%s632 + $0x18] sm:$0xff]
          %v1963 = vld [vmem:[%s632 + $0x20] sm:$0xff]
          %v1964 = vld [vmem:[%s632 + $0x28] sm:$0xff]
          %v1965 = vld [vmem:[%s632 + $0x30] sm:$0xff]
          %v1966 = vld [vmem:[%s632 + $0x38] sm:$0xff]
          %v1967 = vld [vmem:[%s632 + $0x40] sm:$0xff]
          %v1968 = vld [vmem:[%s632 + $0x48] sm:$0xff]
          %v1969 = vld [vmem:[%s632 + $0x50] sm:$0xff]
          %v1970 = vld [vmem:[%s632 + $0x58] sm:$0xff]
          %v1971 = vld [vmem:[%s632 + $0x60] sm:$0xff]
          %v1972 = vld [vmem:[%s632 + $0x68] sm:$0xff]
          %v1973 = vld [vmem:[%s632 + $0x70] sm:$0xff]
          %v1974 = vld [vmem:[%s632 + $0x78] sm:$0xff]
          %v1975 = vld [vmem:[%s632 + $0x80] sm:$0xff]
          %v1976 = vld [vmem:[%s632 + $0x88] sm:$0xff]
          %v1977 = vld [vmem:[%s632 + $0x90] sm:$0xff]
          %v1978 = vld [vmem:[%s632 + $0x98] sm:$0xff]
          %v1979 = vld [vmem:[%s632 + $0xa0] sm:$0xff]
          %v1980 = vld [vmem:[%s632 + $0xa8] sm:$0xff]
          %v1981 = vld [vmem:[%s632 + $0xb0] sm:$0xff]
          %v1982 = vld [vmem:[%s632 + $0xb8] sm:$0xff]
          %v1983 = vld [vmem:[%s632 + $0xc0] sm:$0xff]
          %v1984 = vld [vmem:[%s632 + $0xc8] sm:$0xff]
          %v1985 = vld [vmem:[%s632 + $0xd0] sm:$0xff]
          %v1986 = vld [vmem:[%s632 + $0xd8] sm:$0xff]
          %v1987 = vld [vmem:[%s632 + $0xe0] sm:$0xff]
          %v1988 = vld [vmem:[%s632 + $0xe8] sm:$0xff]
          %v1989 = vld [vmem:[%s632 + $0xf0] sm:$0xff]
          %v1990 = vld [vmem:[%s632 + $0xf8] sm:$0xff]
          %v1991 = vpack.c.bf16 %v1958, %v1958
          %v2024 = vunpack.c.l.b16 %v1959
          %v2025 = vunpack.c.h.b16 %v1959
          %v2026 = vunpack.c.l.b16 %v1960
          %v2027 = vunpack.c.h.b16 %v1960
          %v2028 = vunpack.c.l.b16 %v1961
          %v2029 = vunpack.c.h.b16 %v1961
          %v2030 = vunpack.c.l.b16 %v1962
          %v2031 = vunpack.c.h.b16 %v1962
          %v2032 = vunpack.c.l.b16 %v1963
          %v2033 = vunpack.c.h.b16 %v1963
          %v2034 = vunpack.c.l.b16 %v1964
          %v2035 = vunpack.c.h.b16 %v1964
          %v2036 = vunpack.c.l.b16 %v1965
          %v2037 = vunpack.c.h.b16 %v1965
          %v2038 = vunpack.c.l.b16 %v1966
          %v2039 = vunpack.c.h.b16 %v1966
          %v2040 = vunpack.c.l.b16 %v1967
          %v2041 = vunpack.c.h.b16 %v1967
          %v2042 = vunpack.c.l.b16 %v1968
          %v2043 = vunpack.c.h.b16 %v1968
          %v2044 = vunpack.c.l.b16 %v1969
          %v2045 = vunpack.c.h.b16 %v1969
          %v2046 = vunpack.c.l.b16 %v1970
          %v2047 = vunpack.c.h.b16 %v1970
          %v2048 = vunpack.c.l.b16 %v1971
          %v2049 = vunpack.c.h.b16 %v1971
          %v2050 = vunpack.c.l.b16 %v1972
          %v2051 = vunpack.c.h.b16 %v1972
          %v2052 = vunpack.c.l.b16 %v1973
          %v2053 = vunpack.c.h.b16 %v1973
          %v2054 = vunpack.c.l.b16 %v1974
          %v2055 = vunpack.c.h.b16 %v1974
          %v2056 = vunpack.c.l.b16 %v1975
          %v2057 = vunpack.c.h.b16 %v1975
          %v2058 = vunpack.c.l.b16 %v1976
          %v2059 = vunpack.c.h.b16 %v1976
          %v2060 = vunpack.c.l.b16 %v1977
          %v2061 = vunpack.c.h.b16 %v1977
          %v2062 = vunpack.c.l.b16 %v1978
          %v2063 = vunpack.c.h.b16 %v1978
          %v2064 = vunpack.c.l.b16 %v1979
          %v2065 = vunpack.c.h.b16 %v1979
          %v2066 = vunpack.c.l.b16 %v1980
          %v2067 = vunpack.c.h.b16 %v1980
          %v2068 = vunpack.c.l.b16 %v1981
          %v2069 = vunpack.c.h.b16 %v1981
          %v2070 = vunpack.c.l.b16 %v1982
          %v2071 = vunpack.c.h.b16 %v1982
          %v2072 = vunpack.c.l.b16 %v1983
          %v2073 = vunpack.c.h.b16 %v1983
          %v2074 = vunpack.c.l.b16 %v1984
          %v2075 = vunpack.c.h.b16 %v1984
          %v2076 = vunpack.c.l.b16 %v1985
          %v2077 = vunpack.c.h.b16 %v1985
          %v2078 = vunpack.c.l.b16 %v1986
          %v2079 = vunpack.c.h.b16 %v1986
          %v2080 = vunpack.c.l.b16 %v1987
          %v2081 = vunpack.c.h.b16 %v1987
          %v2082 = vunpack.c.l.b16 %v1988
          %v2083 = vunpack.c.h.b16 %v1988
          %v2084 = vunpack.c.l.b16 %v1989
          %v2085 = vunpack.c.h.b16 %v1989
          %v2086 = vunpack.c.l.b16 %v1990
          %v2087 = vunpack.c.h.b16 %v1990
          %v2088 = vpack.c.b16 %v2040, %v2024
          %v2089 = vpack.c.b16 %v2041, %v2025
          %v2090 = vpack.c.b16 %v2042, %v2026
          %v2091 = vpack.c.b16 %v2043, %v2027
          %v2092 = vpack.c.b16 %v2044, %v2028
          %v2093 = vpack.c.b16 %v2045, %v2029
          %v2094 = vpack.c.b16 %v2046, %v2030
          %v2095 = vpack.c.b16 %v2047, %v2031
          %v2096 = vpack.c.b16 %v2048, %v2032
          %v2097 = vpack.c.b16 %v2049, %v2033
          %v2098 = vpack.c.b16 %v2050, %v2034
          %v2099 = vpack.c.b16 %v2051, %v2035
          %v2100 = vpack.c.b16 %v2052, %v2036
          %v2101 = vpack.c.b16 %v2053, %v2037
          %v2102 = vpack.c.b16 %v2054, %v2038
          %v2103 = vpack.c.b16 %v2055, %v2039
          %v2104 = vpack.c.b16 %v2072, %v2056
          %v2105 = vpack.c.b16 %v2073, %v2057
          %v2106 = vpack.c.b16 %v2074, %v2058
          %v2107 = vpack.c.b16 %v2075, %v2059
          %v2108 = vpack.c.b16 %v2076, %v2060
          %v2109 = vpack.c.b16 %v2077, %v2061
          %v2110 = vpack.c.b16 %v2078, %v2062
          %v2111 = vpack.c.b16 %v2079, %v2063
          %v2112 = vpack.c.b16 %v2080, %v2064
          %v2113 = vpack.c.b16 %v2081, %v2065
          %v2114 = vpack.c.b16 %v2082, %v2066
          %v2115 = vpack.c.b16 %v2083, %v2067
          %v2116 = vpack.c.b16 %v2084, %v2068
          %v2117 = vpack.c.b16 %v2085, %v2069
          %v2118 = vpack.c.b16 %v2086, %v2070
          %v2119 = vpack.c.b16 %v2087, %v2071
          %v2153 = vsel %vm748, %v1991, 0
          %2155 = vmatprep.subr.bf16.mxu0 %v2089
          %2156 = vmatpush1.bf16.msra.mxu0 %v2088
          %2157 = vmatprep.subr.bf16.mxu0 %v2105
          %2158 = vmatpush1.bf16.msra.mxu0 %v2104
          %2159 = vmatprep.subr.bf16.mxu0 0
          %2160 = vmatpush1.bf16.msra.mxu0 0
          %2161 = vmatprep.subr.bf16.mxu0 0
          %2162 = vmatpush1.bf16.msra.mxu0 0
          %2163 = vmatprep.subr.bf16.mxu0 0
          %2164 = vmatpush1.bf16.msra.mxu0 0
          %2165 = vmatprep.subr.bf16.mxu0 0
          %2166 = vmatpush1.bf16.msra.mxu0 0
          %2167 = vmatprep.subr.bf16.mxu0 0
          %2168 = vmatpush1.bf16.msra.mxu0 0
          %2169 = vmatprep.subr.bf16.mxu0 0
          %2170 = vmatpush1.bf16.msra.mxu0 0
          %2171 = vmatprep.subr.bf16.mxu0 0
          %2172 = vmatpush1.bf16.msra.mxu0 0
          %2173 = vmatprep.subr.bf16.mxu0 0
          %2174 = vmatpush1.bf16.msra.mxu0 0
          %2175 = vmatprep.subr.bf16.mxu0 0
          %2176 = vmatpush1.bf16.msra.mxu0 0
          %2177 = vmatprep.subr.bf16.mxu0 0
          %2178 = vmatpush1.bf16.msra.mxu0 0
          %2179 = vmatprep.subr.bf16.mxu0 0
          %2180 = vmatpush1.bf16.msra.mxu0 0
          %2181 = vmatprep.subr.bf16.mxu0 0
          %2182 = vmatpush1.bf16.msra.mxu0 0
          %2183 = vmatprep.subr.bf16.mxu0 0
          %2184 = vmatpush1.bf16.msra.mxu0 0
          %2185 = vmatprep.subr.bf16.mxu0 0
          %2186 = vmatpush1.bf16.msra.mxu0 0
          %2187 = vmatprep.mubr.bf16.mxu0 0
          %2188 = vmatmul.mubr.bf16.gmra.mrb[0].mxu0 %v2153
          %v2189 = vpop.f32.mrb[0].mxu0
          %v2190 = vadd.f32 0.0, %v2189
          %v2191 = vpop.f32.mrb[0].mxu0
          %v2192 = vadd.f32 0.0, %v2191
          %v2193 = vpop.f32.mrb[0].mxu0
          %v2194 = vpop.f32.mrb[0].mxu0
          %2195 = vdwg.mxu0
          %2196 = vmatprep.subr.bf16.mxu0 %v2091
          %2197 = vmatpush1.bf16.msra.mxu0 %v2090
          %2198 = vmatprep.subr.bf16.mxu0 %v2107
          %2199 = vmatpush1.bf16.msra.mxu0 %v2106
          %2200 = vmatprep.subr.bf16.mxu0 0
          %2201 = vmatpush1.bf16.msra.mxu0 0
          %2202 = vmatprep.subr.bf16.mxu0 0
          %2203 = vmatpush1.bf16.msra.mxu0 0
          %2204 = vmatprep.subr.bf16.mxu0 0
          %2205 = vmatpush1.bf16.msra.mxu0 0
          %2206 = vmatprep.subr.bf16.mxu0 0
          %2207 = vmatpush1.bf16.msra.mxu0 0
          %2208 = vmatprep.subr.bf16.mxu0 0
          %2209 = vmatpush1.bf16.msra.mxu0 0
          %2210 = vmatprep.subr.bf16.mxu0 0
          %2211 = vmatpush1.bf16.msra.mxu0 0
          %2212 = vmatprep.subr.bf16.mxu0 0
          %2213 = vmatpush1.bf16.msra.mxu0 0
          %2214 = vmatprep.subr.bf16.mxu0 0
          %2215 = vmatpush1.bf16.msra.mxu0 0
          %2216 = vmatprep.subr.bf16.mxu0 0
          %2217 = vmatpush1.bf16.msra.mxu0 0
          %2218 = vmatprep.subr.bf16.mxu0 0
          %2219 = vmatpush1.bf16.msra.mxu0 0
          %2220 = vmatprep.subr.bf16.mxu0 0
          %2221 = vmatpush1.bf16.msra.mxu0 0
          %2222 = vmatprep.subr.bf16.mxu0 0
          %2223 = vmatpush1.bf16.msra.mxu0 0
          %2224 = vmatprep.subr.bf16.mxu0 0
          %2225 = vmatpush1.bf16.msra.mxu0 0
          %2226 = vmatprep.subr.bf16.mxu0 0
          %2227 = vmatpush1.bf16.msra.mxu0 0
          %2228 = vmatprep.mubr.bf16.mxu0 0
          %2229 = vmatmul.mubr.bf16.gmra.mrb[0].mxu0 %v2153
          %v2230 = vpop.f32.mrb[0].mxu0
          %v2231 = vadd.f32 0.0, %v2230
          %v2232 = vpop.f32.mrb[0].mxu0
          %v2233 = vadd.f32 0.0, %v2232
          %v2234 = vpop.f32.mrb[0].mxu0
          %v2235 = vpop.f32.mrb[0].mxu0
          %2236 = vdwg.mxu0
          %2237 = vmatprep.subr.bf16.mxu0 %v2093
          %2238 = vmatpush1.bf16.msra.mxu0 %v2092
          %2239 = vmatprep.subr.bf16.mxu0 %v2109
          %2240 = vmatpush1.bf16.msra.mxu0 %v2108
          %2241 = vmatprep.subr.bf16.mxu0 0
          %2242 = vmatpush1.bf16.msra.mxu0 0
          %2243 = vmatprep.subr.bf16.mxu0 0
          %2244 = vmatpush1.bf16.msra.mxu0 0
          %2245 = vmatprep.subr.bf16.mxu0 0
          %2246 = vmatpush1.bf16.msra.mxu0 0
          %2247 = vmatprep.subr.bf16.mxu0 0
          %2248 = vmatpush1.bf16.msra.mxu0 0
          %2249 = vmatprep.subr.bf16.mxu0 0
          %2250 = vmatpush1.bf16.msra.mxu0 0
          %2251 = vmatprep.subr.bf16.mxu0 0
          %2252 = vmatpush1.bf16.msra.mxu0 0
          %2253 = vmatprep.subr.bf16.mxu0 0
          %2254 = vmatpush1.bf16.msra.mxu0 0
          %2255 = vmatprep.subr.bf16.mxu0 0
          %2256 = vmatpush1.bf16.msra.mxu0 0
          %2257 = vmatprep.subr.bf16.mxu0 0
          %2258 = vmatpush1.bf16.msra.mxu0 0
          %2259 = vmatprep.subr.bf16.mxu0 0
          %2260 = vmatpush1.bf16.msra.mxu0 0
          %2261 = vmatprep.subr.bf16.mxu0 0
          %2262 = vmatpush1.bf16.msra.mxu0 0
          %2263 = vmatprep.subr.bf16.mxu0 0
          %2264 = vmatpush1.bf16.msra.mxu0 0
          %2265 = vmatprep.subr.bf16.mxu0 0
          %2266 = vmatpush1.bf16.msra.mxu0 0
          %2267 = vmatprep.subr.bf16.mxu0 0
          %2268 = vmatpush1.bf16.msra.mxu0 0
          %2269 = vmatprep.mubr.bf16.mxu0 0
          %2270 = vmatmul.mubr.bf16.gmra.mrb[0].mxu0 %v2153
          %v2271 = vpop.f32.mrb[0].mxu0
          %v2272 = vadd.f32 0.0, %v2271
          %v2273 = vpop.f32.mrb[0].mxu0
          %v2274 = vadd.f32 0.0, %v2273
          %v2275 = vpop.f32.mrb[0].mxu0
          %v2276 = vpop.f32.mrb[0].mxu0
          %2277 = vdwg.mxu0
          %2278 = vmatprep.subr.bf16.mxu0 %v2095
          %2279 = vmatpush1.bf16.msra.mxu0 %v2094
          %2280 = vmatprep.subr.bf16.mxu0 %v2111
          %2281 = vmatpush1.bf16.msra.mxu0 %v2110
          %2282 = vmatprep.subr.bf16.mxu0 0
          %2283 = vmatpush1.bf16.msra.mxu0 0
          %2284 = vmatprep.subr.bf16.mxu0 0
          %2285 = vmatpush1.bf16.msra.mxu0 0
          %2286 = vmatprep.subr.bf16.mxu0 0
          %2287 = vmatpush1.bf16.msra.mxu0 0
          %2288 = vmatprep.subr.bf16.mxu0 0
          %2289 = vmatpush1.bf16.msra.mxu0 0
          %2290 = vmatprep.subr.bf16.mxu0 0
          %2291 = vmatpush1.bf16.msra.mxu0 0
          %2292 = vmatprep.subr.bf16.mxu0 0
          %2293 = vmatpush1.bf16.msra.mxu0 0
          %2294 = vmatprep.subr.bf16.mxu0 0
          %2295 = vmatpush1.bf16.msra.mxu0 0
          %2296 = vmatprep.subr.bf16.mxu0 0
          %2297 = vmatpush1.bf16.msra.mxu0 0
          %2298 = vmatprep.subr.bf16.mxu0 0
          %2299 = vmatpush1.bf16.msra.mxu0 0
          %2300 = vmatprep.subr.bf16.mxu0 0
          %2301 = vmatpush1.bf16.msra.mxu0 0
          %2302 = vmatprep.subr.bf16.mxu0 0
          %2303 = vmatpush1.bf16.msra.mxu0 0
          %2304 = vmatprep.subr.bf16.mxu0 0
          %2305 = vmatpush1.bf16.msra.mxu0 0
          %2306 = vmatprep.subr.bf16.mxu0 0
          %2307 = vmatpush1.bf16.msra.mxu0 0
          %2308 = vmatprep.subr.bf16.mxu0 0
          %2309 = vmatpush1.bf16.msra.mxu0 0
          %2310 = vmatprep.mubr.bf16.mxu0 0
          %2311 = vmatmul.mubr.bf16.gmra.mrb[0].mxu0 %v2153
          %v2312 = vpop.f32.mrb[0].mxu0
          %v2313 = vadd.f32 0.0, %v2312
          %v2314 = vpop.f32.mrb[0].mxu0
          %v2315 = vadd.f32 0.0, %v2314
          %v2316 = vpop.f32.mrb[0].mxu0
          %v2317 = vpop.f32.mrb[0].mxu0
          %2318 = vdwg.mxu0
          %2319 = vmatprep.subr.bf16.mxu0 %v2097
          %2320 = vmatpush1.bf16.msra.mxu0 %v2096
          %2321 = vmatprep.subr.bf16.mxu0 %v2113
          %2322 = vmatpush1.bf16.msra.mxu0 %v2112
          %2323 = vmatprep.subr.bf16.mxu0 0
          %2324 = vmatpush1.bf16.msra.mxu0 0
          %2325 = vmatprep.subr.bf16.mxu0 0
          %2326 = vmatpush1.bf16.msra.mxu0 0
          %2327 = vmatprep.subr.bf16.mxu0 0
          %2328 = vmatpush1.bf16.msra.mxu0 0
          %2329 = vmatprep.subr.bf16.mxu0 0
          %2330 = vmatpush1.bf16.msra.mxu0 0
          %2331 = vmatprep.subr.bf16.mxu0 0
          %2332 = vmatpush1.bf16.msra.mxu0 0
          %2333 = vmatprep.subr.bf16.mxu0 0
          %2334 = vmatpush1.bf16.msra.mxu0 0
          %2335 = vmatprep.subr.bf16.mxu0 0
          %2336 = vmatpush1.bf16.msra.mxu0 0
          %2337 = vmatprep.subr.bf16.mxu0 0
          %2338 = vmatpush1.bf16.msra.mxu0 0
          %2339 = vmatprep.subr.bf16.mxu0 0
          %2340 = vmatpush1.bf16.msra.mxu0 0
          %2341 = vmatprep.subr.bf16.mxu0 0
          %2342 = vmatpush1.bf16.msra.mxu0 0
          %2343 = vmatprep.subr.bf16.mxu0 0
          %2344 = vmatpush1.bf16.msra.mxu0 0
          %2345 = vmatprep.subr.bf16.mxu0 0
          %2346 = vmatpush1.bf16.msra.mxu0 0
          %2347 = vmatprep.subr.bf16.mxu0 0
          %2348 = vmatpush1.bf16.msra.mxu0 0
          %2349 = vmatprep.subr.bf16.mxu0 0
          %2350 = vmatpush1.bf16.msra.mxu0 0
          %2351 = vmatprep.mubr.bf16.mxu0 0
          %2352 = vmatmul.mubr.bf16.gmra.mrb[0].mxu0 %v2153
          %v2353 = vpop.f32.mrb[0].mxu0
          %v2354 = vadd.f32 0.0, %v2353
          %v2355 = vpop.f32.mrb[0].mxu0
          %v2356 = vadd.f32 0.0, %v2355
          %v2357 = vpop.f32.mrb[0].mxu0
          %v2358 = vpop.f32.mrb[0].mxu0
          %2359 = vdwg.mxu0
          %2360 = vmatprep.subr.bf16.mxu0 %v2099
          %2361 = vmatpush1.bf16.msra.mxu0 %v2098
          %2362 = vmatprep.subr.bf16.mxu0 %v2115
          %2363 = vmatpush1.bf16.msra.mxu0 %v2114
          %2364 = vmatprep.subr.bf16.mxu0 0
          %2365 = vmatpush1.bf16.msra.mxu0 0
          %2366 = vmatprep.subr.bf16.mxu0 0
          %2367 = vmatpush1.bf16.msra.mxu0 0
          %2368 = vmatprep.subr.bf16.mxu0 0
          %2369 = vmatpush1.bf16.msra.mxu0 0
          %2370 = vmatprep.subr.bf16.mxu0 0
          %2371 = vmatpush1.bf16.msra.mxu0 0
          %2372 = vmatprep.subr.bf16.mxu0 0
          %2373 = vmatpush1.bf16.msra.mxu0 0
          %2374 = vmatprep.subr.bf16.mxu0 0
          %2375 = vmatpush1.bf16.msra.mxu0 0
          %2376 = vmatprep.subr.bf16.mxu0 0
          %2377 = vmatpush1.bf16.msra.mxu0 0
          %2378 = vmatprep.subr.bf16.mxu0 0
          %2379 = vmatpush1.bf16.msra.mxu0 0
          %2380 = vmatprep.subr.bf16.mxu0 0
          %2381 = vmatpush1.bf16.msra.mxu0 0
          %2382 = vmatprep.subr.bf16.mxu0 0
          %2383 = vmatpush1.bf16.msra.mxu0 0
          %2384 = vmatprep.subr.bf16.mxu0 0
          %2385 = vmatpush1.bf16.msra.mxu0 0
          %2386 = vmatprep.subr.bf16.mxu0 0
          %2387 = vmatpush1.bf16.msra.mxu0 0
          %2388 = vmatprep.subr.bf16.mxu0 0
          %2389 = vmatpush1.bf16.msra.mxu0 0
          %2390 = vmatprep.subr.bf16.mxu0 0
          %2391 = vmatpush1.bf16.msra.mxu0 0
          %2392 = vmatprep.mubr.bf16.mxu0 0
          %2393 = vmatmul.mubr.bf16.gmra.mrb[0].mxu0 %v2153
          %v2394 = vpop.f32.mrb[0].mxu0
          %v2395 = vadd.f32 0.0, %v2394
          %v2396 = vpop.f32.mrb[0].mxu0
          %v2397 = vadd.f32 0.0, %v2396
          %v2398 = vpop.f32.mrb[0].mxu0
          %v2399 = vpop.f32.mrb[0].mxu0
          %2400 = vdwg.mxu0
          %2401 = vmatprep.subr.bf16.mxu0 %v2101
          %2402 = vmatpush1.bf16.msra.mxu0 %v2100
          %2403 = vmatprep.subr.bf16.mxu0 %v2117
          %2404 = vmatpush1.bf16.msra.mxu0 %v2116
          %2405 = vmatprep.subr.bf16.mxu0 0
          %2406 = vmatpush1.bf16.msra.mxu0 0
          %2407 = vmatprep.subr.bf16.mxu0 0
          %2408 = vmatpush1.bf16.msra.mxu0 0
          %2409 = vmatprep.subr.bf16.mxu0 0
          %2410 = vmatpush1.bf16.msra.mxu0 0
          %2411 = vmatprep.subr.bf16.mxu0 0
          %2412 = vmatpush1.bf16.msra.mxu0 0
          %2413 = vmatprep.subr.bf16.mxu0 0
          %2414 = vmatpush1.bf16.msra.mxu0 0
          %2415 = vmatprep.subr.bf16.mxu0 0
          %2416 = vmatpush1.bf16.msra.mxu0 0
          %2417 = vmatprep.subr.bf16.mxu0 0
          %2418 = vmatpush1.bf16.msra.mxu0 0
          %2419 = vmatprep.subr.bf16.mxu0 0
          %2420 = vmatpush1.bf16.msra.mxu0 0
          %2421 = vmatprep.subr.bf16.mxu0 0
          %2422 = vmatpush1.bf16.msra.mxu0 0
          %2423 = vmatprep.subr.bf16.mxu0 0
          %2424 = vmatpush1.bf16.msra.mxu0 0
          %2425 = vmatprep.subr.bf16.mxu0 0
          %2426 = vmatpush1.bf16.msra.mxu0 0
          %2427 = vmatprep.subr.bf16.mxu0 0
          %2428 = vmatpush1.bf16.msra.mxu0 0
          %2429 = vmatprep.subr.bf16.mxu0 0
          %2430 = vmatpush1.bf16.msra.mxu0 0
          %2431 = vmatprep.subr.bf16.mxu0 0
          %2432 = vmatpush1.bf16.msra.mxu0 0
          %2433 = vmatprep.mubr.bf16.mxu0 0
          %2434 = vmatmul.mubr.bf16.gmra.mrb[0].mxu0 %v2153
          %v2435 = vpop.f32.mrb[0].mxu0
          %v2436 = vadd.f32 0.0, %v2435
          %v2437 = vpop.f32.mrb[0].mxu0
          %v2438 = vadd.f32 0.0, %v2437
          %v2439 = vpop.f32.mrb[0].mxu0
          %v2440 = vpop.f32.mrb[0].mxu0
          %2441 = vdwg.mxu0
          %2442 = vmatprep.subr.bf16.mxu0 %v2103
          %2443 = vmatpush1.bf16.msra.mxu0 %v2102
          %2444 = vmatprep.subr.bf16.mxu0 %v2119
          %2445 = vmatpush1.bf16.msra.mxu0 %v2118
          %2446 = vmatprep.subr.bf16.mxu0 0
          %2447 = vmatpush1.bf16.msra.mxu0 0
          %2448 = vmatprep.subr.bf16.mxu0 0
          %2449 = vmatpush1.bf16.msra.mxu0 0
          %2450 = vmatprep.subr.bf16.mxu0 0
          %2451 = vmatpush1.bf16.msra.mxu0 0
          %2452 = vmatprep.subr.bf16.mxu0 0
          %2453 = vmatpush1.bf16.msra.mxu0 0
          %2454 = vmatprep.subr.bf16.mxu0 0
          %2455 = vmatpush1.bf16.msra.mxu0 0
          %2456 = vmatprep.subr.bf16.mxu0 0
          %2457 = vmatpush1.bf16.msra.mxu0 0
          %2458 = vmatprep.subr.bf16.mxu0 0
          %2459 = vmatpush1.bf16.msra.mxu0 0
          %2460 = vmatprep.subr.bf16.mxu0 0
          %2461 = vmatpush1.bf16.msra.mxu0 0
          %2462 = vmatprep.subr.bf16.mxu0 0
          %2463 = vmatpush1.bf16.msra.mxu0 0
          %2464 = vmatprep.subr.bf16.mxu0 0
          %2465 = vmatpush1.bf16.msra.mxu0 0
          %2466 = vmatprep.subr.bf16.mxu0 0
          %2467 = vmatpush1.bf16.msra.mxu0 0
          %2468 = vmatprep.subr.bf16.mxu0 0
          %2469 = vmatpush1.bf16.msra.mxu0 0
          %2470 = vmatprep.subr.bf16.mxu0 0
          %2471 = vmatpush1.bf16.msra.mxu0 0
          %2472 = vmatprep.subr.bf16.mxu0 0
          %2473 = vmatpush1.bf16.msra.mxu0 0
          %2474 = vmatprep.mubr.bf16.mxu0 0
          %2475 = vmatmul.mubr.bf16.gmra.mrb[0].mxu0 %v2153
          %v2476 = vpop.f32.mrb[0].mxu0
          %v2477 = vadd.f32 0.0, %v2476
          %v2478 = vpop.f32.mrb[0].mxu0
          %v2479 = vadd.f32 0.0, %v2478
          %v2480 = vpop.f32.mrb[0].mxu0
          %v2481 = vpop.f32.mrb[0].mxu0
          %2482 = vdwg.mxu0
          %v2483 = vmax.f32 %v2190, 0.0
          %v2484 = vmax.f32 %v2192, 0.0
          %v2485 = vmax.f32 %v2231, 0.0
          %v2486 = vmax.f32 %v2233, 0.0
          %v2487 = vmax.f32 %v2272, 0.0
          %v2488 = vmax.f32 %v2274, 0.0
          %v2489 = vmax.f32 %v2313, 0.0
          %v2490 = vmax.f32 %v2315, 0.0
          %v2491 = vmax.f32 %v2354, 0.0
          %v2492 = vmax.f32 %v2356, 0.0
          %v2493 = vmax.f32 %v2395, 0.0
          %v2494 = vmax.f32 %v2397, 0.0
          %v2495 = vmax.f32 %v2436, 0.0
          %v2496 = vmax.f32 %v2438, 0.0
          %v2497 = vmax.f32 %v2477, 0.0
          %v2498 = vmax.f32 %v2479, 0.0
          %v2499 = vpack.c.bf16 %v2483, %v2483
          %v2500 = vpack.c.bf16 %v2484, %v2484
          %v2501 = vpack.c.bf16 %v2485, %v2485
          %v2502 = vpack.c.bf16 %v2486, %v2486
          %v2503 = vpack.c.bf16 %v2487, %v2487
          %v2504 = vpack.c.bf16 %v2488, %v2488
          %v2505 = vpack.c.bf16 %v2489, %v2489
          %v2506 = vpack.c.bf16 %v2490, %v2490
          %v2507 = vpack.c.bf16 %v2491, %v2491
          %v2508 = vpack.c.bf16 %v2492, %v2492
          %v2509 = vpack.c.bf16 %v2493, %v2493
          %v2510 = vpack.c.bf16 %v2494, %v2494
          %v2511 = vpack.c.bf16 %v2495, %v2495
          %v2512 = vpack.c.bf16 %v2496, %v2496
          %v2513 = vpack.c.bf16 %v2497, %v2497
          %v2514 = vpack.c.bf16 %v2498, %v2498
          %v2515 = vld [vmem:[%s641] sm:$0xf]
          %v2516 = vld [vmem:[%s641 + $0x4] sm:$0xf]
          %v2517 = vld [vmem:[%s641 + $0x8] sm:$0xf]
          %v2518 = vld [vmem:[%s641 + $0xc] sm:$0xf]
          %v2519 = vld [vmem:[%s641 + $0x10] sm:$0xf]
          %v2520 = vld [vmem:[%s641 + $0x14] sm:$0xf]
          %v2521 = vld [vmem:[%s641 + $0x18] sm:$0xf]
          %v2522 = vld [vmem:[%s641 + $0x1c] sm:$0xf]
          %v2523 = vld [vmem:[%s641 + $0x20] sm:$0xf]
          %v2524 = vld [vmem:[%s641 + $0x24] sm:$0xf]
          %v2525 = vld [vmem:[%s641 + $0x28] sm:$0xf]
          %v2526 = vld [vmem:[%s641 + $0x2c] sm:$0xf]
          %v2527 = vld [vmem:[%s641 + $0x30] sm:$0xf]
          %v2528 = vld [vmem:[%s641 + $0x34] sm:$0xf]
          %v2529 = vld [vmem:[%s641 + $0x38] sm:$0xf]
          %v2530 = vld [vmem:[%s641 + $0x3c] sm:$0xf]
          %v2531 = vld [vmem:[%s641 + $0x40] sm:$0xf]
          %v2532 = vld [vmem:[%s641 + $0x44] sm:$0xf]
          %v2533 = vld [vmem:[%s641 + $0x48] sm:$0xf]
          %v2534 = vld [vmem:[%s641 + $0x4c] sm:$0xf]
          %v2535 = vld [vmem:[%s641 + $0x50] sm:$0xf]
          %v2536 = vld [vmem:[%s641 + $0x54] sm:$0xf]
          %v2537 = vld [vmem:[%s641 + $0x58] sm:$0xf]
          %v2538 = vld [vmem:[%s641 + $0x5c] sm:$0xf]
          %v2539 = vld [vmem:[%s641 + $0x60] sm:$0xf]
          %v2540 = vld [vmem:[%s641 + $0x64] sm:$0xf]
          %v2541 = vld [vmem:[%s641 + $0x68] sm:$0xf]
          %v2542 = vld [vmem:[%s641 + $0x6c] sm:$0xf]
          %v2543 = vld [vmem:[%s641 + $0x70] sm:$0xf]
          %v2544 = vld [vmem:[%s641 + $0x74] sm:$0xf]
          %v2545 = vld [vmem:[%s641 + $0x78] sm:$0xf]
          %v2546 = vld [vmem:[%s641 + $0x7c] sm:$0xf]
          %v2547 = vld [vmem:[%s641 + $0x80] sm:$0xf]
          %v2548 = vld [vmem:[%s641 + $0x84] sm:$0xf]
          %v2549 = vld [vmem:[%s641 + $0x88] sm:$0xf]
          %v2550 = vld [vmem:[%s641 + $0x8c] sm:$0xf]
          %v2551 = vld [vmem:[%s641 + $0x90] sm:$0xf]
          %v2552 = vld [vmem:[%s641 + $0x94] sm:$0xf]
          %v2553 = vld [vmem:[%s641 + $0x98] sm:$0xf]
          %v2554 = vld [vmem:[%s641 + $0x9c] sm:$0xf]
          %v2555 = vld [vmem:[%s641 + $0xa0] sm:$0xf]
          %v2556 = vld [vmem:[%s641 + $0xa4] sm:$0xf]
          %v2557 = vld [vmem:[%s641 + $0xa8] sm:$0xf]
          %v2558 = vld [vmem:[%s641 + $0xac] sm:$0xf]
          %v2559 = vld [vmem:[%s641 + $0xb0] sm:$0xf]
          %v2560 = vld [vmem:[%s641 + $0xb4] sm:$0xf]
          %v2561 = vld [vmem:[%s641 + $0xb8] sm:$0xf]
          %v2562 = vld [vmem:[%s641 + $0xbc] sm:$0xf]
          %v2563 = vld [vmem:[%s641 + $0xc0] sm:$0xf]
          %v2564 = vld [vmem:[%s641 + $0xc4] sm:$0xf]
          %v2565 = vld [vmem:[%s641 + $0xc8] sm:$0xf]
          %v2566 = vld [vmem:[%s641 + $0xcc] sm:$0xf]
          %v2567 = vld [vmem:[%s641 + $0xd0] sm:$0xf]
          %v2568 = vld [vmem:[%s641 + $0xd4] sm:$0xf]
          %v2569 = vld [vmem:[%s641 + $0xd8] sm:$0xf]
          %v2570 = vld [vmem:[%s641 + $0xdc] sm:$0xf]
          %v2571 = vld [vmem:[%s641 + $0xe0] sm:$0xf]
          %v2572 = vld [vmem:[%s641 + $0xe4] sm:$0xf]
          %v2573 = vld [vmem:[%s641 + $0xe8] sm:$0xf]
          %v2574 = vld [vmem:[%s641 + $0xec] sm:$0xf]
          %v2575 = vld [vmem:[%s641 + $0xf0] sm:$0xf]
          %v2576 = vld [vmem:[%s641 + $0xf4] sm:$0xf]
          %v2577 = vld [vmem:[%s641 + $0xf8] sm:$0xf]
          %v2578 = vld [vmem:[%s641 + $0xfc] sm:$0xf]
          %v2579 = vld [vmem:[%s641 + $0x100] sm:$0xf]
          %v2580 = vld [vmem:[%s641 + $0x104] sm:$0xf]
          %v2581 = vld [vmem:[%s641 + $0x108] sm:$0xf]
          %v2582 = vld [vmem:[%s641 + $0x10c] sm:$0xf]
          %v2583 = vld [vmem:[%s641 + $0x110] sm:$0xf]
          %v2584 = vld [vmem:[%s641 + $0x114] sm:$0xf]
          %v2585 = vld [vmem:[%s641 + $0x118] sm:$0xf]
          %v2586 = vld [vmem:[%s641 + $0x11c] sm:$0xf]
          %v2587 = vld [vmem:[%s641 + $0x120] sm:$0xf]
          %v2588 = vld [vmem:[%s641 + $0x124] sm:$0xf]
          %v2589 = vld [vmem:[%s641 + $0x128] sm:$0xf]
          %v2590 = vld [vmem:[%s641 + $0x12c] sm:$0xf]
          %v2591 = vld [vmem:[%s641 + $0x130] sm:$0xf]
          %v2592 = vld [vmem:[%s641 + $0x134] sm:$0xf]
          %v2593 = vld [vmem:[%s641 + $0x138] sm:$0xf]
          %v2594 = vld [vmem:[%s641 + $0x13c] sm:$0xf]
          %v2595 = vld [vmem:[%s641 + $0x140] sm:$0xf]
          %v2596 = vld [vmem:[%s641 + $0x144] sm:$0xf]
          %v2597 = vld [vmem:[%s641 + $0x148] sm:$0xf]
          %v2598 = vld [vmem:[%s641 + $0x14c] sm:$0xf]
          %v2599 = vld [vmem:[%s641 + $0x150] sm:$0xf]
          %v2600 = vld [vmem:[%s641 + $0x154] sm:$0xf]
          %v2601 = vld [vmem:[%s641 + $0x158] sm:$0xf]
          %v2602 = vld [vmem:[%s641 + $0x15c] sm:$0xf]
          %v2603 = vld [vmem:[%s641 + $0x160] sm:$0xf]
          %v2604 = vld [vmem:[%s641 + $0x164] sm:$0xf]
          %v2605 = vld [vmem:[%s641 + $0x168] sm:$0xf]
          %v2606 = vld [vmem:[%s641 + $0x16c] sm:$0xf]
          %v2607 = vld [vmem:[%s641 + $0x170] sm:$0xf]
          %v2608 = vld [vmem:[%s641 + $0x174] sm:$0xf]
          %v2609 = vld [vmem:[%s641 + $0x178] sm:$0xf]
          %v2610 = vld [vmem:[%s641 + $0x17c] sm:$0xf]
          %v2611 = vld [vmem:[%s641 + $0x180] sm:$0xf]
          %v2612 = vld [vmem:[%s641 + $0x184] sm:$0xf]
          %v2613 = vld [vmem:[%s641 + $0x188] sm:$0xf]
          %v2614 = vld [vmem:[%s641 + $0x18c] sm:$0xf]
          %v2615 = vld [vmem:[%s641 + $0x190] sm:$0xf]
          %v2616 = vld [vmem:[%s641 + $0x194] sm:$0xf]
          %v2617 = vld [vmem:[%s641 + $0x198] sm:$0xf]
          %v2618 = vld [vmem:[%s641 + $0x19c] sm:$0xf]
          %v2619 = vld [vmem:[%s641 + $0x1a0] sm:$0xf]
          %v2620 = vld [vmem:[%s641 + $0x1a4] sm:$0xf]
          %v2621 = vld [vmem:[%s641 + $0x1a8] sm:$0xf]
          %v2622 = vld [vmem:[%s641 + $0x1ac] sm:$0xf]
          %v2623 = vld [vmem:[%s641 + $0x1b0] sm:$0xf]
          %v2624 = vld [vmem:[%s641 + $0x1b4] sm:$0xf]
          %v2625 = vld [vmem:[%s641 + $0x1b8] sm:$0xf]
          %v2626 = vld [vmem:[%s641 + $0x1bc] sm:$0xf]
          %v2627 = vld [vmem:[%s641 + $0x1c0] sm:$0xf]
          %v2628 = vld [vmem:[%s641 + $0x1c4] sm:$0xf]
          %v2629 = vld [vmem:[%s641 + $0x1c8] sm:$0xf]
          %v2630 = vld [vmem:[%s641 + $0x1cc] sm:$0xf]
          %v2631 = vld [vmem:[%s641 + $0x1d0] sm:$0xf]
          %v2632 = vld [vmem:[%s641 + $0x1d4] sm:$0xf]
          %v2633 = vld [vmem:[%s641 + $0x1d8] sm:$0xf]
          %v2634 = vld [vmem:[%s641 + $0x1dc] sm:$0xf]
          %v2635 = vld [vmem:[%s641 + $0x1e0] sm:$0xf]
          %v2636 = vld [vmem:[%s641 + $0x1e4] sm:$0xf]
          %v2637 = vld [vmem:[%s641 + $0x1e8] sm:$0xf]
          %v2638 = vld [vmem:[%s641 + $0x1ec] sm:$0xf]
          %v2639 = vld [vmem:[%s641 + $0x1f0] sm:$0xf]
          %v2640 = vld [vmem:[%s641 + $0x1f4] sm:$0xf]
          %v2641 = vld [vmem:[%s641 + $0x1f8] sm:$0xf]
          %v2642 = vld [vmem:[%s641 + $0x1fc] sm:$0xf]
          %v2643 = vld [vmem:[%s641 + $0x200] sm:$0xf]
          %v2644 = vld [vmem:[%s641 + $0x204] sm:$0xf]
          %v2645 = vld [vmem:[%s641 + $0x208] sm:$0xf]
          %v2646 = vld [vmem:[%s641 + $0x20c] sm:$0xf]
          %v2647 = vld [vmem:[%s641 + $0x210] sm:$0xf]
          %v2648 = vld [vmem:[%s641 + $0x214] sm:$0xf]
          %v2649 = vld [vmem:[%s641 + $0x218] sm:$0xf]
          %v2650 = vld [vmem:[%s641 + $0x21c] sm:$0xf]
          %v2651 = vld [vmem:[%s641 + $0x220] sm:$0xf]
          %v2652 = vld [vmem:[%s641 + $0x224] sm:$0xf]
          %v2653 = vld [vmem:[%s641 + $0x228] sm:$0xf]
          %v2654 = vld [vmem:[%s641 + $0x22c] sm:$0xf]
          %v2655 = vld [vmem:[%s641 + $0x230] sm:$0xf]
          %v2656 = vld [vmem:[%s641 + $0x234] sm:$0xf]
          %v2657 = vld [vmem:[%s641 + $0x238] sm:$0xf]
          %v2658 = vld [vmem:[%s641 + $0x23c] sm:$0xf]
          %v2659 = vld [vmem:[%s641 + $0x240] sm:$0xf]
          %v2660 = vld [vmem:[%s641 + $0x244] sm:$0xf]
          %v2661 = vld [vmem:[%s641 + $0x248] sm:$0xf]
          %v2662 = vld [vmem:[%s641 + $0x24c] sm:$0xf]
          %v2663 = vld [vmem:[%s641 + $0x250] sm:$0xf]
          %v2664 = vld [vmem:[%s641 + $0x254] sm:$0xf]
          %v2665 = vld [vmem:[%s641 + $0x258] sm:$0xf]
          %v2666 = vld [vmem:[%s641 + $0x25c] sm:$0xf]
          %v2667 = vld [vmem:[%s641 + $0x260] sm:$0xf]
          %v2668 = vld [vmem:[%s641 + $0x264] sm:$0xf]
          %v2669 = vld [vmem:[%s641 + $0x268] sm:$0xf]
          %v2670 = vld [vmem:[%s641 + $0x26c] sm:$0xf]
          %v2671 = vld [vmem:[%s641 + $0x270] sm:$0xf]
          %v2672 = vld [vmem:[%s641 + $0x274] sm:$0xf]
          %v2673 = vld [vmem:[%s641 + $0x278] sm:$0xf]
          %v2674 = vld [vmem:[%s641 + $0x27c] sm:$0xf]
          %v2675 = vld [vmem:[%s641 + $0x280] sm:$0xf]
          %v2676 = vld [vmem:[%s641 + $0x284] sm:$0xf]
          %v2677 = vld [vmem:[%s641 + $0x288] sm:$0xf]
          %v2678 = vld [vmem:[%s641 + $0x28c] sm:$0xf]
          %v2679 = vld [vmem:[%s641 + $0x290] sm:$0xf]
          %v2680 = vld [vmem:[%s641 + $0x294] sm:$0xf]
          %v2681 = vld [vmem:[%s641 + $0x298] sm:$0xf]
          %v2682 = vld [vmem:[%s641 + $0x29c] sm:$0xf]
          %v2683 = vld [vmem:[%s641 + $0x2a0] sm:$0xf]
          %v2684 = vld [vmem:[%s641 + $0x2a4] sm:$0xf]
          %v2685 = vld [vmem:[%s641 + $0x2a8] sm:$0xf]
          %v2686 = vld [vmem:[%s641 + $0x2ac] sm:$0xf]
          %v2687 = vld [vmem:[%s641 + $0x2b0] sm:$0xf]
          %v2688 = vld [vmem:[%s641 + $0x2b4] sm:$0xf]
          %v2689 = vld [vmem:[%s641 + $0x2b8] sm:$0xf]
          %v2690 = vld [vmem:[%s641 + $0x2bc] sm:$0xf]
          %v2691 = vld [vmem:[%s641 + $0x2c0] sm:$0xf]
          %v2692 = vld [vmem:[%s641 + $0x2c4] sm:$0xf]
          %v2693 = vld [vmem:[%s641 + $0x2c8] sm:$0xf]
          %v2694 = vld [vmem:[%s641 + $0x2cc] sm:$0xf]
          %v2695 = vld [vmem:[%s641 + $0x2d0] sm:$0xf]
          %v2696 = vld [vmem:[%s641 + $0x2d4] sm:$0xf]
          %v2697 = vld [vmem:[%s641 + $0x2d8] sm:$0xf]
          %v2698 = vld [vmem:[%s641 + $0x2dc] sm:$0xf]
          %v2699 = vld [vmem:[%s641 + $0x2e0] sm:$0xf]
          %v2700 = vld [vmem:[%s641 + $0x2e4] sm:$0xf]
          %v2701 = vld [vmem:[%s641 + $0x2e8] sm:$0xf]
          %v2702 = vld [vmem:[%s641 + $0x2ec] sm:$0xf]
          %v2703 = vld [vmem:[%s641 + $0x2f0] sm:$0xf]
          %v2704 = vld [vmem:[%s641 + $0x2f4] sm:$0xf]
          %v2705 = vld [vmem:[%s641 + $0x2f8] sm:$0xf]
          %v2706 = vld [vmem:[%s641 + $0x2fc] sm:$0xf]
          %v2707 = vld [vmem:[%s641 + $0x300] sm:$0xf]
          %v2708 = vld [vmem:[%s641 + $0x304] sm:$0xf]
          %v2709 = vld [vmem:[%s641 + $0x308] sm:$0xf]
          %v2710 = vld [vmem:[%s641 + $0x30c] sm:$0xf]
          %v2711 = vld [vmem:[%s641 + $0x310] sm:$0xf]
          %v2712 = vld [vmem:[%s641 + $0x314] sm:$0xf]
          %v2713 = vld [vmem:[%s641 + $0x318] sm:$0xf]
          %v2714 = vld [vmem:[%s641 + $0x31c] sm:$0xf]
          %v2715 = vld [vmem:[%s641 + $0x320] sm:$0xf]
          %v2716 = vld [vmem:[%s641 + $0x324] sm:$0xf]
          %v2717 = vld [vmem:[%s641 + $0x328] sm:$0xf]
          %v2718 = vld [vmem:[%s641 + $0x32c] sm:$0xf]
          %v2719 = vld [vmem:[%s641 + $0x330] sm:$0xf]
          %v2720 = vld [vmem:[%s641 + $0x334] sm:$0xf]
          %v2721 = vld [vmem:[%s641 + $0x338] sm:$0xf]
          %v2722 = vld [vmem:[%s641 + $0x33c] sm:$0xf]
          %v2723 = vld [vmem:[%s641 + $0x340] sm:$0xf]
          %v2724 = vld [vmem:[%s641 + $0x344] sm:$0xf]
          %v2725 = vld [vmem:[%s641 + $0x348] sm:$0xf]
          %v2726 = vld [vmem:[%s641 + $0x34c] sm:$0xf]
          %v2727 = vld [vmem:[%s641 + $0x350] sm:$0xf]
          %v2728 = vld [vmem:[%s641 + $0x354] sm:$0xf]
          %v2729 = vld [vmem:[%s641 + $0x358] sm:$0xf]
          %v2730 = vld [vmem:[%s641 + $0x35c] sm:$0xf]
          %v2731 = vld [vmem:[%s641 + $0x360] sm:$0xf]
          %v2732 = vld [vmem:[%s641 + $0x364] sm:$0xf]
          %v2733 = vld [vmem:[%s641 + $0x368] sm:$0xf]
          %v2734 = vld [vmem:[%s641 + $0x36c] sm:$0xf]
          %v2735 = vld [vmem:[%s641 + $0x370] sm:$0xf]
          %v2736 = vld [vmem:[%s641 + $0x374] sm:$0xf]
          %v2737 = vld [vmem:[%s641 + $0x378] sm:$0xf]
          %v2738 = vld [vmem:[%s641 + $0x37c] sm:$0xf]
          %v2739 = vld [vmem:[%s641 + $0x380] sm:$0xf]
          %v2740 = vld [vmem:[%s641 + $0x384] sm:$0xf]
          %v2741 = vld [vmem:[%s641 + $0x388] sm:$0xf]
          %v2742 = vld [vmem:[%s641 + $0x38c] sm:$0xf]
          %v2743 = vld [vmem:[%s641 + $0x390] sm:$0xf]
          %v2744 = vld [vmem:[%s641 + $0x394] sm:$0xf]
          %v2745 = vld [vmem:[%s641 + $0x398] sm:$0xf]
          %v2746 = vld [vmem:[%s641 + $0x39c] sm:$0xf]
          %v2747 = vld [vmem:[%s641 + $0x3a0] sm:$0xf]
          %v2748 = vld [vmem:[%s641 + $0x3a4] sm:$0xf]
          %v2749 = vld [vmem:[%s641 + $0x3a8] sm:$0xf]
          %v2750 = vld [vmem:[%s641 + $0x3ac] sm:$0xf]
          %v2751 = vld [vmem:[%s641 + $0x3b0] sm:$0xf]
          %v2752 = vld [vmem:[%s641 + $0x3b4] sm:$0xf]
          %v2753 = vld [vmem:[%s641 + $0x3b8] sm:$0xf]
          %v2754 = vld [vmem:[%s641 + $0x3bc] sm:$0xf]
          %v2755 = vld [vmem:[%s641 + $0x3c0] sm:$0xf]
          %v2756 = vld [vmem:[%s641 + $0x3c4] sm:$0xf]
          %v2757 = vld [vmem:[%s641 + $0x3c8] sm:$0xf]
          %v2758 = vld [vmem:[%s641 + $0x3cc] sm:$0xf]
          %v2759 = vld [vmem:[%s641 + $0x3d0] sm:$0xf]
          %v2760 = vld [vmem:[%s641 + $0x3d4] sm:$0xf]
          %v2761 = vld [vmem:[%s641 + $0x3d8] sm:$0xf]
          %v2762 = vld [vmem:[%s641 + $0x3dc] sm:$0xf]
          %v2763 = vld [vmem:[%s641 + $0x3e0] sm:$0xf]
          %v2764 = vld [vmem:[%s641 + $0x3e4] sm:$0xf]
          %v2765 = vld [vmem:[%s641 + $0x3e8] sm:$0xf]
          %v2766 = vld [vmem:[%s641 + $0x3ec] sm:$0xf]
          %v2767 = vld [vmem:[%s641 + $0x3f0] sm:$0xf]
          %v2768 = vld [vmem:[%s641 + $0x3f4] sm:$0xf]
          %v2769 = vld [vmem:[%s641 + $0x3f8] sm:$0xf]
          %v2770 = vld [vmem:[%s641 + $0x3fc] sm:$0xf]
          %v3027 = vunpack.c.l.b16 %v2515
          %v3028 = vunpack.c.l.b16 %v2516
          %v3029 = vunpack.c.l.b16 %v2517
          %v3030 = vunpack.c.l.b16 %v2518
          %v3031 = vunpack.c.l.b16 %v2519
          %v3032 = vunpack.c.l.b16 %v2520
          %v3033 = vunpack.c.l.b16 %v2521
          %v3034 = vunpack.c.l.b16 %v2522
          %v3035 = vunpack.c.l.b16 %v2523
          %v3036 = vunpack.c.l.b16 %v2524
          %v3037 = vunpack.c.l.b16 %v2525
          %v3038 = vunpack.c.l.b16 %v2526
          %v3039 = vunpack.c.l.b16 %v2527
          %v3040 = vunpack.c.l.b16 %v2528
          %v3041 = vunpack.c.l.b16 %v2529
          %v3042 = vunpack.c.l.b16 %v2530
          %v3043 = vunpack.c.l.b16 %v2531
          %v3044 = vunpack.c.l.b16 %v2532
          %v3045 = vunpack.c.l.b16 %v2533
          %v3046 = vunpack.c.l.b16 %v2534
          %v3047 = vunpack.c.l.b16 %v2535
          %v3048 = vunpack.c.l.b16 %v2536
          %v3049 = vunpack.c.l.b16 %v2537
          %v3050 = vunpack.c.l.b16 %v2538
          %v3051 = vunpack.c.l.b16 %v2539
          %v3052 = vunpack.c.l.b16 %v2540
          %v3053 = vunpack.c.l.b16 %v2541
          %v3054 = vunpack.c.l.b16 %v2542
          %v3055 = vunpack.c.l.b16 %v2543
          %v3056 = vunpack.c.l.b16 %v2544
          %v3057 = vunpack.c.l.b16 %v2545
          %v3058 = vunpack.c.l.b16 %v2546
          %v3059 = vunpack.c.l.b16 %v2547
          %v3060 = vunpack.c.l.b16 %v2548
          %v3061 = vunpack.c.l.b16 %v2549
          %v3062 = vunpack.c.l.b16 %v2550
          %v3063 = vunpack.c.l.b16 %v2551
          %v3064 = vunpack.c.l.b16 %v2552
          %v3065 = vunpack.c.l.b16 %v2553
          %v3066 = vunpack.c.l.b16 %v2554
          %v3067 = vunpack.c.l.b16 %v2555
          %v3068 = vunpack.c.l.b16 %v2556
          %v3069 = vunpack.c.l.b16 %v2557
          %v3070 = vunpack.c.l.b16 %v2558
          %v3071 = vunpack.c.l.b16 %v2559
          %v3072 = vunpack.c.l.b16 %v2560
          %v3073 = vunpack.c.l.b16 %v2561
          %v3074 = vunpack.c.l.b16 %v2562
          %v3075 = vunpack.c.l.b16 %v2563
          %v3076 = vunpack.c.l.b16 %v2564
          %v3077 = vunpack.c.l.b16 %v2565
          %v3078 = vunpack.c.l.b16 %v2566
          %v3079 = vunpack.c.l.b16 %v2567
          %v3080 = vunpack.c.l.b16 %v2568
          %v3081 = vunpack.c.l.b16 %v2569
          %v3082 = vunpack.c.l.b16 %v2570
          %v3083 = vunpack.c.l.b16 %v2571
          %v3084 = vunpack.c.l.b16 %v2572
          %v3085 = vunpack.c.l.b16 %v2573
          %v3086 = vunpack.c.l.b16 %v2574
          %v3087 = vunpack.c.l.b16 %v2575
          %v3088 = vunpack.c.l.b16 %v2576
          %v3089 = vunpack.c.l.b16 %v2577
          %v3090 = vunpack.c.l.b16 %v2578
          %v3091 = vunpack.c.l.b16 %v2579
          %v3092 = vunpack.c.l.b16 %v2580
          %v3093 = vunpack.c.l.b16 %v2581
          %v3094 = vunpack.c.l.b16 %v2582
          %v3095 = vunpack.c.l.b16 %v2583
          %v3096 = vunpack.c.l.b16 %v2584
          %v3097 = vunpack.c.l.b16 %v2585
          %v3098 = vunpack.c.l.b16 %v2586
          %v3099 = vunpack.c.l.b16 %v2587
          %v3100 = vunpack.c.l.b16 %v2588
          %v3101 = vunpack.c.l.b16 %v2589
          %v3102 = vunpack.c.l.b16 %v2590
          %v3103 = vunpack.c.l.b16 %v2591
          %v3104 = vunpack.c.l.b16 %v2592
          %v3105 = vunpack.c.l.b16 %v2593
          %v3106 = vunpack.c.l.b16 %v2594
          %v3107 = vunpack.c.l.b16 %v2595
          %v3108 = vunpack.c.l.b16 %v2596
          %v3109 = vunpack.c.l.b16 %v2597
          %v3110 = vunpack.c.l.b16 %v2598
          %v3111 = vunpack.c.l.b16 %v2599
          %v3112 = vunpack.c.l.b16 %v2600
          %v3113 = vunpack.c.l.b16 %v2601
          %v3114 = vunpack.c.l.b16 %v2602
          %v3115 = vunpack.c.l.b16 %v2603
          %v3116 = vunpack.c.l.b16 %v2604
          %v3117 = vunpack.c.l.b16 %v2605
          %v3118 = vunpack.c.l.b16 %v2606
          %v3119 = vunpack.c.l.b16 %v2607
          %v3120 = vunpack.c.l.b16 %v2608
          %v3121 = vunpack.c.l.b16 %v2609
          %v3122 = vunpack.c.l.b16 %v2610
          %v3123 = vunpack.c.l.b16 %v2611
          %v3124 = vunpack.c.l.b16 %v2612
          %v3125 = vunpack.c.l.b16 %v2613
          %v3126 = vunpack.c.l.b16 %v2614
          %v3127 = vunpack.c.l.b16 %v2615
          %v3128 = vunpack.c.l.b16 %v2616
          %v3129 = vunpack.c.l.b16 %v2617
          %v3130 = vunpack.c.l.b16 %v2618
          %v3131 = vunpack.c.l.b16 %v2619
          %v3132 = vunpack.c.l.b16 %v2620
          %v3133 = vunpack.c.l.b16 %v2621
          %v3134 = vunpack.c.l.b16 %v2622
          %v3135 = vunpack.c.l.b16 %v2623
          %v3136 = vunpack.c.l.b16 %v2624
          %v3137 = vunpack.c.l.b16 %v2625
          %v3138 = vunpack.c.l.b16 %v2626
          %v3139 = vunpack.c.l.b16 %v2627
          %v3140 = vunpack.c.l.b16 %v2628
          %v3141 = vunpack.c.l.b16 %v2629
          %v3142 = vunpack.c.l.b16 %v2630
          %v3143 = vunpack.c.l.b16 %v2631
          %v3144 = vunpack.c.l.b16 %v2632
          %v3145 = vunpack.c.l.b16 %v2633
          %v3146 = vunpack.c.l.b16 %v2634
          %v3147 = vunpack.c.l.b16 %v2635
          %v3148 = vunpack.c.l.b16 %v2636
          %v3149 = vunpack.c.l.b16 %v2637
          %v3150 = vunpack.c.l.b16 %v2638
          %v3151 = vunpack.c.l.b16 %v2639
          %v3152 = vunpack.c.l.b16 %v2640
          %v3153 = vunpack.c.l.b16 %v2641
          %v3154 = vunpack.c.l.b16 %v2642
          %v3155 = vunpack.c.l.b16 %v2643
          %v3156 = vunpack.c.l.b16 %v2644
          %v3157 = vunpack.c.l.b16 %v2645
          %v3158 = vunpack.c.l.b16 %v2646
          %v3159 = vunpack.c.l.b16 %v2647
          %v3160 = vunpack.c.l.b16 %v2648
          %v3161 = vunpack.c.l.b16 %v2649
          %v3162 = vunpack.c.l.b16 %v2650
          %v3163 = vunpack.c.l.b16 %v2651
          %v3164 = vunpack.c.l.b16 %v2652
          %v3165 = vunpack.c.l.b16 %v2653
          %v3166 = vunpack.c.l.b16 %v2654
          %v3167 = vunpack.c.l.b16 %v2655
          %v3168 = vunpack.c.l.b16 %v2656
          %v3169 = vunpack.c.l.b16 %v2657
          %v3170 = vunpack.c.l.b16 %v2658
          %v3171 = vunpack.c.l.b16 %v2659
          %v3172 = vunpack.c.l.b16 %v2660
          %v3173 = vunpack.c.l.b16 %v2661
          %v3174 = vunpack.c.l.b16 %v2662
          %v3175 = vunpack.c.l.b16 %v2663
          %v3176 = vunpack.c.l.b16 %v2664
          %v3177 = vunpack.c.l.b16 %v2665
          %v3178 = vunpack.c.l.b16 %v2666
          %v3179 = vunpack.c.l.b16 %v2667
          %v3180 = vunpack.c.l.b16 %v2668
          %v3181 = vunpack.c.l.b16 %v2669
          %v3182 = vunpack.c.l.b16 %v2670
          %v3183 = vunpack.c.l.b16 %v2671
          %v3184 = vunpack.c.l.b16 %v2672
          %v3185 = vunpack.c.l.b16 %v2673
          %v3186 = vunpack.c.l.b16 %v2674
          %v3187 = vunpack.c.l.b16 %v2675
          %v3188 = vunpack.c.l.b16 %v2676
          %v3189 = vunpack.c.l.b16 %v2677
          %v3190 = vunpack.c.l.b16 %v2678
          %v3191 = vunpack.c.l.b16 %v2679
          %v3192 = vunpack.c.l.b16 %v2680
          %v3193 = vunpack.c.l.b16 %v2681
          %v3194 = vunpack.c.l.b16 %v2682
          %v3195 = vunpack.c.l.b16 %v2683
          %v3196 = vunpack.c.l.b16 %v2684
          %v3197 = vunpack.c.l.b16 %v2685
          %v3198 = vunpack.c.l.b16 %v2686
          %v3199 = vunpack.c.l.b16 %v2687
          %v3200 = vunpack.c.l.b16 %v2688
          %v3201 = vunpack.c.l.b16 %v2689
          %v3202 = vunpack.c.l.b16 %v2690
          %v3203 = vunpack.c.l.b16 %v2691
          %v3204 = vunpack.c.l.b16 %v2692
          %v3205 = vunpack.c.l.b16 %v2693
          %v3206 = vunpack.c.l.b16 %v2694
          %v3207 = vunpack.c.l.b16 %v2695
          %v3208 = vunpack.c.l.b16 %v2696
          %v3209 = vunpack.c.l.b16 %v2697
          %v3210 = vunpack.c.l.b16 %v2698
          %v3211 = vunpack.c.l.b16 %v2699
          %v3212 = vunpack.c.l.b16 %v2700
          %v3213 = vunpack.c.l.b16 %v2701
          %v3214 = vunpack.c.l.b16 %v2702
          %v3215 = vunpack.c.l.b16 %v2703
          %v3216 = vunpack.c.l.b16 %v2704
          %v3217 = vunpack.c.l.b16 %v2705
          %v3218 = vunpack.c.l.b16 %v2706
          %v3219 = vunpack.c.l.b16 %v2707
          %v3220 = vunpack.c.l.b16 %v2708
          %v3221 = vunpack.c.l.b16 %v2709
          %v3222 = vunpack.c.l.b16 %v2710
          %v3223 = vunpack.c.l.b16 %v2711
          %v3224 = vunpack.c.l.b16 %v2712
          %v3225 = vunpack.c.l.b16 %v2713
          %v3226 = vunpack.c.l.b16 %v2714
          %v3227 = vunpack.c.l.b16 %v2715
          %v3228 = vunpack.c.l.b16 %v2716
          %v3229 = vunpack.c.l.b16 %v2717
          %v3230 = vunpack.c.l.b16 %v2718
          %v3231 = vunpack.c.l.b16 %v2719
          %v3232 = vunpack.c.l.b16 %v2720
          %v3233 = vunpack.c.l.b16 %v2721
          %v3234 = vunpack.c.l.b16 %v2722
          %v3235 = vunpack.c.l.b16 %v2723
          %v3236 = vunpack.c.l.b16 %v2724
          %v3237 = vunpack.c.l.b16 %v2725
          %v3238 = vunpack.c.l.b16 %v2726
          %v3239 = vunpack.c.l.b16 %v2727
          %v3240 = vunpack.c.l.b16 %v2728
          %v3241 = vunpack.c.l.b16 %v2729
          %v3242 = vunpack.c.l.b16 %v2730
          %v3243 = vunpack.c.l.b16 %v2731
          %v3244 = vunpack.c.l.b16 %v2732
          %v3245 = vunpack.c.l.b16 %v2733
          %v3246 = vunpack.c.l.b16 %v2734
          %v3247 = vunpack.c.l.b16 %v2735
          %v3248 = vunpack.c.l.b16 %v2736
          %v3249 = vunpack.c.l.b16 %v2737
          %v3250 = vunpack.c.l.b16 %v2738
          %v3251 = vunpack.c.l.b16 %v2739
          %v3252 = vunpack.c.l.b16 %v2740
          %v3253 = vunpack.c.l.b16 %v2741
          %v3254 = vunpack.c.l.b16 %v2742
          %v3255 = vunpack.c.l.b16 %v2743
          %v3256 = vunpack.c.l.b16 %v2744
          %v3257 = vunpack.c.l.b16 %v2745
          %v3258 = vunpack.c.l.b16 %v2746
          %v3259 = vunpack.c.l.b16 %v2747
          %v3260 = vunpack.c.l.b16 %v2748
          %v3261 = vunpack.c.l.b16 %v2749
          %v3262 = vunpack.c.l.b16 %v2750
          %v3263 = vunpack.c.l.b16 %v2751
          %v3264 = vunpack.c.l.b16 %v2752
          %v3265 = vunpack.c.l.b16 %v2753
          %v3266 = vunpack.c.l.b16 %v2754
          %v3267 = vunpack.c.l.b16 %v2755
          %v3268 = vunpack.c.l.b16 %v2756
          %v3269 = vunpack.c.l.b16 %v2757
          %v3270 = vunpack.c.l.b16 %v2758
          %v3271 = vunpack.c.l.b16 %v2759
          %v3272 = vunpack.c.l.b16 %v2760
          %v3273 = vunpack.c.l.b16 %v2761
          %v3274 = vunpack.c.l.b16 %v2762
          %v3275 = vunpack.c.l.b16 %v2763
          %v3276 = vunpack.c.l.b16 %v2764
          %v3277 = vunpack.c.l.b16 %v2765
          %v3278 = vunpack.c.l.b16 %v2766
          %v3279 = vunpack.c.l.b16 %v2767
          %v3280 = vunpack.c.l.b16 %v2768
          %v3281 = vunpack.c.l.b16 %v2769
          %v3282 = vunpack.c.l.b16 %v2770
          %v3283 = vpack.c.b16 %v3028, %v3027
          %v3284 = vpack.c.b16 %v3030, %v3029
          %v3285 = vpack.c.b16 %v3032, %v3031
          %v3286 = vpack.c.b16 %v3034, %v3033
          %v3287 = vpack.c.b16 %v3036, %v3035
          %v3288 = vpack.c.b16 %v3038, %v3037
          %v3289 = vpack.c.b16 %v3040, %v3039
          %v3290 = vpack.c.b16 %v3042, %v3041
          %v3291 = vpack.c.b16 %v3044, %v3043
          %v3292 = vpack.c.b16 %v3046, %v3045
          %v3293 = vpack.c.b16 %v3048, %v3047
          %v3294 = vpack.c.b16 %v3050, %v3049
          %v3295 = vpack.c.b16 %v3052, %v3051
          %v3296 = vpack.c.b16 %v3054, %v3053
          %v3297 = vpack.c.b16 %v3056, %v3055
          %v3298 = vpack.c.b16 %v3058, %v3057
          %v3299 = vpack.c.b16 %v3060, %v3059
          %v3300 = vpack.c.b16 %v3062, %v3061
          %v3301 = vpack.c.b16 %v3064, %v3063
          %v3302 = vpack.c.b16 %v3066, %v3065
          %v3303 = vpack.c.b16 %v3068, %v3067
          %v3304 = vpack.c.b16 %v3070, %v3069
          %v3305 = vpack.c.b16 %v3072, %v3071
          %v3306 = vpack.c.b16 %v3074, %v3073
          %v3307 = vpack.c.b16 %v3076, %v3075
          %v3308 = vpack.c.b16 %v3078, %v3077
          %v3309 = vpack.c.b16 %v3080, %v3079
          %v3310 = vpack.c.b16 %v3082, %v3081
          %v3311 = vpack.c.b16 %v3084, %v3083
          %v3312 = vpack.c.b16 %v3086, %v3085
          %v3313 = vpack.c.b16 %v3088, %v3087
          %v3314 = vpack.c.b16 %v3090, %v3089
          %v3315 = vpack.c.b16 %v3092, %v3091
          %v3316 = vpack.c.b16 %v3094, %v3093
          %v3317 = vpack.c.b16 %v3096, %v3095
          %v3318 = vpack.c.b16 %v3098, %v3097
          %v3319 = vpack.c.b16 %v3100, %v3099
          %v3320 = vpack.c.b16 %v3102, %v3101
          %v3321 = vpack.c.b16 %v3104, %v3103
          %v3322 = vpack.c.b16 %v3106, %v3105
          %v3323 = vpack.c.b16 %v3108, %v3107
          %v3324 = vpack.c.b16 %v3110, %v3109
          %v3325 = vpack.c.b16 %v3112, %v3111
          %v3326 = vpack.c.b16 %v3114, %v3113
          %v3327 = vpack.c.b16 %v3116, %v3115
          %v3328 = vpack.c.b16 %v3118, %v3117
          %v3329 = vpack.c.b16 %v3120, %v3119
          %v3330 = vpack.c.b16 %v3122, %v3121
          %v3331 = vpack.c.b16 %v3124, %v3123
          %v3332 = vpack.c.b16 %v3126, %v3125
          %v3333 = vpack.c.b16 %v3128, %v3127
          %v3334 = vpack.c.b16 %v3130, %v3129
          %v3335 = vpack.c.b16 %v3132, %v3131
          %v3336 = vpack.c.b16 %v3134, %v3133
          %v3337 = vpack.c.b16 %v3136, %v3135
          %v3338 = vpack.c.b16 %v3138, %v3137
          %v3339 = vpack.c.b16 %v3140, %v3139
          %v3340 = vpack.c.b16 %v3142, %v3141
          %v3341 = vpack.c.b16 %v3144, %v3143
          %v3342 = vpack.c.b16 %v3146, %v3145
          %v3343 = vpack.c.b16 %v3148, %v3147
          %v3344 = vpack.c.b16 %v3150, %v3149
          %v3345 = vpack.c.b16 %v3152, %v3151
          %v3346 = vpack.c.b16 %v3154, %v3153
          %v3347 = vpack.c.b16 %v3156, %v3155
          %v3348 = vpack.c.b16 %v3158, %v3157
          %v3349 = vpack.c.b16 %v3160, %v3159
          %v3350 = vpack.c.b16 %v3162, %v3161
          %v3351 = vpack.c.b16 %v3164, %v3163
          %v3352 = vpack.c.b16 %v3166, %v3165
          %v3353 = vpack.c.b16 %v3168, %v3167
          %v3354 = vpack.c.b16 %v3170, %v3169
          %v3355 = vpack.c.b16 %v3172, %v3171
          %v3356 = vpack.c.b16 %v3174, %v3173
          %v3357 = vpack.c.b16 %v3176, %v3175
          %v3358 = vpack.c.b16 %v3178, %v3177
          %v3359 = vpack.c.b16 %v3180, %v3179
          %v3360 = vpack.c.b16 %v3182, %v3181
          %v3361 = vpack.c.b16 %v3184, %v3183
          %v3362 = vpack.c.b16 %v3186, %v3185
          %v3363 = vpack.c.b16 %v3188, %v3187
          %v3364 = vpack.c.b16 %v3190, %v3189
          %v3365 = vpack.c.b16 %v3192, %v3191
          %v3366 = vpack.c.b16 %v3194, %v3193
          %v3367 = vpack.c.b16 %v3196, %v3195
          %v3368 = vpack.c.b16 %v3198, %v3197
          %v3369 = vpack.c.b16 %v3200, %v3199
          %v3370 = vpack.c.b16 %v3202, %v3201
          %v3371 = vpack.c.b16 %v3204, %v3203
          %v3372 = vpack.c.b16 %v3206, %v3205
          %v3373 = vpack.c.b16 %v3208, %v3207
          %v3374 = vpack.c.b16 %v3210, %v3209
          %v3375 = vpack.c.b16 %v3212, %v3211
          %v3376 = vpack.c.b16 %v3214, %v3213
          %v3377 = vpack.c.b16 %v3216, %v3215
          %v3378 = vpack.c.b16 %v3218, %v3217
          %v3379 = vpack.c.b16 %v3220, %v3219
          %v3380 = vpack.c.b16 %v3222, %v3221
          %v3381 = vpack.c.b16 %v3224, %v3223
          %v3382 = vpack.c.b16 %v3226, %v3225
          %v3383 = vpack.c.b16 %v3228, %v3227
          %v3384 = vpack.c.b16 %v3230, %v3229
          %v3385 = vpack.c.b16 %v3232, %v3231
          %v3386 = vpack.c.b16 %v3234, %v3233
          %v3387 = vpack.c.b16 %v3236, %v3235
          %v3388 = vpack.c.b16 %v3238, %v3237
          %v3389 = vpack.c.b16 %v3240, %v3239
          %v3390 = vpack.c.b16 %v3242, %v3241
          %v3391 = vpack.c.b16 %v3244, %v3243
          %v3392 = vpack.c.b16 %v3246, %v3245
          %v3393 = vpack.c.b16 %v3248, %v3247
          %v3394 = vpack.c.b16 %v3250, %v3249
          %v3395 = vpack.c.b16 %v3252, %v3251
          %v3396 = vpack.c.b16 %v3254, %v3253
          %v3397 = vpack.c.b16 %v3256, %v3255
          %v3398 = vpack.c.b16 %v3258, %v3257
          %v3399 = vpack.c.b16 %v3260, %v3259
          %v3400 = vpack.c.b16 %v3262, %v3261
          %v3401 = vpack.c.b16 %v3264, %v3263
          %v3402 = vpack.c.b16 %v3266, %v3265
          %v3403 = vpack.c.b16 %v3268, %v3267
          %v3404 = vpack.c.b16 %v3270, %v3269
          %v3405 = vpack.c.b16 %v3272, %v3271
          %v3406 = vpack.c.b16 %v3274, %v3273
          %v3407 = vpack.c.b16 %v3276, %v3275
          %v3408 = vpack.c.b16 %v3278, %v3277
          %v3409 = vpack.c.b16 %v3280, %v3279
          %v3410 = vpack.c.b16 %v3282, %v3281
          %3539 = vmatprep.subr.bf16.mxu0 0
          %3540 = vmatpush1.bf16.msra.mxu0 %v3283
          %3541 = vmatprep.subr.bf16.mxu0 0
          %3542 = vmatpush1.bf16.msra.mxu0 %v3284
          %3543 = vmatprep.subr.bf16.mxu0 0
          %3544 = vmatpush1.bf16.msra.mxu0 %v3285
          %3545 = vmatprep.subr.bf16.mxu0 0
          %3546 = vmatpush1.bf16.msra.mxu0 %v3286
          %3547 = vmatprep.subr.bf16.mxu0 0
          %3548 = vmatpush1.bf16.msra.mxu0 %v3287
          %3549 = vmatprep.subr.bf16.mxu0 0
          %3550 = vmatpush1.bf16.msra.mxu0 %v3288
          %3551 = vmatprep.subr.bf16.mxu0 0
          %3552 = vmatpush1.bf16.msra.mxu0 %v3289
          %3553 = vmatprep.subr.bf16.mxu0 0
          %3554 = vmatpush1.bf16.msra.mxu0 %v3290
          %3555 = vmatprep.subr.bf16.mxu0 0
          %3556 = vmatpush1.bf16.msra.mxu0 %v3291
          %3557 = vmatprep.subr.bf16.mxu0 0
          %3558 = vmatpush1.bf16.msra.mxu0 %v3292
          %3559 = vmatprep.subr.bf16.mxu0 0
          %3560 = vmatpush1.bf16.msra.mxu0 %v3293
          %3561 = vmatprep.subr.bf16.mxu0 0
          %3562 = vmatpush1.bf16.msra.mxu0 %v3294
          %3563 = vmatprep.subr.bf16.mxu0 0
          %3564 = vmatpush1.bf16.msra.mxu0 %v3295
          %3565 = vmatprep.subr.bf16.mxu0 0
          %3566 = vmatpush1.bf16.msra.mxu0 %v3296
          %3567 = vmatprep.subr.bf16.mxu0 0
          %3568 = vmatpush1.bf16.msra.mxu0 %v3297
          %3569 = vmatprep.subr.bf16.mxu0 0
          %3570 = vmatpush1.bf16.msra.mxu0 %v3298
          %3571 = vmatprep.mubr.bf16.mxu0 %v2500
          %3572 = vmatmul.mubr.bf16.gmra.mrb[0].mxu0 %v2499
          %v3573 = vpop.f32.mrb[0].mxu0
          %v3574 = vadd.f32 0.0, %v3573
          %v3575 = vpop.f32.mrb[0].mxu0
          %v3576 = vpop.f32.mrb[0].mxu0
          %v3577 = vpop.f32.mrb[0].mxu0
          %3578 = vdwg.mxu0
          %3579 = vmatprep.subr.bf16.mxu0 0
          %3580 = vmatpush1.bf16.msra.mxu0 %v3299
          %3581 = vmatprep.subr.bf16.mxu0 0
          %3582 = vmatpush1.bf16.msra.mxu0 %v3300
          %3583 = vmatprep.subr.bf16.mxu0 0
          %3584 = vmatpush1.bf16.msra.mxu0 %v3301
          %3585 = vmatprep.subr.bf16.mxu0 0
          %3586 = vmatpush1.bf16.msra.mxu0 %v3302
          %3587 = vmatprep.subr.bf16.mxu0 0
          %3588 = vmatpush1.bf16.msra.mxu0 %v3303
          %3589 = vmatprep.subr.bf16.mxu0 0
          %3590 = vmatpush1.bf16.msra.mxu0 %v3304
          %3591 = vmatprep.subr.bf16.mxu0 0
          %3592 = vmatpush1.bf16.msra.mxu0 %v3305
          %3593 = vmatprep.subr.bf16.mxu0 0
          %3594 = vmatpush1.bf16.msra.mxu0 %v3306
          %3595 = vmatprep.subr.bf16.mxu0 0
          %3596 = vmatpush1.bf16.msra.mxu0 %v3307
          %3597 = vmatprep.subr.bf16.mxu0 0
          %3598 = vmatpush1.bf16.msra.mxu0 %v3308
          %3599 = vmatprep.subr.bf16.mxu0 0
          %3600 = vmatpush1.bf16.msra.mxu0 %v3309
          %3601 = vmatprep.subr.bf16.mxu0 0
          %3602 = vmatpush1.bf16.msra.mxu0 %v3310
          %3603 = vmatprep.subr.bf16.mxu0 0
          %3604 = vmatpush1.bf16.msra.mxu0 %v3311
          %3605 = vmatprep.subr.bf16.mxu0 0
          %3606 = vmatpush1.bf16.msra.mxu0 %v3312
          %3607 = vmatprep.subr.bf16.mxu0 0
          %3608 = vmatpush1.bf16.msra.mxu0 %v3313
          %3609 = vmatprep.subr.bf16.mxu0 0
          %3610 = vmatpush1.bf16.msra.mxu0 %v3314
          %3611 = vmatprep.mubr.bf16.mxu0 %v2502
          %3612 = vmatmul.mubr.bf16.gmra.mrb[0].mxu0 %v2501
          %v3613 = vpop.f32.mrb[0].mxu0
          %v3614 = vadd.f32 %v3574, %v3613
          %v3615 = vpop.f32.mrb[0].mxu0
          %v3616 = vpop.f32.mrb[0].mxu0
          %v3617 = vpop.f32.mrb[0].mxu0
          %3618 = vdwg.mxu0
          %3619 = vmatprep.subr.bf16.mxu0 0
          %3620 = vmatpush1.bf16.msra.mxu0 %v3315
          %3621 = vmatprep.subr.bf16.mxu0 0
          %3622 = vmatpush1.bf16.msra.mxu0 %v3316
          %3623 = vmatprep.subr.bf16.mxu0 0
          %3624 = vmatpush1.bf16.msra.mxu0 %v3317
          %3625 = vmatprep.subr.bf16.mxu0 0
          %3626 = vmatpush1.bf16.msra.mxu0 %v3318
          %3627 = vmatprep.subr.bf16.mxu0 0
          %3628 = vmatpush1.bf16.msra.mxu0 %v3319
          %3629 = vmatprep.subr.bf16.mxu0 0
          %3630 = vmatpush1.bf16.msra.mxu0 %v3320
          %3631 = vmatprep.subr.bf16.mxu0 0
          %3632 = vmatpush1.bf16.msra.mxu0 %v3321
          %3633 = vmatprep.subr.bf16.mxu0 0
          %3634 = vmatpush1.bf16.msra.mxu0 %v3322
          %3635 = vmatprep.subr.bf16.mxu0 0
          %3636 = vmatpush1.bf16.msra.mxu0 %v3323
          %3637 = vmatprep.subr.bf16.mxu0 0
          %3638 = vmatpush1.bf16.msra.mxu0 %v3324
          %3639 = vmatprep.subr.bf16.mxu0 0
          %3640 = vmatpush1.bf16.msra.mxu0 %v3325
          %3641 = vmatprep.subr.bf16.mxu0 0
          %3642 = vmatpush1.bf16.msra.mxu0 %v3326
          %3643 = vmatprep.subr.bf16.mxu0 0
          %3644 = vmatpush1.bf16.msra.mxu0 %v3327
          %3645 = vmatprep.subr.bf16.mxu0 0
          %3646 = vmatpush1.bf16.msra.mxu0 %v3328
          %3647 = vmatprep.subr.bf16.mxu0 0
          %3648 = vmatpush1.bf16.msra.mxu0 %v3329
          %3649 = vmatprep.subr.bf16.mxu0 0
          %3650 = vmatpush1.bf16.msra.mxu0 %v3330
          %3651 = vmatprep.mubr.bf16.mxu0 %v2504
          %3652 = vmatmul.mubr.bf16.gmra.mrb[0].mxu0 %v2503
          %v3653 = vpop.f32.mrb[0].mxu0
          %v3654 = vadd.f32 %v3614, %v3653
          %v3655 = vpop.f32.mrb[0].mxu0
          %v3656 = vpop.f32.mrb[0].mxu0
          %v3657 = vpop.f32.mrb[0].mxu0
          %3658 = vdwg.mxu0
          %3659 = vmatprep.subr.bf16.mxu0 0
          %3660 = vmatpush1.bf16.msra.mxu0 %v3331
          %3661 = vmatprep.subr.bf16.mxu0 0
          %3662 = vmatpush1.bf16.msra.mxu0 %v3332
          %3663 = vmatprep.subr.bf16.mxu0 0
          %3664 = vmatpush1.bf16.msra.mxu0 %v3333
          %3665 = vmatprep.subr.bf16.mxu0 0
          %3666 = vmatpush1.bf16.msra.mxu0 %v3334
          %3667 = vmatprep.subr.bf16.mxu0 0
          %3668 = vmatpush1.bf16.msra.mxu0 %v3335
          %3669 = vmatprep.subr.bf16.mxu0 0
          %3670 = vmatpush1.bf16.msra.mxu0 %v3336
          %3671 = vmatprep.subr.bf16.mxu0 0
          %3672 = vmatpush1.bf16.msra.mxu0 %v3337
          %3673 = vmatprep.subr.bf16.mxu0 0
          %3674 = vmatpush1.bf16.msra.mxu0 %v3338
          %3675 = vmatprep.subr.bf16.mxu0 0
          %3676 = vmatpush1.bf16.msra.mxu0 %v3339
          %3677 = vmatprep.subr.bf16.mxu0 0
          %3678 = vmatpush1.bf16.msra.mxu0 %v3340
          %3679 = vmatprep.subr.bf16.mxu0 0
          %3680 = vmatpush1.bf16.msra.mxu0 %v3341
          %3681 = vmatprep.subr.bf16.mxu0 0
          %3682 = vmatpush1.bf16.msra.mxu0 %v3342
          %3683 = vmatprep.subr.bf16.mxu0 0
          %3684 = vmatpush1.bf16.msra.mxu0 %v3343
          %3685 = vmatprep.subr.bf16.mxu0 0
          %3686 = vmatpush1.bf16.msra.mxu0 %v3344
          %3687 = vmatprep.subr.bf16.mxu0 0
          %3688 = vmatpush1.bf16.msra.mxu0 %v3345
          %3689 = vmatprep.subr.bf16.mxu0 0
          %3690 = vmatpush1.bf16.msra.mxu0 %v3346
          %3691 = vmatprep.mubr.bf16.mxu0 %v2506
          %3692 = vmatmul.mubr.bf16.gmra.mrb[0].mxu0 %v2505
          %v3693 = vpop.f32.mrb[0].mxu0
          %v3694 = vadd.f32 %v3654, %v3693
          %v3695 = vpop.f32.mrb[0].mxu0
          %v3696 = vpop.f32.mrb[0].mxu0
          %v3697 = vpop.f32.mrb[0].mxu0
          %3698 = vdwg.mxu0
          %3699 = vmatprep.subr.bf16.mxu0 0
          %3700 = vmatpush1.bf16.msra.mxu0 %v3347
          %3701 = vmatprep.subr.bf16.mxu0 0
          %3702 = vmatpush1.bf16.msra.mxu0 %v3348
          %3703 = vmatprep.subr.bf16.mxu0 0
          %3704 = vmatpush1.bf16.msra.mxu0 %v3349
          %3705 = vmatprep.subr.bf16.mxu0 0
          %3706 = vmatpush1.bf16.msra.mxu0 %v3350
          %3707 = vmatprep.subr.bf16.mxu0 0
          %3708 = vmatpush1.bf16.msra.mxu0 %v3351
          %3709 = vmatprep.subr.bf16.mxu0 0
          %3710 = vmatpush1.bf16.msra.mxu0 %v3352
          %3711 = vmatprep.subr.bf16.mxu0 0
          %3712 = vmatpush1.bf16.msra.mxu0 %v3353
          %3713 = vmatprep.subr.bf16.mxu0 0
          %3714 = vmatpush1.bf16.msra.mxu0 %v3354
          %3715 = vmatprep.subr.bf16.mxu0 0
          %3716 = vmatpush1.bf16.msra.mxu0 %v3355
          %3717 = vmatprep.subr.bf16.mxu0 0
          %3718 = vmatpush1.bf16.msra.mxu0 %v3356
          %3719 = vmatprep.subr.bf16.mxu0 0
          %3720 = vmatpush1.bf16.msra.mxu0 %v3357
          %3721 = vmatprep.subr.bf16.mxu0 0
          %3722 = vmatpush1.bf16.msra.mxu0 %v3358
          %3723 = vmatprep.subr.bf16.mxu0 0
          %3724 = vmatpush1.bf16.msra.mxu0 %v3359
          %3725 = vmatprep.subr.bf16.mxu0 0
          %3726 = vmatpush1.bf16.msra.mxu0 %v3360
          %3727 = vmatprep.subr.bf16.mxu0 0
          %3728 = vmatpush1.bf16.msra.mxu0 %v3361
          %3729 = vmatprep.subr.bf16.mxu0 0
          %3730 = vmatpush1.bf16.msra.mxu0 %v3362
          %3731 = vmatprep.mubr.bf16.mxu0 %v2508
          %3732 = vmatmul.mubr.bf16.gmra.mrb[0].mxu0 %v2507
          %v3733 = vpop.f32.mrb[0].mxu0
          %v3734 = vadd.f32 %v3694, %v3733
          %v3735 = vpop.f32.mrb[0].mxu0
          %v3736 = vpop.f32.mrb[0].mxu0
          %v3737 = vpop.f32.mrb[0].mxu0
          %3738 = vdwg.mxu0
          %3739 = vmatprep.subr.bf16.mxu0 0
          %3740 = vmatpush1.bf16.msra.mxu0 %v3363
          %3741 = vmatprep.subr.bf16.mxu0 0
          %3742 = vmatpush1.bf16.msra.mxu0 %v3364
          %3743 = vmatprep.subr.bf16.mxu0 0
          %3744 = vmatpush1.bf16.msra.mxu0 %v3365
          %3745 = vmatprep.subr.bf16.mxu0 0
          %3746 = vmatpush1.bf16.msra.mxu0 %v3366
          %3747 = vmatprep.subr.bf16.mxu0 0
          %3748 = vmatpush1.bf16.msra.mxu0 %v3367
          %3749 = vmatprep.subr.bf16.mxu0 0
          %3750 = vmatpush1.bf16.msra.mxu0 %v3368
          %3751 = vmatprep.subr.bf16.mxu0 0
          %3752 = vmatpush1.bf16.msra.mxu0 %v3369
          %3753 = vmatprep.subr.bf16.mxu0 0
          %3754 = vmatpush1.bf16.msra.mxu0 %v3370
          %3755 = vmatprep.subr.bf16.mxu0 0
          %3756 = vmatpush1.bf16.msra.mxu0 %v3371
          %3757 = vmatprep.subr.bf16.mxu0 0
          %3758 = vmatpush1.bf16.msra.mxu0 %v3372
          %3759 = vmatprep.subr.bf16.mxu0 0
          %3760 = vmatpush1.bf16.msra.mxu0 %v3373
          %3761 = vmatprep.subr.bf16.mxu0 0
          %3762 = vmatpush1.bf16.msra.mxu0 %v3374
          %3763 = vmatprep.subr.bf16.mxu0 0
          %3764 = vmatpush1.bf16.msra.mxu0 %v3375
          %3765 = vmatprep.subr.bf16.mxu0 0
          %3766 = vmatpush1.bf16.msra.mxu0 %v3376
          %3767 = vmatprep.subr.bf16.mxu0 0
          %3768 = vmatpush1.bf16.msra.mxu0 %v3377
          %3769 = vmatprep.subr.bf16.mxu0 0
          %3770 = vmatpush1.bf16.msra.mxu0 %v3378
          %3771 = vmatprep.mubr.bf16.mxu0 %v2510
          %3772 = vmatmul.mubr.bf16.gmra.mrb[0].mxu0 %v2509
          %v3773 = vpop.f32.mrb[0].mxu0
          %v3774 = vadd.f32 %v3734, %v3773
          %v3775 = vpop.f32.mrb[0].mxu0
          %v3776 = vpop.f32.mrb[0].mxu0
          %v3777 = vpop.f32.mrb[0].mxu0
          %3778 = vdwg.mxu0
          %3779 = vmatprep.subr.bf16.mxu0 0
          %3780 = vmatpush1.bf16.msra.mxu0 %v3379
          %3781 = vmatprep.subr.bf16.mxu0 0
          %3782 = vmatpush1.bf16.msra.mxu0 %v3380
          %3783 = vmatprep.subr.bf16.mxu0 0
          %3784 = vmatpush1.bf16.msra.mxu0 %v3381
          %3785 = vmatprep.subr.bf16.mxu0 0
          %3786 = vmatpush1.bf16.msra.mxu0 %v3382
          %3787 = vmatprep.subr.bf16.mxu0 0
          %3788 = vmatpush1.bf16.msra.mxu0 %v3383
          %3789 = vmatprep.subr.bf16.mxu0 0
          %3790 = vmatpush1.bf16.msra.mxu0 %v3384
          %3791 = vmatprep.subr.bf16.mxu0 0
          %3792 = vmatpush1.bf16.msra.mxu0 %v3385
          %3793 = vmatprep.subr.bf16.mxu0 0
          %3794 = vmatpush1.bf16.msra.mxu0 %v3386
          %3795 = vmatprep.subr.bf16.mxu0 0
          %3796 = vmatpush1.bf16.msra.mxu0 %v3387
          %3797 = vmatprep.subr.bf16.mxu0 0
          %3798 = vmatpush1.bf16.msra.mxu0 %v3388
          %3799 = vmatprep.subr.bf16.mxu0 0
          %3800 = vmatpush1.bf16.msra.mxu0 %v3389
          %3801 = vmatprep.subr.bf16.mxu0 0
          %3802 = vmatpush1.bf16.msra.mxu0 %v3390
          %3803 = vmatprep.subr.bf16.mxu0 0
          %3804 = vmatpush1.bf16.msra.mxu0 %v3391
          %3805 = vmatprep.subr.bf16.mxu0 0
          %3806 = vmatpush1.bf16.msra.mxu0 %v3392
          %3807 = vmatprep.subr.bf16.mxu0 0
          %3808 = vmatpush1.bf16.msra.mxu0 %v3393
          %3809 = vmatprep.subr.bf16.mxu0 0
          %3810 = vmatpush1.bf16.msra.mxu0 %v3394
          %3811 = vmatprep.mubr.bf16.mxu0 %v2512
          %3812 = vmatmul.mubr.bf16.gmra.mrb[0].mxu0 %v2511
          %v3813 = vpop.f32.mrb[0].mxu0
          %v3814 = vadd.f32 %v3774, %v3813
          %v3815 = vpop.f32.mrb[0].mxu0
          %v3816 = vpop.f32.mrb[0].mxu0
          %v3817 = vpop.f32.mrb[0].mxu0
          %3818 = vdwg.mxu0
          %3819 = vmatprep.subr.bf16.mxu0 0
          %3820 = vmatpush1.bf16.msra.mxu0 %v3395
          %3821 = vmatprep.subr.bf16.mxu0 0
          %3822 = vmatpush1.bf16.msra.mxu0 %v3396
          %3823 = vmatprep.subr.bf16.mxu0 0
          %3824 = vmatpush1.bf16.msra.mxu0 %v3397
          %3825 = vmatprep.subr.bf16.mxu0 0
          %3826 = vmatpush1.bf16.msra.mxu0 %v3398
          %3827 = vmatprep.subr.bf16.mxu0 0
          %3828 = vmatpush1.bf16.msra.mxu0 %v3399
          %3829 = vmatprep.subr.bf16.mxu0 0
          %3830 = vmatpush1.bf16.msra.mxu0 %v3400
          %3831 = vmatprep.subr.bf16.mxu0 0
          %3832 = vmatpush1.bf16.msra.mxu0 %v3401
          %3833 = vmatprep.subr.bf16.mxu0 0
          %3834 = vmatpush1.bf16.msra.mxu0 %v3402
          %3835 = vmatprep.subr.bf16.mxu0 0
          %3836 = vmatpush1.bf16.msra.mxu0 %v3403
          %3837 = vmatprep.subr.bf16.mxu0 0
          %3838 = vmatpush1.bf16.msra.mxu0 %v3404
          %3839 = vmatprep.subr.bf16.mxu0 0
          %3840 = vmatpush1.bf16.msra.mxu0 %v3405
          %3841 = vmatprep.subr.bf16.mxu0 0
          %3842 = vmatpush1.bf16.msra.mxu0 %v3406
          %3843 = vmatprep.subr.bf16.mxu0 0
          %3844 = vmatpush1.bf16.msra.mxu0 %v3407
          %3845 = vmatprep.subr.bf16.mxu0 0
          %3846 = vmatpush1.bf16.msra.mxu0 %v3408
          %3847 = vmatprep.subr.bf16.mxu0 0
          %3848 = vmatpush1.bf16.msra.mxu0 %v3409
          %3849 = vmatprep.subr.bf16.mxu0 0
          %3850 = vmatpush1.bf16.msra.mxu0 %v3410
          %3851 = vmatprep.mubr.bf16.mxu0 %v2514
          %3852 = vmatmul.mubr.bf16.gmra.mrb[0].mxu0 %v2513
          %v3853 = vpop.f32.mrb[0].mxu0
          %v3854 = vadd.f32 %v3814, %v3853
          %v3855 = vpop.f32.mrb[0].mxu0
          %v3856 = vpop.f32.mrb[0].mxu0
          %v3857 = vpop.f32.mrb[0].mxu0
          %3858 = vdwg.mxu0
          %v3859 = vadd.f32 %v1958, %v3854
          %v3860 = vsel %vm748, %v3859, 0.0
          %3861 = vadd.xlane.f32.xlu0 %v3860
          %v3862 = vpop.xlane.xlu0 %3861
          %v3863 = vmul.f32 %v3862, %v1317
          %v3864 = vsub.f32 %v3859, %v3863
          %v3865 = vmul.f32 %v3864, %v3864
          %v3866 = vsel %vm748, %v3865, 0.0
          %3867 = vadd.xlane.f32.xlu0 %v3866
          %v3868 = vpop.xlane.xlu0 %3867
          %v3869 = vmul.f32 %v3868, %v1317
          %v3870 = vadd.f32 %v3869, 1e-05
          %v3871 = vrsqrt.pop %v3870
          %v3872 = vmul.f32 %v3864, %v3871
          %v3873 = vlaneseq
          %v3874 = vshrl.u32 %v3873, 7
          %v3875 = vsub.s32 2, %v3874
          %v3876 = vrot.slane %v734, %v3875
          %v3877 = vmul.f32 %v3872, %v3876
          %3878 = vst.msk [vmem:[#allocation2] sm:$0xff] %vm748, %v3877
        $region80: #{_lambda_.1} parent=71 // pred_fallthru
          _
        %p3879 = scmp.eq.s32.totalorder %s34, 2
        // Predicated region
        $region81: #{_lambda_.1} parent=71 // pred_check
          %p3880 = pneg %p3879
        $region82: #{_lambda_.1} parent=71 // pred_check_branch
          %3882 = sbr.rel (%p3880) target = $region84
        $region83: #{_lambda_.1} parent=71 // pred_region
          %v3883 = vld [vmem:[#allocation2] sm:$0xff]
          %vm3884 = vcmask 261120
          %3885 = vst.msk [vmem:[%s597] sm:$0xff] %vm3884, %v3883
          %v3886 = vld [vmem:[%s8] sm:$0xf]
          %v3887 = vld [vmem:[%s8 + $0x4] sm:$0xf]
          %v3888 = vld [vmem:[%s8 + $0x8] sm:$0xf]
          %v3889 = vld [vmem:[%s8 + $0xc] sm:$0xf]
          %v3890 = vpack.c.bf16 %v3883, %v3883
          %v3891 = vld [vmem:[%s9] sm:$0x1]
          %v3893 = vlaneseq
          %v3894 = vshrl.u32 %v3893, 7
          %v3895 = vsub.s32 0, %v3894
          %v3896 = vrot.slane %v3891, %v3895
          %v3902 = vunpack.c.l.b16 %v3886
          %v3903 = vunpack.c.l.b16 %v3887
          %v3904 = vunpack.c.l.b16 %v3888
          %v3905 = vunpack.c.l.b16 %v3889
          %v3906 = vpack.c.b16 %v3903, %v3902
          %v3907 = vpack.c.b16 %v3905, %v3904
          %v3911 = vsel %vm3884, %v3890, 0
          %3913 = vmatprep.subr.bf16.mxu0 0
          %3914 = vmatpush1.bf16.msra.mxu0 %v3906
          %3915 = vmatprep.subr.bf16.mxu0 0
          %3916 = vmatpush1.bf16.msra.mxu0 %v3907
          %3917 = vmatprep.subr.bf16.mxu0 0
          %3918 = vmatpush1.bf16.msra.mxu0 0
          %3919 = vmatprep.subr.bf16.mxu0 0
          %3920 = vmatpush1.bf16.msra.mxu0 0
          %3921 = vmatprep.subr.bf16.mxu0 0
          %3922 = vmatpush1.bf16.msra.mxu0 0
          %3923 = vmatprep.subr.bf16.mxu0 0
          %3924 = vmatpush1.bf16.msra.mxu0 0
          %3925 = vmatprep.subr.bf16.mxu0 0
          %3926 = vmatpush1.bf16.msra.mxu0 0
          %3927 = vmatprep.subr.bf16.mxu0 0
          %3928 = vmatpush1.bf16.msra.mxu0 0
          %3929 = vmatprep.subr.bf16.mxu0 0
          %3930 = vmatpush1.bf16.msra.mxu0 0
          %3931 = vmatprep.subr.bf16.mxu0 0
          %3932 = vmatpush1.bf16.msra.mxu0 0
          %3933 = vmatprep.subr.bf16.mxu0 0
          %3934 = vmatpush1.bf16.msra.mxu0 0
          %3935 = vmatprep.subr.bf16.mxu0 0
          %3936 = vmatpush1.bf16.msra.mxu0 0
          %3937 = vmatprep.subr.bf16.mxu0 0
          %3938 = vmatpush1.bf16.msra.mxu0 0
          %3939 = vmatprep.subr.bf16.mxu0 0
          %3940 = vmatpush1.bf16.msra.mxu0 0
          %3941 = vmatprep.subr.bf16.mxu0 0
          %3942 = vmatpush1.bf16.msra.mxu0 0
          %3943 = vmatprep.subr.bf16.mxu0 0
          %3944 = vmatpush1.bf16.msra.mxu0 0
          %3945 = vmatprep.mubr.bf16.mxu0 0
          %3946 = vmatmul.mubr.bf16.gmra.mrb[0].mxu0 %v3911
          %v3947 = vpop.f32.mrb[0].mxu0
          %v3948 = vadd.f32 %v3896, %v3947
          %v3949 = vpop.f32.mrb[0].mxu0
          %v3950 = vpop.f32.mrb[0].mxu0
          %v3951 = vpop.f32.mrb[0].mxu0
          %3952 = vdwg.mxu0
          %v3953 = vld [vmem:[%s10] sm:$0x3]
          %v3954 = vld [vmem:[%s10 + $0x2] sm:$0x3]
          %v3955 = vsel %vm3884, %v3948, 0.0
          %3956 = vadd.xlane.f32.xlu0 %v3955
          %v3957 = vpop.xlane.xlu0 %3956
          %v3958 = vrcp.pop 32.0
          %v3959 = vmul.f32 %v3957, %v3958
          %v3960 = vsub.f32 %v3948, %v3959
          %v3961 = vmul.f32 %v3960, %v3960
          %v3962 = vsel %vm3884, %v3961, 0.0
          %3963 = vadd.xlane.f32.xlu0 %v3962
          %v3964 = vpop.xlane.xlu0 %3963
          %v3965 = vmul.f32 %v3964, %v3958
          %v3966 = vadd.f32 %v3965, 1e-05
          %v3967 = vrsqrt.pop %v3966
          %v3968 = vmul.f32 %v3960, %v3967
          %v3969 = vlaneseq
          %v3970 = vshrl.u32 %v3969, 7
          %v3971 = vsub.s32 0, %v3970
          %v3972 = vrot.slane %v3953, %v3971
          %v3973 = vmul.f32 %v3968, %v3972
          %v3974 = vlaneseq
          %v3975 = vshrl.u32 %v3974, 7
          %v3976 = vsub.s32 1, %v3975
          %v3977 = vrot.slane %v3953, %v3976
          %v3978 = vadd.f32 %v3973, %v3977
          %v3979 = vmax.f32 %v3978, 0.0
          %3981 = vrot.lane.b32.xlu0 %v3948, 96
          %v3982 = vpop.permute.xlu0 %3981
          %v3984 = vsel %vm3884, %v3982, 0.0
          %3985 = vadd.xlane.f32.xlu0 %v3984
          %v3986 = vpop.xlane.xlu0 %3985
          %v3987 = vmul.f32 %v3986, %v3958
          %v3988 = vsub.f32 %v3948, %v3987
          %v3989 = vmul.f32 %v3988, %v3988
          %3991 = vrot.lane.b32.xlu0 %v3989, 96
          %v3992 = vpop.permute.xlu0 %3991
          %v3994 = vsel %vm3884, %v3992, 0.0
          %3995 = vadd.xlane.f32.xlu0 %v3994
          %v3996 = vpop.xlane.xlu0 %3995
          %v3997 = vmul.f32 %v3996, %v3958
          %v3998 = vadd.f32 %v3997, 1e-05
          %v3999 = vrsqrt.pop %v3998
          %v4000 = vmul.f32 %v3988, %v3999
          %v4001 = vlaneseq
          %v4002 = vshrl.u32 %v4001, 7
          %v4003 = vsub.s32 0, %v4002
          %v4004 = vrot.slane %v3954, %v4003
          %4006 = vrot.lane.b32.xlu0 %v4004, 32
          %v4007 = vpop.permute.xlu0 %4006
          %v4009 = vmul.f32 %v4000, %v4007
          %v4010 = vlaneseq
          %v4011 = vshrl.u32 %v4010, 7
          %v4012 = vsub.s32 1, %v4011
          %v4013 = vrot.slane %v3954, %v4012
          %4015 = vrot.lane.b32.xlu0 %v4013, 32
          %v4016 = vpop.permute.xlu0 %4015
          %v4018 = vadd.f32 %v4009, %v4016
          %v4019 = vmax.f32 %v4018, 0.0
          %v4020 = vld [vmem:[%s11] sm:$0xf]
          %v4021 = vld [vmem:[%s11 + $0x4] sm:$0xf]
          %v4022 = vld [vmem:[%s11 + $0x8] sm:$0xf]
          %v4023 = vld [vmem:[%s11 + $0xc] sm:$0xf]
          %v4024 = vpack.c.bf16 %v3979, %v3979
          %s4025 = scalar_lea.vmem %s11, 16
          %v4026 = vld [vmem:[%s4025] sm:$0xf]
          %v4027 = vld [vmem:[%s4025 + $0x4] sm:$0xf]
          %v4028 = vld [vmem:[%s4025 + $0x8] sm:$0xf]
          %v4029 = vld [vmem:[%s4025 + $0xc] sm:$0xf]
          %v4030 = vpack.c.bf16 %v4019, %v4019
          %4032 = vrot.lane.b32.xlu0 %v4030, 96
          %v4033 = vpop.permute.xlu0 %4032
          %v4038 = vunpack.c.l.b16 %v4026
          %v4039 = vunpack.c.l.b16 %v4027
          %v4040 = vunpack.c.l.b16 %v4028
          %v4041 = vunpack.c.l.b16 %v4029
          %v4042 = vpack.c.b16 %v4039, %v4038
          %v4043 = vpack.c.b16 %v4041, %v4040
          %v4047 = vsel %vm3884, %v4033, 0
          %4049 = vmatprep.subr.bf16.mxu0 0
          %4050 = vmatpush1.bf16.msra.mxu0 %v4042
          %4051 = vmatprep.subr.bf16.mxu0 0
          %4052 = vmatpush1.bf16.msra.mxu0 %v4043
          %4053 = vmatprep.subr.bf16.mxu0 0
          %4054 = vmatpush1.bf16.msra.mxu0 0
          %4055 = vmatprep.subr.bf16.mxu0 0
          %4056 = vmatpush1.bf16.msra.mxu0 0
          %4057 = vmatprep.subr.bf16.mxu0 0
          %4058 = vmatpush1.bf16.msra.mxu0 0
          %4059 = vmatprep.subr.bf16.mxu0 0
          %4060 = vmatpush1.bf16.msra.mxu0 0
          %4061 = vmatprep.subr.bf16.mxu0 0
          %4062 = vmatpush1.bf16.msra.mxu0 0
          %4063 = vmatprep.subr.bf16.mxu0 0
          %4064 = vmatpush1.bf16.msra.mxu0 0
          %4065 = vmatprep.subr.bf16.mxu0 0
          %4066 = vmatpush1.bf16.msra.mxu0 0
          %4067 = vmatprep.subr.bf16.mxu0 0
          %4068 = vmatpush1.bf16.msra.mxu0 0
          %4069 = vmatprep.subr.bf16.mxu0 0
          %4070 = vmatpush1.bf16.msra.mxu0 0
          %4071 = vmatprep.subr.bf16.mxu0 0
          %4072 = vmatpush1.bf16.msra.mxu0 0
          %4073 = vmatprep.subr.bf16.mxu0 0
          %4074 = vmatpush1.bf16.msra.mxu0 0
          %4075 = vmatprep.subr.bf16.mxu0 0
          %4076 = vmatpush1.bf16.msra.mxu0 0
          %4077 = vmatprep.subr.bf16.mxu0 0
          %4078 = vmatpush1.bf16.msra.mxu0 0
          %4079 = vmatprep.subr.bf16.mxu0 0
          %4080 = vmatpush1.bf16.msra.mxu0 0
          %4081 = vmatprep.mubr.bf16.mxu0 0
          %4082 = vmatmul.mubr.bf16.gmra.mrb[0].mxu0 %v4047
          %v4083 = vpop.f32.mrb[0].mxu0
          %v4084 = vadd.f32 0.0, %v4083
          %v4085 = vpop.f32.mrb[0].mxu0
          %v4086 = vpop.f32.mrb[0].mxu0
          %v4087 = vpop.f32.mrb[0].mxu0
          %4088 = vdwg.mxu0
          %v4093 = vunpack.c.l.b16 %v4020
          %v4094 = vunpack.c.l.b16 %v4021
          %v4095 = vunpack.c.l.b16 %v4022
          %v4096 = vunpack.c.l.b16 %v4023
          %v4097 = vpack.c.b16 %v4094, %v4093
          %v4098 = vpack.c.b16 %v4096, %v4095
          %v4102 = vsel %vm3884, %v4024, 0
          %4104 = vmatprep.subr.bf16.mxu0 0
          %4105 = vmatpush1.bf16.msra.mxu0 %v4097
          %4106 = vmatprep.subr.bf16.mxu0 0
          %4107 = vmatpush1.bf16.msra.mxu0 %v4098
          %4108 = vmatprep.subr.bf16.mxu0 0
          %4109 = vmatpush1.bf16.msra.mxu0 0
          %4110 = vmatprep.subr.bf16.mxu0 0
          %4111 = vmatpush1.bf16.msra.mxu0 0
          %4112 = vmatprep.subr.bf16.mxu0 0
          %4113 = vmatpush1.bf16.msra.mxu0 0
          %4114 = vmatprep.subr.bf16.mxu0 0
          %4115 = vmatpush1.bf16.msra.mxu0 0
          %4116 = vmatprep.subr.bf16.mxu0 0
          %4117 = vmatpush1.bf16.msra.mxu0 0
          %4118 = vmatprep.subr.bf16.mxu0 0
          %4119 = vmatpush1.bf16.msra.mxu0 0
          %4120 = vmatprep.subr.bf16.mxu0 0
          %4121 = vmatpush1.bf16.msra.mxu0 0
          %4122 = vmatprep.subr.bf16.mxu0 0
          %4123 = vmatpush1.bf16.msra.mxu0 0
          %4124 = vmatprep.subr.bf16.mxu0 0
          %4125 = vmatpush1.bf16.msra.mxu0 0
          %4126 = vmatprep.subr.bf16.mxu0 0
          %4127 = vmatpush1.bf16.msra.mxu0 0
          %4128 = vmatprep.subr.bf16.mxu0 0
          %4129 = vmatpush1.bf16.msra.mxu0 0
          %4130 = vmatprep.subr.bf16.mxu0 0
          %4131 = vmatpush1.bf16.msra.mxu0 0
          %4132 = vmatprep.subr.bf16.mxu0 0
          %4133 = vmatpush1.bf16.msra.mxu0 0
          %4134 = vmatprep.subr.bf16.mxu0 0
          %4135 = vmatpush1.bf16.msra.mxu0 0
          %4136 = vmatprep.mubr.bf16.mxu0 0
          %4137 = vmatmul.mubr.bf16.gmra.mrb[0].mxu0 %v4102
          %v4138 = vpop.f32.mrb[0].mxu0
          %v4139 = vadd.f32 %v4084, %v4138
          %v4140 = vpop.f32.mrb[0].mxu0
          %v4141 = vpop.f32.mrb[0].mxu0
          %v4142 = vpop.f32.mrb[0].mxu0
          %4143 = vdwg.mxu0
          %v4144 = vld [vmem:[%s12] sm:$0x1]
          %v4146 = vlaneseq
          %v4147 = vshrl.u32 %v4146, 7
          %v4148 = vsub.s32 0, %v4147
          %v4149 = vrot.slane %v4144, %v4148
          %v4151 = vadd.f32 %v4139, %v4149
          %4152 = vst [vmem:[%s655] sm:$0xff] %v4151
        $region84: #{_lambda_.1} parent=71 // pred_fallthru
          _
        %s4153 = sand.u32 %s373, 1
        %s4154 = scalar_lea.sflag [#allocation6], %s4153
        %s4155 = sand.u32 %s373, 1
        %s4156 = smul.addr %s4155, 8
        %s4157 = scalar_lea.vmem [#allocation5], %s4156
        %p4158 = scmp.lt.s32.totalorder %s33, 1
        %s4159 = scalar_select %p4158, %s33, 1
        %s4160 = smul.addr %s4159, 8
        %s4161 = scalar_lea.vmem %s14, %s4160
        // Predicated region
        $region85: #{_lambda_.1} parent=71 // pred_check
          %p4162 = pneg %p383
        $region86: #{_lambda_.1} parent=71 // pred_check_branch
          %4164 = sbr.rel (%p4162) target = $region88
        $region87: #{_lambda_.1} parent=71 // pred_region
          %s4166 = ssub.s32 128, 128
          %4167 = vsyncadd %s4154, %s4166
          %s4168 = smul.addr %s33, 128
          %s4169 = scalar_lea.hbm %s13, %s4168
          %s4171 = sshll.u32 %s4157, 4
          %s4172 = int_to_ptr.vmem [resolvable:$true] %s4171
          %4174 = dma.vmem_to_hbm [thread:$0]  %s4172, 128, %s4169, %s4154
        $region88: #{_lambda_.1} parent=71 // pred_fallthru
          _
        // Predicated region
        $region89: #{_lambda_.1} parent=71 // pred_check
          %p4175 = pneg %p409
        $region90: #{_lambda_.1} parent=71 // pred_check_branch
          %4177 = sbr.rel (%p4175) target = $region92
        $region91: #{_lambda_.1} parent=71 // pred_region
          _
        $region92: #{_lambda_.1} parent=71 // pred_fallthru
          _
      $region72: #{_lambda_.1} parent=5 // pred_fallthru
        _
      %p4178 = scmp.le.s32.totalorder 2, %s24
      // Predicated region
      $region93: #{_lambda_.1} parent=5 // pred_check
        %p4179 = pneg %p4178
      $region94: #{_lambda_.1} parent=5 // pred_check_branch
        %4181 = sbr.rel (%p4179) target = $region96
      $region95: #{_lambda_.1} parent=5 // pred_region
        %s4182 = ssub.s32 %s24, 2
        // Predicated region
        $region97: #{_lambda_.1} parent=95 // pred_check
          %p4183 = pneg %p389
        $region98: #{_lambda_.1} parent=95 // pred_check_branch
          %4185 = sbr.rel (%p4183) target = $region100
        $region99: #{_lambda_.1} parent=95 // pred_region
          %s4186 = sand.u32 %s374, 1
          %s4187 = scalar_lea.sflag [#allocation6], %s4186
          %s4188 = sand.u32 %s374, 1
          %s4189 = smul.addr %s4188, 8
          %s4190 = scalar_lea.vmem [#allocation5], %s4189
          %4191 = dma.done %s4187, 128
        $region100: #{_lambda_.1} parent=95 // pred_fallthru
          _
        // Predicated region
        $region101: #{_lambda_.1} parent=95 // pred_check
          %p4192 = pneg %p415
        $region102: #{_lambda_.1} parent=95 // pred_check_branch
          %4194 = sbr.rel (%p4192) target = $region104
        $region103: #{_lambda_.1} parent=95 // pred_region
          %p4195 = scmp.lt.s32.totalorder %s35, 1
          %s4196 = scalar_select %p4195, %s35, 1
          %s4197 = smul.addr %s4196, 8
          %s4198 = scalar_lea.vmem %s14, %s4197
        $region104: #{_lambda_.1} parent=95 // pred_fallthru
          _
      $region96: #{_lambda_.1} parent=5 // pred_fallthru
        _
    $region6: #{_lambda_.1} parent=1 // loop_footer
      %s28 = sadd.s32 1, %s24
    $region7: #{_lambda_.1} parent=1 // loop_footer_branch
      %23 = sbr.rel target = $region3
    $region8: #{_lambda_.1} parent=1 // loop_exit
      _
    %4199 = vsyncpa [#allocation6], 1
    %s4200 = scalar_lea.sflag [#allocation6], 1
    %4201 = vsyncpa %s4200, 1

</llo_original>
